<compile_context>
chip_gen: v7x
topology: tpu7x:2x2x1
jax: 0.10.0
libtpu: 0.0.40
codegen_flags: <defaults>
</compile_context>

<pallas_src>
import functools
import math

import jax
import jax.numpy as jnp
from jax.experimental import pallas as pl
from jax.experimental.pallas import tpu as pltpu

# ----- synthetic "small BERT" config (bert-base scaled down) -----
HIDDEN = 32
NUM_HEADS = 4
HEAD_DIM = HIDDEN // NUM_HEADS
NUM_LAYERS = 2
INTERMEDIATE = 4 * HIDDEN
VOCAB = 64
MAX_POS = 16
NUM_CLASSES = 3
LN_EPS = 1e-12
LANE = 128      # lane-dense padding for the classifier output
SUBLANE = 8     # sublane-dense padding for the classifier output


# ---------------------------------------------------------------------------
# In-kernel helpers
# ---------------------------------------------------------------------------
def _gelu(x):
    # TODO(synk): HF BERT uses exact erf-GELU; tanh approximation used (EUP-friendly).
    c = math.sqrt(2.0 / math.pi)
    return 0.5 * x * (1.0 + jnp.tanh(c * (x + 0.044715 * x * x * x)))


def _layernorm(x, g, b, eps):
    mean = jnp.mean(x, axis=-1, keepdims=True)
    xc = x - mean
    var = jnp.mean(xc * xc, axis=-1, keepdims=True)
    return xc * jax.lax.rsqrt(var + eps) * g + b


def _matmul(x_f32, w_bf16, b_f32):
    # bf16 MXU matmul with f32 accumulation + f32 bias
    return jnp.dot(x_f32.astype(jnp.bfloat16), w_bf16,
                   preferred_element_type=jnp.float32) + b_f32


# ---------------------------------------------------------------------------
# The single fused kernel: one grid step == one batch element, full forward.
# ---------------------------------------------------------------------------
def fused_bert_kernel(emb_ref, mask_ref, *rest, heads, head_dim, eps, num_layers):
    o_ref = rest[-1]          # logits output block [SUBLANE, LANE]
    w = rest[:-1]             # 2 emb-LN refs + 12*num_layers layer refs + 4 head refs
    hidden = heads * head_dim

    mask = mask_ref[...]                                             # [1, S] additive
    # ---- embedding LayerNorm (no fake residual) ----
    x = _layernorm(emb_ref[...], w[0][...], w[1][...], eps)          # [S, H] f32

    for layer in range(num_layers):
        base = 2 + layer * 12
        (qkv_w, qkv_b, o_w, o_b, ln1_g, ln1_b,
         i_w, i_b, f_w, f_b, ln2_g, ln2_b) = w[base:base + 12]

        # ---- fused head-major QKV projection (Q pre-scaled by 1/sqrt(Dh)) ----
        qkv = _matmul(x, qkv_w[...], qkv_b[...])                     # [S, 3H] f32
        qkv_bf = qkv.astype(jnp.bfloat16)                            # single cast

        # ---- multi-head self-attention, all heads VMEM-resident ----
        # TODO(synk): at BERT-base scale convert to lax.fori_loop so per-head [S,S]
        # temporaries are not all live at once.
        ctx_heads = []
        for h in range(heads):
            c0 = h * 3 * head_dim                                    # head-major slab
            q_h = qkv_bf[:, c0:c0 + head_dim]
            k_h = qkv_bf[:, c0 + head_dim:c0 + 2 * head_dim]
            v_h = qkv_bf[:, c0 + 2 * head_dim:c0 + 3 * head_dim]
            s = jax.lax.dot_general(q_h, k_h, (((1,), (1,)), ((), ())),
                                    preferred_element_type=jnp.float32)   # [S, S]
            s = s + mask
            s = s - jnp.max(s, axis=-1, keepdims=True)
            p = jnp.exp(s)
            p = p * pl.reciprocal(jnp.sum(p, axis=-1, keepdims=True), approx=True)
            ctx_heads.append(jnp.dot(p.astype(jnp.bfloat16), v_h,
                                     preferred_element_type=jnp.float32))  # [S, Dh]

        # lane-concat of heads + ONE K=H output-projection matmul
        ctx = jnp.concatenate(ctx_heads, axis=-1).astype(jnp.bfloat16)     # [S, H]
        attn = jnp.dot(ctx, o_w[...], preferred_element_type=jnp.float32) + o_b[...]

        # ---- residual + LayerNorm 1 ----
        x1 = _layernorm(attn + x, ln1_g[...], ln1_b[...], eps)

        # ---- FFN: GELU matmul + output matmul + residual + LayerNorm 2 ----
        hmid = _gelu(_matmul(x1, i_w[...], i_b[...]))
        ffn = _matmul(hmid, f_w[...], f_b[...])
        x = _layernorm(ffn + x1, ln2_g[...], ln2_b[...], eps)

    # ---- pooler (tanh on CLS token) + dropout(identity at eval) + classifier ----
    pool_w, pool_b, cls_w, cls_b = w[2 + num_layers * 12:2 + num_layers * 12 + 4]
    cls_tok = x[0:1, :]                                              # [1, H]
    pooled = jnp.tanh(_matmul(cls_tok, pool_w[...], pool_b[...]))
    logits = _matmul(pooled, cls_w[...], cls_b[...])                 # [1, LANE]
    o_ref[...] = jnp.broadcast_to(logits, o_ref.shape)               # [8, 128] slab


# ---------------------------------------------------------------------------
# Wrapper: one pallas_call for the whole forward.
# ---------------------------------------------------------------------------
def fused_forward(fparams, emb, mask_add, *, batch, seq):
    H = HIDDEN

    weights = [fparams["emb_ln_g"], fparams["emb_ln_b"]]
    for lp in fparams["layers"]:
        weights += [lp["qkv_w"], lp["qkv_b"], lp["o_w"], lp["o_b"],
                    lp["ln1_g"], lp["ln1_b"], lp["i_w"], lp["i_b"],
                    lp["f_w"], lp["f_b"], lp["ln2_g"], lp["ln2_b"]]
    weights += [fparams["pool_w"], fparams["pool_b"], fparams["cls_w"], fparams["cls_b"]]

    def w_spec(a):
        nd = a.ndim
        return pl.BlockSpec(a.shape, lambda b, _nd=nd: (0,) * _nd)   # resident weight

    in_specs = [
        pl.BlockSpec((seq, H), lambda b: (b, 0)),             # x rows of batch b
        pl.BlockSpec((None, 1, seq), lambda b: (b, 0, 0)),     # mask, leading dim squeezed
    ] + [w_spec(a) for a in weights]

    # advisory cost estimate for XLA scheduling around the custom call
    weight_bytes = sum(int(a.size) * a.dtype.itemsize for a in weights)
    per_layer_flops = (2 * seq * H * 3 * H                      # QKV
                       + NUM_HEADS * 4 * seq * seq * HEAD_DIM   # scores + ctx
                       + 2 * seq * H * H                        # out proj
                       + 4 * seq * H * INTERMEDIATE)            # FFN
    flops = batch * (NUM_LAYERS * per_layer_flops + 2 * H * H + 2 * H * LANE)
    transcendentals = batch * (NUM_LAYERS * (NUM_HEADS * seq * seq + seq * INTERMEDIATE) + H)
    bytes_accessed = (batch * seq * H * 4 + batch * seq * 4 + weight_bytes
                      + batch * SUBLANE * LANE * 4)
    cost = pl.CostEstimate(flops=flops, transcendentals=transcendentals,
                           bytes_accessed=bytes_accessed)

    kernel = functools.partial(fused_bert_kernel, heads=NUM_HEADS,
                               head_dim=HEAD_DIM, eps=LN_EPS, num_layers=NUM_LAYERS)

    out = pl.pallas_call(
        kernel,
        out_shape=jax.ShapeDtypeStruct((batch, SUBLANE, LANE), jnp.float32),
        grid=(batch,),
        in_specs=in_specs,
        out_specs=pl.BlockSpec((None, SUBLANE, LANE), lambda b: (b, 0, 0)),
        compiler_params=pltpu.CompilerParams(
            dimension_semantics=("parallel",)),                # shard batch across v7x TCs
        cost_estimate=cost,
    )(emb, mask_add, *weights)
    return out[:, 0, :NUM_CLASSES]


# ---------------------------------------------------------------------------
# Parameters (deterministic synthetic init) + kernel-friendly packing
# ---------------------------------------------------------------------------
def init_params(key):
    keys = iter(jax.random.split(key, 256))

    def nrm(shape):
        return jax.random.normal(next(keys), shape, jnp.float32) * 0.02

    def dense(fan_in, fan_out):
        return nrm((fan_in, fan_out)), jnp.zeros((fan_out,), jnp.float32)

    params = {
        "word_emb": nrm((VOCAB, HIDDEN)),
        "pos_emb": nrm((MAX_POS, HIDDEN)),
        "type_emb": nrm((2, HIDDEN)),
        "emb_ln_g": jnp.ones((HIDDEN,), jnp.float32),
        "emb_ln_b": jnp.zeros((HIDDEN,), jnp.float32),
        "layers": [],
    }
    for _ in range(NUM_LAYERS):
        lp = {}
        lp["q_w"], lp["q_b"] = dense(HIDDEN, HIDDEN)
        lp["k_w"], lp["k_b"] = dense(HIDDEN, HIDDEN)
        lp["v_w"], lp["v_b"] = dense(HIDDEN, HIDDEN)
        lp["o_w"], lp["o_b"] = dense(HIDDEN, HIDDEN)
        lp["ln1_g"] = jnp.ones((HIDDEN,), jnp.float32)
        lp["ln1_b"] = jnp.zeros((HIDDEN,), jnp.float32)
        lp["i_w"], lp["i_b"] = dense(HIDDEN, INTERMEDIATE)
        lp["f_w"], lp["f_b"] = dense(INTERMEDIATE, HIDDEN)
        lp["ln2_g"] = jnp.ones((HIDDEN,), jnp.float32)
        lp["ln2_b"] = jnp.zeros((HIDDEN,), jnp.float32)
        params["layers"].append(lp)
    params["pool_w"], params["pool_b"] = dense(HIDDEN, HIDDEN)
    params["cls_w"], params["cls_b"] = dense(HIDDEN, NUM_CLASSES)
    return params


def prepare_params(params):
    """Pack QKV head-major ([q_h|k_h|v_h] contiguous per head), fold 1/sqrt(head_dim)
    into Q, cast matmul weights to bf16, make biases/LN params 2-D, pad the classifier
    to a lane-dense width."""
    scale = 1.0 / math.sqrt(HEAD_DIM)
    fp = {
        "word_emb": params["word_emb"],
        "pos_emb": params["pos_emb"],
        "type_emb": params["type_emb"],
        "emb_ln_g": params["emb_ln_g"].reshape(1, HIDDEN),
        "emb_ln_b": params["emb_ln_b"].reshape(1, HIDDEN),
        "layers": [],
    }

    def split_heads_w(wm):    # [H, H] -> [H, heads, Dh]
        return wm.reshape(HIDDEN, NUM_HEADS, HEAD_DIM)

    def split_heads_b(bv):    # [H] -> [heads, Dh]
        return bv.reshape(NUM_HEADS, HEAD_DIM)

    for lp in params["layers"]:
        qkv_w = jnp.stack([split_heads_w(lp["q_w"] * scale),
                           split_heads_w(lp["k_w"]),
                           split_heads_w(lp["v_w"])], axis=2)        # [H, heads, 3, Dh]
        qkv_w = qkv_w.reshape(HIDDEN, 3 * HIDDEN)
        qkv_b = jnp.stack([split_heads_b(lp["q_b"] * scale),
                           split_heads_b(lp["k_b"]),
                           split_heads_b(lp["v_b"])], axis=1)        # [heads, 3, Dh]
        qkv_b = qkv_b.reshape(1, 3 * HIDDEN)
        fp["layers"].append({
            "qkv_w": qkv_w.astype(jnp.bfloat16),
            "qkv_b": qkv_b,
            "o_w": lp["o_w"].astype(jnp.bfloat16),
            "o_b": lp["o_b"].reshape(1, HIDDEN),
            "ln1_g": lp["ln1_g"].reshape(1, HIDDEN),
            "ln1_b": lp["ln1_b"].reshape(1, HIDDEN),
            "i_w": lp["i_w"].astype(jnp.bfloat16),
            "i_b": lp["i_b"].reshape(1, INTERMEDIATE),
            "f_w": lp["f_w"].astype(jnp.bfloat16),
            "f_b": lp["f_b"].reshape(1, HIDDEN),
            "ln2_g": lp["ln2_g"].reshape(1, HIDDEN),
            "ln2_b": lp["ln2_b"].reshape(1, HIDDEN),
        })
    fp["pool_w"] = params["pool_w"].astype(jnp.bfloat16)
    fp["pool_b"] = params["pool_b"].reshape(1, HIDDEN)
    cls_w_pad = jnp.zeros((HIDDEN, LANE), jnp.float32).at[:, :NUM_CLASSES].set(params["cls_w"])
    cls_b_pad = jnp.zeros((1, LANE), jnp.float32).at[0, :NUM_CLASSES].set(params["cls_b"])
    fp["cls_w"] = cls_w_pad.astype(jnp.bfloat16)
    fp["cls_b"] = cls_b_pad
    return fp


# ---------------------------------------------------------------------------
# Forward pass
# ---------------------------------------------------------------------------
def bert_classifier_forward(fparams, input_ids, attention_mask):
    B, S = input_ids.shape
    H = HIDDEN

    # embeddings: word + position + token_type(=0); gather stays in plain JAX
    word = jnp.take(fparams["word_emb"], input_ids, axis=0)            # [B,S,H]
    pos = fparams["pos_emb"][:S][None, :, :]                           # [1,S,H]
    tok = fparams["type_emb"][0][None, None, :]                        # [1,1,H]
    emb = (word + pos + tok).astype(jnp.float32).reshape(B * S, H)

    # additive attention mask (HF convention), f32: [B, 1, S]
    mask_add = ((1.0 - attention_mask.astype(jnp.float32)) * -10000.0)[:, None, :]

    # one fused pallas_call: embed LN + all encoder layers + pooler + classifier
    return fused_forward(fparams, emb, mask_add, batch=B, seq=S)


if __name__ == "__main__":
    key = jax.random.PRNGKey(0)
    pkey, ikey = jax.random.split(key)
    raw_params = init_params(pkey)
    fparams = prepare_params(raw_params)

    B, S = 2, 8
    input_ids = jax.random.randint(ikey, (B, S), 0, VOCAB, dtype=jnp.int32)
    attention_mask = jnp.array([[1, 1, 1, 1, 1, 1, 1, 1],
                                [1, 1, 1, 1, 1, 0, 0, 0]], dtype=jnp.int32)

    logits = jax.jit(bert_classifier_forward)(fparams, input_ids, attention_mask)
    logits = jax.block_until_ready(logits)
    assert logits.shape == (B, NUM_CLASSES)
    print("KERNEL_OK")
</pallas_src>

<mosaic_0001>
module attributes {stable_mosaic.version = 11 : i64} {
  func.func @fused_bert_kernel(%arg0: i32, %arg1: memref<8x32xf32, #tpu.memory_space<vmem>>, %arg2: memref<1x1x8xf32, #tpu.memory_space<vmem>>, %arg3: memref<1x32xf32, #tpu.memory_space<vmem>>, %arg4: memref<1x32xf32, #tpu.memory_space<vmem>>, %arg5: memref<32x96xbf16, #tpu.memory_space<vmem>>, %arg6: memref<1x96xf32, #tpu.memory_space<vmem>>, %arg7: memref<32x32xbf16, #tpu.memory_space<vmem>>, %arg8: memref<1x32xf32, #tpu.memory_space<vmem>>, %arg9: memref<1x32xf32, #tpu.memory_space<vmem>>, %arg10: memref<1x32xf32, #tpu.memory_space<vmem>>, %arg11: memref<32x128xbf16, #tpu.memory_space<vmem>>, %arg12: memref<1x128xf32, #tpu.memory_space<vmem>>, %arg13: memref<128x32xbf16, #tpu.memory_space<vmem>>, %arg14: memref<1x32xf32, #tpu.memory_space<vmem>>, %arg15: memref<1x32xf32, #tpu.memory_space<vmem>>, %arg16: memref<1x32xf32, #tpu.memory_space<vmem>>, %arg17: memref<32x96xbf16, #tpu.memory_space<vmem>>, %arg18: memref<1x96xf32, #tpu.memory_space<vmem>>, %arg19: memref<32x32xbf16, #tpu.memory_space<vmem>>, %arg20: memref<1x32xf32, #tpu.memory_space<vmem>>, %arg21: memref<1x32xf32, #tpu.memory_space<vmem>>, %arg22: memref<1x32xf32, #tpu.memory_space<vmem>>, %arg23: memref<32x128xbf16, #tpu.memory_space<vmem>>, %arg24: memref<1x128xf32, #tpu.memory_space<vmem>>, %arg25: memref<128x32xbf16, #tpu.memory_space<vmem>>, %arg26: memref<1x32xf32, #tpu.memory_space<vmem>>, %arg27: memref<1x32xf32, #tpu.memory_space<vmem>>, %arg28: memref<1x32xf32, #tpu.memory_space<vmem>>, %arg29: memref<32x32xbf16, #tpu.memory_space<vmem>>, %arg30: memref<1x32xf32, #tpu.memory_space<vmem>>, %arg31: memref<32x128xbf16, #tpu.memory_space<vmem>>, %arg32: memref<1x128xf32, #tpu.memory_space<vmem>>, %arg33: memref<1x8x128xf32, #tpu.memory_space<vmem>>) attributes {dimension_semantics = [#tpu.dimension_semantics<parallel>], iteration_bounds = array<i64: 2>, scalar_prefetch = 0 : i64, scratch_operands = 0 : i64, tpu.core_type = #tpu.core_type<tc>, window_params = [{transform_indices = @transform_0, window_bounds = array<i64: 8, 32>}, {transform_indices = @transform_1, window_bounds = array<i64: 1, 1, 8>}, {pipeline_mode = #tpu.pipeline_mode<synchronous>, transform_indices = @transform_2, window_bounds = array<i64: 1, 32>}, {pipeline_mode = #tpu.pipeline_mode<synchronous>, transform_indices = @transform_3, window_bounds = array<i64: 1, 32>}, {pipeline_mode = #tpu.pipeline_mode<synchronous>, transform_indices = @transform_4, window_bounds = array<i64: 32, 96>}, {pipeline_mode = #tpu.pipeline_mode<synchronous>, transform_indices = @transform_5, window_bounds = array<i64: 1, 96>}, {pipeline_mode = #tpu.pipeline_mode<synchronous>, transform_indices = @transform_6, window_bounds = array<i64: 32, 32>}, {pipeline_mode = #tpu.pipeline_mode<synchronous>, transform_indices = @transform_7, window_bounds = array<i64: 1, 32>}, {pipeline_mode = #tpu.pipeline_mode<synchronous>, transform_indices = @transform_8, window_bounds = array<i64: 1, 32>}, {pipeline_mode = #tpu.pipeline_mode<synchronous>, transform_indices = @transform_9, window_bounds = array<i64: 1, 32>}, {pipeline_mode = #tpu.pipeline_mode<synchronous>, transform_indices = @transform_10, window_bounds = array<i64: 32, 128>}, {pipeline_mode = #tpu.pipeline_mode<synchronous>, transform_indices = @transform_11, window_bounds = array<i64: 1, 128>}, {pipeline_mode = #tpu.pipeline_mode<synchronous>, transform_indices = @transform_12, window_bounds = array<i64: 128, 32>}, {pipeline_mode = #tpu.pipeline_mode<synchronous>, transform_indices = @transform_13, window_bounds = array<i64: 1, 32>}, {pipeline_mode = #tpu.pipeline_mode<synchronous>, transform_indices = @transform_14, window_bounds = array<i64: 1, 32>}, {pipeline_mode = #tpu.pipeline_mode<synchronous>, transform_indices = @transform_15, window_bounds = array<i64: 1, 32>}, {pipeline_mode = #tpu.pipeline_mode<synchronous>, transform_indices = @transform_16, window_bounds = array<i64: 32, 96>}, {pipeline_mode = #tpu.pipeline_mode<synchronous>, transform_indices = @transform_17, window_bounds = array<i64: 1, 96>}, {pipeline_mode = #tpu.pipeline_mode<synchronous>, transform_indices = @transform_18, window_bounds = array<i64: 32, 32>}, {pipeline_mode = #tpu.pipeline_mode<synchronous>, transform_indices = @transform_19, window_bounds = array<i64: 1, 32>}, {pipeline_mode = #tpu.pipeline_mode<synchronous>, transform_indices = @transform_20, window_bounds = array<i64: 1, 32>}, {pipeline_mode = #tpu.pipeline_mode<synchronous>, transform_indices = @transform_21, window_bounds = array<i64: 1, 32>}, {pipeline_mode = #tpu.pipeline_mode<synchronous>, transform_indices = @transform_22, window_bounds = array<i64: 32, 128>}, {pipeline_mode = #tpu.pipeline_mode<synchronous>, transform_indices = @transform_23, window_bounds = array<i64: 1, 128>}, {pipeline_mode = #tpu.pipeline_mode<synchronous>, transform_indices = @transform_24, window_bounds = array<i64: 128, 32>}, {pipeline_mode = #tpu.pipeline_mode<synchronous>, transform_indices = @transform_25, window_bounds = array<i64: 1, 32>}, {pipeline_mode = #tpu.pipeline_mode<synchronous>, transform_indices = @transform_26, window_bounds = array<i64: 1, 32>}, {pipeline_mode = #tpu.pipeline_mode<synchronous>, transform_indices = @transform_27, window_bounds = array<i64: 1, 32>}, {pipeline_mode = #tpu.pipeline_mode<synchronous>, transform_indices = @transform_28, window_bounds = array<i64: 32, 32>}, {pipeline_mode = #tpu.pipeline_mode<synchronous>, transform_indices = @transform_29, window_bounds = array<i64: 1, 32>}, {pipeline_mode = #tpu.pipeline_mode<synchronous>, transform_indices = @transform_30, window_bounds = array<i64: 32, 128>}, {pipeline_mode = #tpu.pipeline_mode<synchronous>, transform_indices = @transform_31, window_bounds = array<i64: 1, 128>}, {transform_indices = @transform_32, window_bounds = array<i64: 1, 8, 128>}]} {
    %c0 = arith.constant 0 : index
    %c0_0 = arith.constant 0 : index
    %c0_1 = arith.constant 0 : index
    %0 = vector.load %arg2[%c0, %c0_0, %c0_1] : memref<1x1x8xf32, #tpu.memory_space<vmem>>, vector<1x1x8xf32>
    %1 = vector.shape_cast %0 : vector<1x1x8xf32> to vector<1x8xf32>
    %c0_2 = arith.constant 0 : index
    %c0_3 = arith.constant 0 : index
    %2 = vector.load %arg1[%c0_2, %c0_3] : memref<8x32xf32, #tpu.memory_space<vmem>>, vector<8x32xf32>
    %c0_4 = arith.constant 0 : index
    %c0_5 = arith.constant 0 : index
    %3 = vector.load %arg3[%c0_4, %c0_5] : memref<1x32xf32, #tpu.memory_space<vmem>>, vector<1x32xf32>
    %c0_6 = arith.constant 0 : index
    %c0_7 = arith.constant 0 : index
    %4 = vector.load %arg4[%c0_6, %c0_7] : memref<1x32xf32, #tpu.memory_space<vmem>>, vector<1x32xf32>
    %cst = arith.constant dense<0.000000e+00> : vector<8xf32>
    %5 = vector.multi_reduction <add>, %2, %cst [1] : vector<8x32xf32> to vector<8xf32>
    %6 = vector.shape_cast %5 : vector<8xf32> to vector<8x1xf32>
    %cst_8 = arith.constant 3.200000e+01 : f32
    %7 = vector.broadcast %cst_8 : f32 to vector<8x1xf32>
    %8 = arith.divf %6, %7 : vector<8x1xf32>
    %9 = vector.broadcast %8 : vector<8x1xf32> to vector<8x32xf32>
    %10 = arith.subf %2, %9 : vector<8x32xf32>
    %11 = arith.mulf %10, %10 : vector<8x32xf32>
    %cst_9 = arith.constant dense<0.000000e+00> : vector<8xf32>
    %12 = vector.multi_reduction <add>, %11, %cst_9 [1] : vector<8x32xf32> to vector<8xf32>
    %13 = vector.shape_cast %12 : vector<8xf32> to vector<8x1xf32>
    %cst_10 = arith.constant 3.200000e+01 : f32
    %14 = vector.broadcast %cst_10 : f32 to vector<8x1xf32>
    %15 = arith.divf %13, %14 : vector<8x1xf32>
    %cst_11 = arith.constant 9.99999996E-13 : f32
    %16 = vector.broadcast %cst_11 : f32 to vector<8x1xf32>
    %17 = arith.addf %15, %16 : vector<8x1xf32>
    %18 = math.rsqrt %17 : vector<8x1xf32>
    %19 = vector.broadcast %18 : vector<8x1xf32> to vector<8x32xf32>
    %20 = arith.mulf %10, %19 : vector<8x32xf32>
    %21 = vector.broadcast %3 : vector<1x32xf32> to vector<8x32xf32>
    %22 = arith.mulf %20, %21 : vector<8x32xf32>
    %23 = vector.broadcast %4 : vector<1x32xf32> to vector<8x32xf32>
    %24 = arith.addf %22, %23 : vector<8x32xf32>
    %c0_12 = arith.constant 0 : index
    %c0_13 = arith.constant 0 : index
    %25 = vector.load %arg5[%c0_12, %c0_13] : memref<32x96xbf16, #tpu.memory_space<vmem>>, vector<32x96xbf16>
    %c0_14 = arith.constant 0 : index
    %c0_15 = arith.constant 0 : index
    %26 = vector.load %arg6[%c0_14, %c0_15] : memref<1x96xf32, #tpu.memory_space<vmem>>, vector<1x96xf32>
    %27 = arith.truncf %24 : vector<8x32xf32> to vector<8x32xbf16>
    %cst_16 = arith.constant dense<0.000000e+00> : vector<8x96xf32>
    %28 = tpu.matmul %27, %25, %cst_16 {dimension_numbers = #tpu.dot_dimension_numbers<[1], [0], [0], [1], [0, 0, 1, 1], [], []>} : vector<8x32xbf16>, vector<32x96xbf16>, vector<8x96xf32> -> vector<8x96xf32>
    %29 = vector.broadcast %26 : vector<1x96xf32> to vector<8x96xf32>
    %30 = arith.addf %28, %29 : vector<8x96xf32>
    %31 = arith.truncf %30 : vector<8x96xf32> to vector<8x96xbf16>
    %32 = vector.extract_strided_slice %31 {offsets = [0, 0], sizes = [8, 8], strides = [1, 1]} : vector<8x96xbf16> to vector<8x8xbf16>
    %33 = vector.extract_strided_slice %31 {offsets = [0, 8], sizes = [8, 8], strides = [1, 1]} : vector<8x96xbf16> to vector<8x8xbf16>
    %34 = vector.extract_strided_slice %31 {offsets = [0, 16], sizes = [8, 8], strides = [1, 1]} : vector<8x96xbf16> to vector<8x8xbf16>
    %cst_17 = arith.constant dense<0.000000e+00> : vector<8x8xf32>
    %35 = tpu.matmul %32, %33, %cst_17 {dimension_numbers = #tpu.dot_dimension_numbers<[1], [1], [0], [0], [0, 0, 1, 0], [], []>} : vector<8x8xbf16>, vector<8x8xbf16>, vector<8x8xf32> -> vector<8x8xf32>
    %36 = vector.broadcast %1 : vector<1x8xf32> to vector<8x8xf32>
    %37 = arith.addf %35, %36 : vector<8x8xf32>
    %cst_18 = arith.constant dense<0xFF800000> : vector<8xf32>
    %38 = vector.multi_reduction <maximumf>, %37, %cst_18 [1] : vector<8x8xf32> to vector<8xf32>
    %39 = vector.shape_cast %38 : vector<8xf32> to vector<8x1xf32>
    %40 = vector.broadcast %39 : vector<8x1xf32> to vector<8x8xf32>
    %41 = arith.subf %37, %40 : vector<8x8xf32>
    %42 = math.exp %41 : vector<8x8xf32>
    %cst_19 = arith.constant dense<0.000000e+00> : vector<8xf32>
    %43 = vector.multi_reduction <add>, %42, %cst_19 [1] : vector<8x8xf32> to vector<8xf32>
    %44 = vector.shape_cast %43 : vector<8xf32> to vector<8x1xf32>
    %45 = tpu.reciprocal %44 {approx = true} : vector<8x1xf32> -> vector<8x1xf32>
    %46 = vector.broadcast %45 : vector<8x1xf32> to vector<8x8xf32>
    %47 = arith.mulf %42, %46 : vector<8x8xf32>
    %48 = arith.truncf %47 : vector<8x8xf32> to vector<8x8xbf16>
    %cst_20 = arith.constant dense<0.000000e+00> : vector<8x8xf32>
    %49 = tpu.matmul %48, %34, %cst_20 {dimension_numbers = #tpu.dot_dimension_numbers<[1], [0], [0], [1], [0, 0, 1, 1], [], []>} : vector<8x8xbf16>, vector<8x8xbf16>, vector<8x8xf32> -> vector<8x8xf32>
    %50 = vector.extract_strided_slice %31 {offsets = [0, 24], sizes = [8, 8], strides = [1, 1]} : vector<8x96xbf16> to vector<8x8xbf16>
    %51 = vector.extract_strided_slice %31 {offsets = [0, 32], sizes = [8, 8], strides = [1, 1]} : vector<8x96xbf16> to vector<8x8xbf16>
    %52 = vector.extract_strided_slice %31 {offsets = [0, 40], sizes = [8, 8], strides = [1, 1]} : vector<8x96xbf16> to vector<8x8xbf16>
    %cst_21 = arith.constant dense<0.000000e+00> : vector<8x8xf32>
    %53 = tpu.matmul %50, %51, %cst_21 {dimension_numbers = #tpu.dot_dimension_numbers<[1], [1], [0], [0], [0, 0, 1, 0], [], []>} : vector<8x8xbf16>, vector<8x8xbf16>, vector<8x8xf32> -> vector<8x8xf32>
    %54 = vector.broadcast %1 : vector<1x8xf32> to vector<8x8xf32>
    %55 = arith.addf %53, %54 : vector<8x8xf32>
    %cst_22 = arith.constant dense<0xFF800000> : vector<8xf32>
    %56 = vector.multi_reduction <maximumf>, %55, %cst_22 [1] : vector<8x8xf32> to vector<8xf32>
    %57 = vector.shape_cast %56 : vector<8xf32> to vector<8x1xf32>
    %58 = vector.broadcast %57 : vector<8x1xf32> to vector<8x8xf32>
    %59 = arith.subf %55, %58 : vector<8x8xf32>
    %60 = math.exp %59 : vector<8x8xf32>
    %cst_23 = arith.constant dense<0.000000e+00> : vector<8xf32>
    %61 = vector.multi_reduction <add>, %60, %cst_23 [1] : vector<8x8xf32> to vector<8xf32>
    %62 = vector.shape_cast %61 : vector<8xf32> to vector<8x1xf32>
    %63 = tpu.reciprocal %62 {approx = true} : vector<8x1xf32> -> vector<8x1xf32>
    %64 = vector.broadcast %63 : vector<8x1xf32> to vector<8x8xf32>
    %65 = arith.mulf %60, %64 : vector<8x8xf32>
    %66 = arith.truncf %65 : vector<8x8xf32> to vector<8x8xbf16>
    %cst_24 = arith.constant dense<0.000000e+00> : vector<8x8xf32>
    %67 = tpu.matmul %66, %52, %cst_24 {dimension_numbers = #tpu.dot_dimension_numbers<[1], [0], [0], [1], [0, 0, 1, 1], [], []>} : vector<8x8xbf16>, vector<8x8xbf16>, vector<8x8xf32> -> vector<8x8xf32>
    %68 = vector.extract_strided_slice %31 {offsets = [0, 48], sizes = [8, 8], strides = [1, 1]} : vector<8x96xbf16> to vector<8x8xbf16>
    %69 = vector.extract_strided_slice %31 {offsets = [0, 56], sizes = [8, 8], strides = [1, 1]} : vector<8x96xbf16> to vector<8x8xbf16>
    %70 = vector.extract_strided_slice %31 {offsets = [0, 64], sizes = [8, 8], strides = [1, 1]} : vector<8x96xbf16> to vector<8x8xbf16>
    %cst_25 = arith.constant dense<0.000000e+00> : vector<8x8xf32>
    %71 = tpu.matmul %68, %69, %cst_25 {dimension_numbers = #tpu.dot_dimension_numbers<[1], [1], [0], [0], [0, 0, 1, 0], [], []>} : vector<8x8xbf16>, vector<8x8xbf16>, vector<8x8xf32> -> vector<8x8xf32>
    %72 = vector.broadcast %1 : vector<1x8xf32> to vector<8x8xf32>
    %73 = arith.addf %71, %72 : vector<8x8xf32>
    %cst_26 = arith.constant dense<0xFF800000> : vector<8xf32>
    %74 = vector.multi_reduction <maximumf>, %73, %cst_26 [1] : vector<8x8xf32> to vector<8xf32>
    %75 = vector.shape_cast %74 : vector<8xf32> to vector<8x1xf32>
    %76 = vector.broadcast %75 : vector<8x1xf32> to vector<8x8xf32>
    %77 = arith.subf %73, %76 : vector<8x8xf32>
    %78 = math.exp %77 : vector<8x8xf32>
    %cst_27 = arith.constant dense<0.000000e+00> : vector<8xf32>
    %79 = vector.multi_reduction <add>, %78, %cst_27 [1] : vector<8x8xf32> to vector<8xf32>
    %80 = vector.shape_cast %79 : vector<8xf32> to vector<8x1xf32>
    %81 = tpu.reciprocal %80 {approx = true} : vector<8x1xf32> -> vector<8x1xf32>
    %82 = vector.broadcast %81 : vector<8x1xf32> to vector<8x8xf32>
    %83 = arith.mulf %78, %82 : vector<8x8xf32>
    %84 = arith.truncf %83 : vector<8x8xf32> to vector<8x8xbf16>
    %cst_28 = arith.constant dense<0.000000e+00> : vector<8x8xf32>
    %85 = tpu.matmul %84, %70, %cst_28 {dimension_numbers = #tpu.dot_dimension_numbers<[1], [0], [0], [1], [0, 0, 1, 1], [], []>} : vector<8x8xbf16>, vector<8x8xbf16>, vector<8x8xf32> -> vector<8x8xf32>
    %86 = vector.extract_strided_slice %31 {offsets = [0, 72], sizes = [8, 8], strides = [1, 1]} : vector<8x96xbf16> to vector<8x8xbf16>
    %87 = vector.extract_strided_slice %31 {offsets = [0, 80], sizes = [8, 8], strides = [1, 1]} : vector<8x96xbf16> to vector<8x8xbf16>
    %88 = vector.extract_strided_slice %31 {offsets = [0, 88], sizes = [8, 8], strides = [1, 1]} : vector<8x96xbf16> to vector<8x8xbf16>
    %cst_29 = arith.constant dense<0.000000e+00> : vector<8x8xf32>
    %89 = tpu.matmul %86, %87, %cst_29 {dimension_numbers = #tpu.dot_dimension_numbers<[1], [1], [0], [0], [0, 0, 1, 0], [], []>} : vector<8x8xbf16>, vector<8x8xbf16>, vector<8x8xf32> -> vector<8x8xf32>
    %90 = vector.broadcast %1 : vector<1x8xf32> to vector<8x8xf32>
    %91 = arith.addf %89, %90 : vector<8x8xf32>
    %cst_30 = arith.constant dense<0xFF800000> : vector<8xf32>
    %92 = vector.multi_reduction <maximumf>, %91, %cst_30 [1] : vector<8x8xf32> to vector<8xf32>
    %93 = vector.shape_cast %92 : vector<8xf32> to vector<8x1xf32>
    %94 = vector.broadcast %93 : vector<8x1xf32> to vector<8x8xf32>
    %95 = arith.subf %91, %94 : vector<8x8xf32>
    %96 = math.exp %95 : vector<8x8xf32>
    %cst_31 = arith.constant dense<0.000000e+00> : vector<8xf32>
    %97 = vector.multi_reduction <add>, %96, %cst_31 [1] : vector<8x8xf32> to vector<8xf32>
    %98 = vector.shape_cast %97 : vector<8xf32> to vector<8x1xf32>
    %99 = tpu.reciprocal %98 {approx = true} : vector<8x1xf32> -> vector<8x1xf32>
    %100 = vector.broadcast %99 : vector<8x1xf32> to vector<8x8xf32>
    %101 = arith.mulf %96, %100 : vector<8x8xf32>
    %102 = arith.truncf %101 : vector<8x8xf32> to vector<8x8xbf16>
    %cst_32 = arith.constant dense<0.000000e+00> : vector<8x8xf32>
    %103 = tpu.matmul %102, %88, %cst_32 {dimension_numbers = #tpu.dot_dimension_numbers<[1], [0], [0], [1], [0, 0, 1, 1], [], []>} : vector<8x8xbf16>, vector<8x8xbf16>, vector<8x8xf32> -> vector<8x8xf32>
    %104 = tpu.concatenate %49, %67, %85, %103 in 1 : vector<8x8xf32>, vector<8x8xf32>, vector<8x8xf32>, vector<8x8xf32> -> vector<8x32xf32>
    %105 = arith.truncf %104 : vector<8x32xf32> to vector<8x32xbf16>
    %c0_33 = arith.constant 0 : index
    %c0_34 = arith.constant 0 : index
    %106 = vector.load %arg7[%c0_33, %c0_34] : memref<32x32xbf16, #tpu.memory_space<vmem>>, vector<32x32xbf16>
    %cst_35 = arith.constant dense<0.000000e+00> : vector<8x32xf32>
    %107 = tpu.matmul %105, %106, %cst_35 {dimension_numbers = #tpu.dot_dimension_numbers<[1], [0], [0], [1], [0, 0, 1, 1], [], []>} : vector<8x32xbf16>, vector<32x32xbf16>, vector<8x32xf32> -> vector<8x32xf32>
    %c0_36 = arith.constant 0 : index
    %c0_37 = arith.constant 0 : index
    %108 = vector.load %arg8[%c0_36, %c0_37] : memref<1x32xf32, #tpu.memory_space<vmem>>, vector<1x32xf32>
    %109 = vector.broadcast %108 : vector<1x32xf32> to vector<8x32xf32>
    %110 = arith.addf %107, %109 : vector<8x32xf32>
    %111 = arith.addf %110, %24 : vector<8x32xf32>
    %c0_38 = arith.constant 0 : index
    %c0_39 = arith.constant 0 : index
    %112 = vector.load %arg9[%c0_38, %c0_39] : memref<1x32xf32, #tpu.memory_space<vmem>>, vector<1x32xf32>
    %c0_40 = arith.constant 0 : index
    %c0_41 = arith.constant 0 : index
    %113 = vector.load %arg10[%c0_40, %c0_41] : memref<1x32xf32, #tpu.memory_space<vmem>>, vector<1x32xf32>
    %cst_42 = arith.constant dense<0.000000e+00> : vector<8xf32>
    %114 = vector.multi_reduction <add>, %111, %cst_42 [1] : vector<8x32xf32> to vector<8xf32>
    %115 = vector.shape_cast %114 : vector<8xf32> to vector<8x1xf32>
    %cst_43 = arith.constant 3.200000e+01 : f32
    %116 = vector.broadcast %cst_43 : f32 to vector<8x1xf32>
    %117 = arith.divf %115, %116 : vector<8x1xf32>
    %118 = vector.broadcast %117 : vector<8x1xf32> to vector<8x32xf32>
    %119 = arith.subf %111, %118 : vector<8x32xf32>
    %120 = arith.mulf %119, %119 : vector<8x32xf32>
    %cst_44 = arith.constant dense<0.000000e+00> : vector<8xf32>
    %121 = vector.multi_reduction <add>, %120, %cst_44 [1] : vector<8x32xf32> to vector<8xf32>
    %122 = vector.shape_cast %121 : vector<8xf32> to vector<8x1xf32>
    %cst_45 = arith.constant 3.200000e+01 : f32
    %123 = vector.broadcast %cst_45 : f32 to vector<8x1xf32>
    %124 = arith.divf %122, %123 : vector<8x1xf32>
    %cst_46 = arith.constant 9.99999996E-13 : f32
    %125 = vector.broadcast %cst_46 : f32 to vector<8x1xf32>
    %126 = arith.addf %124, %125 : vector<8x1xf32>
    %127 = math.rsqrt %126 : vector<8x1xf32>
    %128 = vector.broadcast %127 : vector<8x1xf32> to vector<8x32xf32>
    %129 = arith.mulf %119, %128 : vector<8x32xf32>
    %130 = vector.broadcast %112 : vector<1x32xf32> to vector<8x32xf32>
    %131 = arith.mulf %129, %130 : vector<8x32xf32>
    %132 = vector.broadcast %113 : vector<1x32xf32> to vector<8x32xf32>
    %133 = arith.addf %131, %132 : vector<8x32xf32>
    %c0_47 = arith.constant 0 : index
    %c0_48 = arith.constant 0 : index
    %134 = vector.load %arg11[%c0_47, %c0_48] : memref<32x128xbf16, #tpu.memory_space<vmem>>, vector<32x128xbf16>
    %c0_49 = arith.constant 0 : index
    %c0_50 = arith.constant 0 : index
    %135 = vector.load %arg12[%c0_49, %c0_50] : memref<1x128xf32, #tpu.memory_space<vmem>>, vector<1x128xf32>
    %136 = arith.truncf %133 : vector<8x32xf32> to vector<8x32xbf16>
    %cst_51 = arith.constant dense<0.000000e+00> : vector<8x128xf32>
    %137 = tpu.matmul %136, %134, %cst_51 {dimension_numbers = #tpu.dot_dimension_numbers<[1], [0], [0], [1], [0, 0, 1, 1], [], []>} : vector<8x32xbf16>, vector<32x128xbf16>, vector<8x128xf32> -> vector<8x128xf32>
    %138 = vector.broadcast %135 : vector<1x128xf32> to vector<8x128xf32>
    %139 = arith.addf %137, %138 : vector<8x128xf32>
    %cst_52 = arith.constant 5.000000e-01 : f32
    %140 = vector.broadcast %cst_52 : f32 to vector<8x128xf32>
    %141 = arith.mulf %140, %139 : vector<8x128xf32>
    %cst_53 = arith.constant 4.471500e-02 : f32
    %142 = vector.broadcast %cst_53 : f32 to vector<8x128xf32>
    %143 = arith.mulf %142, %139 : vector<8x128xf32>
    %144 = arith.mulf %143, %139 : vector<8x128xf32>
    %145 = arith.mulf %144, %139 : vector<8x128xf32>
    %146 = arith.addf %139, %145 : vector<8x128xf32>
    %cst_54 = arith.constant 0.797884583 : f32
    %147 = vector.broadcast %cst_54 : f32 to vector<8x128xf32>
    %148 = arith.mulf %147, %146 : vector<8x128xf32>
    %149 = math.tanh %148 : vector<8x128xf32>
    %cst_55 = arith.constant 1.000000e+00 : f32
    %150 = vector.broadcast %cst_55 : f32 to vector<8x128xf32>
    %151 = arith.addf %150, %149 : vector<8x128xf32>
    %152 = arith.mulf %141, %151 : vector<8x128xf32>
    %c0_56 = arith.constant 0 : index
    %c0_57 = arith.constant 0 : index
    %153 = vector.load %arg13[%c0_56, %c0_57] : memref<128x32xbf16, #tpu.memory_space<vmem>>, vector<128x32xbf16>
    %c0_58 = arith.constant 0 : index
    %c0_59 = arith.constant 0 : index
    %154 = vector.load %arg14[%c0_58, %c0_59] : memref<1x32xf32, #tpu.memory_space<vmem>>, vector<1x32xf32>
    %155 = arith.truncf %152 : vector<8x128xf32> to vector<8x128xbf16>
    %cst_60 = arith.constant dense<0.000000e+00> : vector<8x32xf32>
    %156 = tpu.matmul %155, %153, %cst_60 {dimension_numbers = #tpu.dot_dimension_numbers<[1], [0], [0], [1], [0, 0, 1, 1], [], []>} : vector<8x128xbf16>, vector<128x32xbf16>, vector<8x32xf32> -> vector<8x32xf32>
    %157 = vector.broadcast %154 : vector<1x32xf32> to vector<8x32xf32>
    %158 = arith.addf %156, %157 : vector<8x32xf32>
    %159 = arith.addf %158, %133 : vector<8x32xf32>
    %c0_61 = arith.constant 0 : index
    %c0_62 = arith.constant 0 : index
    %160 = vector.load %arg15[%c0_61, %c0_62] : memref<1x32xf32, #tpu.memory_space<vmem>>, vector<1x32xf32>
    %c0_63 = arith.constant 0 : index
    %c0_64 = arith.constant 0 : index
    %161 = vector.load %arg16[%c0_63, %c0_64] : memref<1x32xf32, #tpu.memory_space<vmem>>, vector<1x32xf32>
    %cst_65 = arith.constant dense<0.000000e+00> : vector<8xf32>
    %162 = vector.multi_reduction <add>, %159, %cst_65 [1] : vector<8x32xf32> to vector<8xf32>
    %163 = vector.shape_cast %162 : vector<8xf32> to vector<8x1xf32>
    %cst_66 = arith.constant 3.200000e+01 : f32
    %164 = vector.broadcast %cst_66 : f32 to vector<8x1xf32>
    %165 = arith.divf %163, %164 : vector<8x1xf32>
    %166 = vector.broadcast %165 : vector<8x1xf32> to vector<8x32xf32>
    %167 = arith.subf %159, %166 : vector<8x32xf32>
    %168 = arith.mulf %167, %167 : vector<8x32xf32>
    %cst_67 = arith.constant dense<0.000000e+00> : vector<8xf32>
    %169 = vector.multi_reduction <add>, %168, %cst_67 [1] : vector<8x32xf32> to vector<8xf32>
    %170 = vector.shape_cast %169 : vector<8xf32> to vector<8x1xf32>
    %cst_68 = arith.constant 3.200000e+01 : f32
    %171 = vector.broadcast %cst_68 : f32 to vector<8x1xf32>
    %172 = arith.divf %170, %171 : vector<8x1xf32>
    %cst_69 = arith.constant 9.99999996E-13 : f32
    %173 = vector.broadcast %cst_69 : f32 to vector<8x1xf32>
    %174 = arith.addf %172, %173 : vector<8x1xf32>
    %175 = math.rsqrt %174 : vector<8x1xf32>
    %176 = vector.broadcast %175 : vector<8x1xf32> to vector<8x32xf32>
    %177 = arith.mulf %167, %176 : vector<8x32xf32>
    %178 = vector.broadcast %160 : vector<1x32xf32> to vector<8x32xf32>
    %179 = arith.mulf %177, %178 : vector<8x32xf32>
    %180 = vector.broadcast %161 : vector<1x32xf32> to vector<8x32xf32>
    %181 = arith.addf %179, %180 : vector<8x32xf32>
    %c0_70 = arith.constant 0 : index
    %c0_71 = arith.constant 0 : index
    %182 = vector.load %arg17[%c0_70, %c0_71] : memref<32x96xbf16, #tpu.memory_space<vmem>>, vector<32x96xbf16>
    %c0_72 = arith.constant 0 : index
    %c0_73 = arith.constant 0 : index
    %183 = vector.load %arg18[%c0_72, %c0_73] : memref<1x96xf32, #tpu.memory_space<vmem>>, vector<1x96xf32>
    %184 = arith.truncf %181 : vector<8x32xf32> to vector<8x32xbf16>
    %cst_74 = arith.constant dense<0.000000e+00> : vector<8x96xf32>
    %185 = tpu.matmul %184, %182, %cst_74 {dimension_numbers = #tpu.dot_dimension_numbers<[1], [0], [0], [1], [0, 0, 1, 1], [], []>} : vector<8x32xbf16>, vector<32x96xbf16>, vector<8x96xf32> -> vector<8x96xf32>
    %186 = vector.broadcast %183 : vector<1x96xf32> to vector<8x96xf32>
    %187 = arith.addf %185, %186 : vector<8x96xf32>
    %188 = arith.truncf %187 : vector<8x96xf32> to vector<8x96xbf16>
    %189 = vector.extract_strided_slice %188 {offsets = [0, 0], sizes = [8, 8], strides = [1, 1]} : vector<8x96xbf16> to vector<8x8xbf16>
    %190 = vector.extract_strided_slice %188 {offsets = [0, 8], sizes = [8, 8], strides = [1, 1]} : vector<8x96xbf16> to vector<8x8xbf16>
    %191 = vector.extract_strided_slice %188 {offsets = [0, 16], sizes = [8, 8], strides = [1, 1]} : vector<8x96xbf16> to vector<8x8xbf16>
    %cst_75 = arith.constant dense<0.000000e+00> : vector<8x8xf32>
    %192 = tpu.matmul %189, %190, %cst_75 {dimension_numbers = #tpu.dot_dimension_numbers<[1], [1], [0], [0], [0, 0, 1, 0], [], []>} : vector<8x8xbf16>, vector<8x8xbf16>, vector<8x8xf32> -> vector<8x8xf32>
    %193 = vector.broadcast %1 : vector<1x8xf32> to vector<8x8xf32>
    %194 = arith.addf %192, %193 : vector<8x8xf32>
    %cst_76 = arith.constant dense<0xFF800000> : vector<8xf32>
    %195 = vector.multi_reduction <maximumf>, %194, %cst_76 [1] : vector<8x8xf32> to vector<8xf32>
    %196 = vector.shape_cast %195 : vector<8xf32> to vector<8x1xf32>
    %197 = vector.broadcast %196 : vector<8x1xf32> to vector<8x8xf32>
    %198 = arith.subf %194, %197 : vector<8x8xf32>
    %199 = math.exp %198 : vector<8x8xf32>
    %cst_77 = arith.constant dense<0.000000e+00> : vector<8xf32>
    %200 = vector.multi_reduction <add>, %199, %cst_77 [1] : vector<8x8xf32> to vector<8xf32>
    %201 = vector.shape_cast %200 : vector<8xf32> to vector<8x1xf32>
    %202 = tpu.reciprocal %201 {approx = true} : vector<8x1xf32> -> vector<8x1xf32>
    %203 = vector.broadcast %202 : vector<8x1xf32> to vector<8x8xf32>
    %204 = arith.mulf %199, %203 : vector<8x8xf32>
    %205 = arith.truncf %204 : vector<8x8xf32> to vector<8x8xbf16>
    %cst_78 = arith.constant dense<0.000000e+00> : vector<8x8xf32>
    %206 = tpu.matmul %205, %191, %cst_78 {dimension_numbers = #tpu.dot_dimension_numbers<[1], [0], [0], [1], [0, 0, 1, 1], [], []>} : vector<8x8xbf16>, vector<8x8xbf16>, vector<8x8xf32> -> vector<8x8xf32>
    %207 = vector.extract_strided_slice %188 {offsets = [0, 24], sizes = [8, 8], strides = [1, 1]} : vector<8x96xbf16> to vector<8x8xbf16>
    %208 = vector.extract_strided_slice %188 {offsets = [0, 32], sizes = [8, 8], strides = [1, 1]} : vector<8x96xbf16> to vector<8x8xbf16>
    %209 = vector.extract_strided_slice %188 {offsets = [0, 40], sizes = [8, 8], strides = [1, 1]} : vector<8x96xbf16> to vector<8x8xbf16>
    %cst_79 = arith.constant dense<0.000000e+00> : vector<8x8xf32>
    %210 = tpu.matmul %207, %208, %cst_79 {dimension_numbers = #tpu.dot_dimension_numbers<[1], [1], [0], [0], [0, 0, 1, 0], [], []>} : vector<8x8xbf16>, vector<8x8xbf16>, vector<8x8xf32> -> vector<8x8xf32>
    %211 = vector.broadcast %1 : vector<1x8xf32> to vector<8x8xf32>
    %212 = arith.addf %210, %211 : vector<8x8xf32>
    %cst_80 = arith.constant dense<0xFF800000> : vector<8xf32>
    %213 = vector.multi_reduction <maximumf>, %212, %cst_80 [1] : vector<8x8xf32> to vector<8xf32>
    %214 = vector.shape_cast %213 : vector<8xf32> to vector<8x1xf32>
    %215 = vector.broadcast %214 : vector<8x1xf32> to vector<8x8xf32>
    %216 = arith.subf %212, %215 : vector<8x8xf32>
    %217 = math.exp %216 : vector<8x8xf32>
    %cst_81 = arith.constant dense<0.000000e+00> : vector<8xf32>
    %218 = vector.multi_reduction <add>, %217, %cst_81 [1] : vector<8x8xf32> to vector<8xf32>
    %219 = vector.shape_cast %218 : vector<8xf32> to vector<8x1xf32>
    %220 = tpu.reciprocal %219 {approx = true} : vector<8x1xf32> -> vector<8x1xf32>
    %221 = vector.broadcast %220 : vector<8x1xf32> to vector<8x8xf32>
    %222 = arith.mulf %217, %221 : vector<8x8xf32>
    %223 = arith.truncf %222 : vector<8x8xf32> to vector<8x8xbf16>
    %cst_82 = arith.constant dense<0.000000e+00> : vector<8x8xf32>
    %224 = tpu.matmul %223, %209, %cst_82 {dimension_numbers = #tpu.dot_dimension_numbers<[1], [0], [0], [1], [0, 0, 1, 1], [], []>} : vector<8x8xbf16>, vector<8x8xbf16>, vector<8x8xf32> -> vector<8x8xf32>
    %225 = vector.extract_strided_slice %188 {offsets = [0, 48], sizes = [8, 8], strides = [1, 1]} : vector<8x96xbf16> to vector<8x8xbf16>
    %226 = vector.extract_strided_slice %188 {offsets = [0, 56], sizes = [8, 8], strides = [1, 1]} : vector<8x96xbf16> to vector<8x8xbf16>
    %227 = vector.extract_strided_slice %188 {offsets = [0, 64], sizes = [8, 8], strides = [1, 1]} : vector<8x96xbf16> to vector<8x8xbf16>
    %cst_83 = arith.constant dense<0.000000e+00> : vector<8x8xf32>
    %228 = tpu.matmul %225, %226, %cst_83 {dimension_numbers = #tpu.dot_dimension_numbers<[1], [1], [0], [0], [0, 0, 1, 0], [], []>} : vector<8x8xbf16>, vector<8x8xbf16>, vector<8x8xf32> -> vector<8x8xf32>
    %229 = vector.broadcast %1 : vector<1x8xf32> to vector<8x8xf32>
    %230 = arith.addf %228, %229 : vector<8x8xf32>
    %cst_84 = arith.constant dense<0xFF800000> : vector<8xf32>
    %231 = vector.multi_reduction <maximumf>, %230, %cst_84 [1] : vector<8x8xf32> to vector<8xf32>
    %232 = vector.shape_cast %231 : vector<8xf32> to vector<8x1xf32>
    %233 = vector.broadcast %232 : vector<8x1xf32> to vector<8x8xf32>
    %234 = arith.subf %230, %233 : vector<8x8xf32>
    %235 = math.exp %234 : vector<8x8xf32>
    %cst_85 = arith.constant dense<0.000000e+00> : vector<8xf32>
    %236 = vector.multi_reduction <add>, %235, %cst_85 [1] : vector<8x8xf32> to vector<8xf32>
    %237 = vector.shape_cast %236 : vector<8xf32> to vector<8x1xf32>
    %238 = tpu.reciprocal %237 {approx = true} : vector<8x1xf32> -> vector<8x1xf32>
    %239 = vector.broadcast %238 : vector<8x1xf32> to vector<8x8xf32>
    %240 = arith.mulf %235, %239 : vector<8x8xf32>
    %241 = arith.truncf %240 : vector<8x8xf32> to vector<8x8xbf16>
    %cst_86 = arith.constant dense<0.000000e+00> : vector<8x8xf32>
    %242 = tpu.matmul %241, %227, %cst_86 {dimension_numbers = #tpu.dot_dimension_numbers<[1], [0], [0], [1], [0, 0, 1, 1], [], []>} : vector<8x8xbf16>, vector<8x8xbf16>, vector<8x8xf32> -> vector<8x8xf32>
    %243 = vector.extract_strided_slice %188 {offsets = [0, 72], sizes = [8, 8], strides = [1, 1]} : vector<8x96xbf16> to vector<8x8xbf16>
    %244 = vector.extract_strided_slice %188 {offsets = [0, 80], sizes = [8, 8], strides = [1, 1]} : vector<8x96xbf16> to vector<8x8xbf16>
    %245 = vector.extract_strided_slice %188 {offsets = [0, 88], sizes = [8, 8], strides = [1, 1]} : vector<8x96xbf16> to vector<8x8xbf16>
    %cst_87 = arith.constant dense<0.000000e+00> : vector<8x8xf32>
    %246 = tpu.matmul %243, %244, %cst_87 {dimension_numbers = #tpu.dot_dimension_numbers<[1], [1], [0], [0], [0, 0, 1, 0], [], []>} : vector<8x8xbf16>, vector<8x8xbf16>, vector<8x8xf32> -> vector<8x8xf32>
    %247 = vector.broadcast %1 : vector<1x8xf32> to vector<8x8xf32>
    %248 = arith.addf %246, %247 : vector<8x8xf32>
    %cst_88 = arith.constant dense<0xFF800000> : vector<8xf32>
    %249 = vector.multi_reduction <maximumf>, %248, %cst_88 [1] : vector<8x8xf32> to vector<8xf32>
    %250 = vector.shape_cast %249 : vector<8xf32> to vector<8x1xf32>
    %251 = vector.broadcast %250 : vector<8x1xf32> to vector<8x8xf32>
    %252 = arith.subf %248, %251 : vector<8x8xf32>
    %253 = math.exp %252 : vector<8x8xf32>
    %cst_89 = arith.constant dense<0.000000e+00> : vector<8xf32>
    %254 = vector.multi_reduction <add>, %253, %cst_89 [1] : vector<8x8xf32> to vector<8xf32>
    %255 = vector.shape_cast %254 : vector<8xf32> to vector<8x1xf32>
    %256 = tpu.reciprocal %255 {approx = true} : vector<8x1xf32> -> vector<8x1xf32>
    %257 = vector.broadcast %256 : vector<8x1xf32> to vector<8x8xf32>
    %258 = arith.mulf %253, %257 : vector<8x8xf32>
    %259 = arith.truncf %258 : vector<8x8xf32> to vector<8x8xbf16>
    %cst_90 = arith.constant dense<0.000000e+00> : vector<8x8xf32>
    %260 = tpu.matmul %259, %245, %cst_90 {dimension_numbers = #tpu.dot_dimension_numbers<[1], [0], [0], [1], [0, 0, 1, 1], [], []>} : vector<8x8xbf16>, vector<8x8xbf16>, vector<8x8xf32> -> vector<8x8xf32>
    %261 = tpu.concatenate %206, %224, %242, %260 in 1 : vector<8x8xf32>, vector<8x8xf32>, vector<8x8xf32>, vector<8x8xf32> -> vector<8x32xf32>
    %262 = arith.truncf %261 : vector<8x32xf32> to vector<8x32xbf16>
    %c0_91 = arith.constant 0 : index
    %c0_92 = arith.constant 0 : index
    %263 = vector.load %arg19[%c0_91, %c0_92] : memref<32x32xbf16, #tpu.memory_space<vmem>>, vector<32x32xbf16>
    %cst_93 = arith.constant dense<0.000000e+00> : vector<8x32xf32>
    %264 = tpu.matmul %262, %263, %cst_93 {dimension_numbers = #tpu.dot_dimension_numbers<[1], [0], [0], [1], [0, 0, 1, 1], [], []>} : vector<8x32xbf16>, vector<32x32xbf16>, vector<8x32xf32> -> vector<8x32xf32>
    %c0_94 = arith.constant 0 : index
    %c0_95 = arith.constant 0 : index
    %265 = vector.load %arg20[%c0_94, %c0_95] : memref<1x32xf32, #tpu.memory_space<vmem>>, vector<1x32xf32>
    %266 = vector.broadcast %265 : vector<1x32xf32> to vector<8x32xf32>
    %267 = arith.addf %264, %266 : vector<8x32xf32>
    %268 = arith.addf %267, %181 : vector<8x32xf32>
    %c0_96 = arith.constant 0 : index
    %c0_97 = arith.constant 0 : index
    %269 = vector.load %arg21[%c0_96, %c0_97] : memref<1x32xf32, #tpu.memory_space<vmem>>, vector<1x32xf32>
    %c0_98 = arith.constant 0 : index
    %c0_99 = arith.constant 0 : index
    %270 = vector.load %arg22[%c0_98, %c0_99] : memref<1x32xf32, #tpu.memory_space<vmem>>, vector<1x32xf32>
    %cst_100 = arith.constant dense<0.000000e+00> : vector<8xf32>
    %271 = vector.multi_reduction <add>, %268, %cst_100 [1] : vector<8x32xf32> to vector<8xf32>
    %272 = vector.shape_cast %271 : vector<8xf32> to vector<8x1xf32>
    %cst_101 = arith.constant 3.200000e+01 : f32
    %273 = vector.broadcast %cst_101 : f32 to vector<8x1xf32>
    %274 = arith.divf %272, %273 : vector<8x1xf32>
    %275 = vector.broadcast %274 : vector<8x1xf32> to vector<8x32xf32>
    %276 = arith.subf %268, %275 : vector<8x32xf32>
    %277 = arith.mulf %276, %276 : vector<8x32xf32>
    %cst_102 = arith.constant dense<0.000000e+00> : vector<8xf32>
    %278 = vector.multi_reduction <add>, %277, %cst_102 [1] : vector<8x32xf32> to vector<8xf32>
    %279 = vector.shape_cast %278 : vector<8xf32> to vector<8x1xf32>
    %cst_103 = arith.constant 3.200000e+01 : f32
    %280 = vector.broadcast %cst_103 : f32 to vector<8x1xf32>
    %281 = arith.divf %279, %280 : vector<8x1xf32>
    %cst_104 = arith.constant 9.99999996E-13 : f32
    %282 = vector.broadcast %cst_104 : f32 to vector<8x1xf32>
    %283 = arith.addf %281, %282 : vector<8x1xf32>
    %284 = math.rsqrt %283 : vector<8x1xf32>
    %285 = vector.broadcast %284 : vector<8x1xf32> to vector<8x32xf32>
    %286 = arith.mulf %276, %285 : vector<8x32xf32>
    %287 = vector.broadcast %269 : vector<1x32xf32> to vector<8x32xf32>
    %288 = arith.mulf %286, %287 : vector<8x32xf32>
    %289 = vector.broadcast %270 : vector<1x32xf32> to vector<8x32xf32>
    %290 = arith.addf %288, %289 : vector<8x32xf32>
    %c0_105 = arith.constant 0 : index
    %c0_106 = arith.constant 0 : index
    %291 = vector.load %arg23[%c0_105, %c0_106] : memref<32x128xbf16, #tpu.memory_space<vmem>>, vector<32x128xbf16>
    %c0_107 = arith.constant 0 : index
    %c0_108 = arith.constant 0 : index
    %292 = vector.load %arg24[%c0_107, %c0_108] : memref<1x128xf32, #tpu.memory_space<vmem>>, vector<1x128xf32>
    %293 = arith.truncf %290 : vector<8x32xf32> to vector<8x32xbf16>
    %cst_109 = arith.constant dense<0.000000e+00> : vector<8x128xf32>
    %294 = tpu.matmul %293, %291, %cst_109 {dimension_numbers = #tpu.dot_dimension_numbers<[1], [0], [0], [1], [0, 0, 1, 1], [], []>} : vector<8x32xbf16>, vector<32x128xbf16>, vector<8x128xf32> -> vector<8x128xf32>
    %295 = vector.broadcast %292 : vector<1x128xf32> to vector<8x128xf32>
    %296 = arith.addf %294, %295 : vector<8x128xf32>
    %cst_110 = arith.constant 5.000000e-01 : f32
    %297 = vector.broadcast %cst_110 : f32 to vector<8x128xf32>
    %298 = arith.mulf %297, %296 : vector<8x128xf32>
    %cst_111 = arith.constant 4.471500e-02 : f32
    %299 = vector.broadcast %cst_111 : f32 to vector<8x128xf32>
    %300 = arith.mulf %299, %296 : vector<8x128xf32>
    %301 = arith.mulf %300, %296 : vector<8x128xf32>
    %302 = arith.mulf %301, %296 : vector<8x128xf32>
    %303 = arith.addf %296, %302 : vector<8x128xf32>
    %cst_112 = arith.constant 0.797884583 : f32
    %304 = vector.broadcast %cst_112 : f32 to vector<8x128xf32>
    %305 = arith.mulf %304, %303 : vector<8x128xf32>
    %306 = math.tanh %305 : vector<8x128xf32>
    %cst_113 = arith.constant 1.000000e+00 : f32
    %307 = vector.broadcast %cst_113 : f32 to vector<8x128xf32>
    %308 = arith.addf %307, %306 : vector<8x128xf32>
    %309 = arith.mulf %298, %308 : vector<8x128xf32>
    %c0_114 = arith.constant 0 : index
    %c0_115 = arith.constant 0 : index
    %310 = vector.load %arg25[%c0_114, %c0_115] : memref<128x32xbf16, #tpu.memory_space<vmem>>, vector<128x32xbf16>
    %c0_116 = arith.constant 0 : index
    %c0_117 = arith.constant 0 : index
    %311 = vector.load %arg26[%c0_116, %c0_117] : memref<1x32xf32, #tpu.memory_space<vmem>>, vector<1x32xf32>
    %312 = arith.truncf %309 : vector<8x128xf32> to vector<8x128xbf16>
    %cst_118 = arith.constant dense<0.000000e+00> : vector<8x32xf32>
    %313 = tpu.matmul %312, %310, %cst_118 {dimension_numbers = #tpu.dot_dimension_numbers<[1], [0], [0], [1], [0, 0, 1, 1], [], []>} : vector<8x128xbf16>, vector<128x32xbf16>, vector<8x32xf32> -> vector<8x32xf32>
    %314 = vector.broadcast %311 : vector<1x32xf32> to vector<8x32xf32>
    %315 = arith.addf %313, %314 : vector<8x32xf32>
    %316 = arith.addf %315, %290 : vector<8x32xf32>
    %c0_119 = arith.constant 0 : index
    %c0_120 = arith.constant 0 : index
    %317 = vector.load %arg27[%c0_119, %c0_120] : memref<1x32xf32, #tpu.memory_space<vmem>>, vector<1x32xf32>
    %c0_121 = arith.constant 0 : index
    %c0_122 = arith.constant 0 : index
    %318 = vector.load %arg28[%c0_121, %c0_122] : memref<1x32xf32, #tpu.memory_space<vmem>>, vector<1x32xf32>
    %cst_123 = arith.constant dense<0.000000e+00> : vector<8xf32>
    %319 = vector.multi_reduction <add>, %316, %cst_123 [1] : vector<8x32xf32> to vector<8xf32>
    %320 = vector.shape_cast %319 : vector<8xf32> to vector<8x1xf32>
    %cst_124 = arith.constant 3.200000e+01 : f32
    %321 = vector.broadcast %cst_124 : f32 to vector<8x1xf32>
    %322 = arith.divf %320, %321 : vector<8x1xf32>
    %323 = vector.broadcast %322 : vector<8x1xf32> to vector<8x32xf32>
    %324 = arith.subf %316, %323 : vector<8x32xf32>
    %325 = arith.mulf %324, %324 : vector<8x32xf32>
    %cst_125 = arith.constant dense<0.000000e+00> : vector<8xf32>
    %326 = vector.multi_reduction <add>, %325, %cst_125 [1] : vector<8x32xf32> to vector<8xf32>
    %327 = vector.shape_cast %326 : vector<8xf32> to vector<8x1xf32>
    %cst_126 = arith.constant 3.200000e+01 : f32
    %328 = vector.broadcast %cst_126 : f32 to vector<8x1xf32>
    %329 = arith.divf %327, %328 : vector<8x1xf32>
    %cst_127 = arith.constant 9.99999996E-13 : f32
    %330 = vector.broadcast %cst_127 : f32 to vector<8x1xf32>
    %331 = arith.addf %329, %330 : vector<8x1xf32>
    %332 = math.rsqrt %331 : vector<8x1xf32>
    %333 = vector.broadcast %332 : vector<8x1xf32> to vector<8x32xf32>
    %334 = arith.mulf %324, %333 : vector<8x32xf32>
    %335 = vector.broadcast %317 : vector<1x32xf32> to vector<8x32xf32>
    %336 = arith.mulf %334, %335 : vector<8x32xf32>
    %337 = vector.broadcast %318 : vector<1x32xf32> to vector<8x32xf32>
    %338 = arith.addf %336, %337 : vector<8x32xf32>
    %339 = vector.extract_strided_slice %338 {offsets = [0, 0], sizes = [1, 32], strides = [1, 1]} : vector<8x32xf32> to vector<1x32xf32>
    %c0_128 = arith.constant 0 : index
    %c0_129 = arith.constant 0 : index
    %340 = vector.load %arg29[%c0_128, %c0_129] : memref<32x32xbf16, #tpu.memory_space<vmem>>, vector<32x32xbf16>
    %c0_130 = arith.constant 0 : index
    %c0_131 = arith.constant 0 : index
    %341 = vector.load %arg30[%c0_130, %c0_131] : memref<1x32xf32, #tpu.memory_space<vmem>>, vector<1x32xf32>
    %342 = arith.truncf %339 : vector<1x32xf32> to vector<1x32xbf16>
    %cst_132 = arith.constant dense<0.000000e+00> : vector<1x32xf32>
    %343 = tpu.matmul %342, %340, %cst_132 {dimension_numbers = #tpu.dot_dimension_numbers<[1], [0], [0], [1], [0, 0, 1, 1], [], []>} : vector<1x32xbf16>, vector<32x32xbf16>, vector<1x32xf32> -> vector<1x32xf32>
    %344 = arith.addf %343, %341 : vector<1x32xf32>
    %345 = math.tanh %344 : vector<1x32xf32>
    %c0_133 = arith.constant 0 : index
    %c0_134 = arith.constant 0 : index
    %346 = vector.load %arg31[%c0_133, %c0_134] : memref<32x128xbf16, #tpu.memory_space<vmem>>, vector<32x128xbf16>
    %c0_135 = arith.constant 0 : index
    %c0_136 = arith.constant 0 : index
    %347 = vector.load %arg32[%c0_135, %c0_136] : memref<1x128xf32, #tpu.memory_space<vmem>>, vector<1x128xf32>
    %348 = arith.truncf %345 : vector<1x32xf32> to vector<1x32xbf16>
    %cst_137 = arith.constant dense<0.000000e+00> : vector<1x128xf32>
    %349 = tpu.matmul %348, %346, %cst_137 {dimension_numbers = #tpu.dot_dimension_numbers<[1], [0], [0], [1], [0, 0, 1, 1], [], []>} : vector<1x32xbf16>, vector<32x128xbf16>, vector<1x128xf32> -> vector<1x128xf32>
    %350 = arith.addf %349, %347 : vector<1x128xf32>
    %351 = vector.shape_cast %350 : vector<1x128xf32> to vector<1x128xf32>
    %352 = vector.broadcast %351 : vector<1x128xf32> to vector<8x128xf32>
    %c0_138 = arith.constant 0 : index
    %c0_139 = arith.constant 0 : index
    %c0_140 = arith.constant 0 : index
    %353 = vector.load %arg33[%c0_138, %c0_139, %c0_140] : memref<1x8x128xf32, #tpu.memory_space<vmem>>, vector<1x8x128xf32>
    %354 = vector.shape_cast %353 : vector<1x8x128xf32> to vector<8x128xf32>
    %355 = vector.shape_cast %352 : vector<8x128xf32> to vector<1x8x128xf32>
    tpu.vector_store %arg33[%c0_138, %c0_139, %c0_140], %355 {strides = array<i32>} : memref<1x8x128xf32, #tpu.memory_space<vmem>>, vector<1x8x128xf32>,
    return
  }
  func.func @transform_0(%arg0: i32) -> (i32, i32) {
    %c0_i32 = arith.constant 0 : i32
    %c0_i32_0 = arith.constant 0 : i32
    return %arg0, %c0_i32 : i32, i32
  }
  func.func @transform_1(%arg0: i32) -> (i32, i32, i32) {
    %c0_i32 = arith.constant 0 : i32
    %c0_i32_0 = arith.constant 0 : i32
    %c0_i32_1 = arith.constant 0 : i32
    return %arg0, %c0_i32, %c0_i32_0 : i32, i32, i32
  }
  func.func @transform_2(%arg0: i32) -> (i32, i32) {
    %c0_i32 = arith.constant 0 : i32
    %c0_i32_0 = arith.constant 0 : i32
    %c0_i32_1 = arith.constant 0 : i32
    return %c0_i32, %c0_i32_0 : i32, i32
  }
  func.func @transform_3(%arg0: i32) -> (i32, i32) {
    %c0_i32 = arith.constant 0 : i32
    %c0_i32_0 = arith.constant 0 : i32
    %c0_i32_1 = arith.constant 0 : i32
    return %c0_i32, %c0_i32_0 : i32, i32
  }
  func.func @transform_4(%arg0: i32) -> (i32, i32) {
    %c0_i32 = arith.constant 0 : i32
    %c0_i32_0 = arith.constant 0 : i32
    %c0_i32_1 = arith.constant 0 : i32
    return %c0_i32, %c0_i32_0 : i32, i32
  }
  func.func @transform_5(%arg0: i32) -> (i32, i32) {
    %c0_i32 = arith.constant 0 : i32
    %c0_i32_0 = arith.constant 0 : i32
    %c0_i32_1 = arith.constant 0 : i32
    return %c0_i32, %c0_i32_0 : i32, i32
  }
  func.func @transform_6(%arg0: i32) -> (i32, i32) {
    %c0_i32 = arith.constant 0 : i32
    %c0_i32_0 = arith.constant 0 : i32
    %c0_i32_1 = arith.constant 0 : i32
    return %c0_i32, %c0_i32_0 : i32, i32
  }
  func.func @transform_7(%arg0: i32) -> (i32, i32) {
    %c0_i32 = arith.constant 0 : i32
    %c0_i32_0 = arith.constant 0 : i32
    %c0_i32_1 = arith.constant 0 : i32
    return %c0_i32, %c0_i32_0 : i32, i32
  }
  func.func @transform_8(%arg0: i32) -> (i32, i32) {
    %c0_i32 = arith.constant 0 : i32
    %c0_i32_0 = arith.constant 0 : i32
    %c0_i32_1 = arith.constant 0 : i32
    return %c0_i32, %c0_i32_0 : i32, i32
  }
  func.func @transform_9(%arg0: i32) -> (i32, i32) {
    %c0_i32 = arith.constant 0 : i32
    %c0_i32_0 = arith.constant 0 : i32
    %c0_i32_1 = arith.constant 0 : i32
    return %c0_i32, %c0_i32_0 : i32, i32
  }
  func.func @transform_10(%arg0: i32) -> (i32, i32) {
    %c0_i32 = arith.constant 0 : i32
    %c0_i32_0 = arith.constant 0 : i32
    %c0_i32_1 = arith.constant 0 : i32
    return %c0_i32, %c0_i32_0 : i32, i32
  }
  func.func @transform_11(%arg0: i32) -> (i32, i32) {
    %c0_i32 = arith.constant 0 : i32
    %c0_i32_0 = arith.constant 0 : i32
    %c0_i32_1 = arith.constant 0 : i32
    return %c0_i32, %c0_i32_0 : i32, i32
  }
  func.func @transform_12(%arg0: i32) -> (i32, i32) {
    %c0_i32 = arith.constant 0 : i32
    %c0_i32_0 = arith.constant 0 : i32
    %c0_i32_1 = arith.constant 0 : i32
    return %c0_i32, %c0_i32_0 : i32, i32
  }
  func.func @transform_13(%arg0: i32) -> (i32, i32) {
    %c0_i32 = arith.constant 0 : i32
    %c0_i32_0 = arith.constant 0 : i32
    %c0_i32_1 = arith.constant 0 : i32
    return %c0_i32, %c0_i32_0 : i32, i32
  }
  func.func @transform_14(%arg0: i32) -> (i32, i32) {
    %c0_i32 = arith.constant 0 : i32
    %c0_i32_0 = arith.constant 0 : i32
    %c0_i32_1 = arith.constant 0 : i32
    return %c0_i32, %c0_i32_0 : i32, i32
  }
  func.func @transform_15(%arg0: i32) -> (i32, i32) {
    %c0_i32 = arith.constant 0 : i32
    %c0_i32_0 = arith.constant 0 : i32
    %c0_i32_1 = arith.constant 0 : i32
    return %c0_i32, %c0_i32_0 : i32, i32
  }
  func.func @transform_16(%arg0: i32) -> (i32, i32) {
    %c0_i32 = arith.constant 0 : i32
    %c0_i32_0 = arith.constant 0 : i32
    %c0_i32_1 = arith.constant 0 : i32
    return %c0_i32, %c0_i32_0 : i32, i32
  }
  func.func @transform_17(%arg0: i32) -> (i32, i32) {
    %c0_i32 = arith.constant 0 : i32
    %c0_i32_0 = arith.constant 0 : i32
    %c0_i32_1 = arith.constant 0 : i32
    return %c0_i32, %c0_i32_0 : i32, i32
  }
  func.func @transform_18(%arg0: i32) -> (i32, i32) {
    %c0_i32 = arith.constant 0 : i32
    %c0_i32_0 = arith.constant 0 : i32
    %c0_i32_1 = arith.constant 0 : i32
    return %c0_i32, %c0_i32_0 : i32, i32
  }
  func.func @transform_19(%arg0: i32) -> (i32, i32) {
    %c0_i32 = arith.constant 0 : i32
    %c0_i32_0 = arith.constant 0 : i32
    %c0_i32_1 = arith.constant 0 : i32
    return %c0_i32, %c0_i32_0 : i32, i32
  }
  func.func @transform_20(%arg0: i32) -> (i32, i32) {
    %c0_i32 = arith.constant 0 : i32
    %c0_i32_0 = arith.constant 0 : i32
    %c0_i32_1 = arith.constant 0 : i32
    return %c0_i32, %c0_i32_0 : i32, i32
  }
  func.func @transform_21(%arg0: i32) -> (i32, i32) {
    %c0_i32 = arith.constant 0 : i32
    %c0_i32_0 = arith.constant 0 : i32
    %c0_i32_1 = arith.constant 0 : i32
    return %c0_i32, %c0_i32_0 : i32, i32
  }
  func.func @transform_22(%arg0: i32) -> (i32, i32) {
    %c0_i32 = arith.constant 0 : i32
    %c0_i32_0 = arith.constant 0 : i32
    %c0_i32_1 = arith.constant 0 : i32
    return %c0_i32, %c0_i32_0 : i32, i32
  }
  func.func @transform_23(%arg0: i32) -> (i32, i32) {
    %c0_i32 = arith.constant 0 : i32
    %c0_i32_0 = arith.constant 0 : i32
    %c0_i32_1 = arith.constant 0 : i32
    return %c0_i32, %c0_i32_0 : i32, i32
  }
  func.func @transform_24(%arg0: i32) -> (i32, i32) {
    %c0_i32 = arith.constant 0 : i32
    %c0_i32_0 = arith.constant 0 : i32
    %c0_i32_1 = arith.constant 0 : i32
    return %c0_i32, %c0_i32_0 : i32, i32
  }
  func.func @transform_25(%arg0: i32) -> (i32, i32) {
    %c0_i32 = arith.constant 0 : i32
    %c0_i32_0 = arith.constant 0 : i32
    %c0_i32_1 = arith.constant 0 : i32
    return %c0_i32, %c0_i32_0 : i32, i32
  }
  func.func @transform_26(%arg0: i32) -> (i32, i32) {
    %c0_i32 = arith.constant 0 : i32
    %c0_i32_0 = arith.constant 0 : i32
    %c0_i32_1 = arith.constant 0 : i32
    return %c0_i32, %c0_i32_0 : i32, i32
  }
  func.func @transform_27(%arg0: i32) -> (i32, i32) {
    %c0_i32 = arith.constant 0 : i32
    %c0_i32_0 = arith.constant 0 : i32
    %c0_i32_1 = arith.constant 0 : i32
    return %c0_i32, %c0_i32_0 : i32, i32
  }
  func.func @transform_28(%arg0: i32) -> (i32, i32) {
    %c0_i32 = arith.constant 0 : i32
    %c0_i32_0 = arith.constant 0 : i32
    %c0_i32_1 = arith.constant 0 : i32
    return %c0_i32, %c0_i32_0 : i32, i32
  }
  func.func @transform_29(%arg0: i32) -> (i32, i32) {
    %c0_i32 = arith.constant 0 : i32
    %c0_i32_0 = arith.constant 0 : i32
    %c0_i32_1 = arith.constant 0 : i32
    return %c0_i32, %c0_i32_0 : i32, i32
  }
  func.func @transform_30(%arg0: i32) -> (i32, i32) {
    %c0_i32 = arith.constant 0 : i32
    %c0_i32_0 = arith.constant 0 : i32
    %c0_i32_1 = arith.constant 0 : i32
    return %c0_i32, %c0_i32_0 : i32, i32
  }
  func.func @transform_31(%arg0: i32) -> (i32, i32) {
    %c0_i32 = arith.constant 0 : i32
    %c0_i32_0 = arith.constant 0 : i32
    %c0_i32_1 = arith.constant 0 : i32
    return %c0_i32, %c0_i32_0 : i32, i32
  }
  func.func @transform_32(%arg0: i32) -> (i32, i32, i32) {
    %c0_i32 = arith.constant 0 : i32
    %c0_i32_0 = arith.constant 0 : i32
    %c0_i32_1 = arith.constant 0 : i32
    return %arg0, %c0_i32, %c0_i32_0 : i32, i32, i32
  }
}

</mosaic_0001>

<llo_original>
// kernel: bert_classifier_forward.1
$region0: #{bert_classifier_forward.1}
  #allocation0 [shape = 'u32[]', space=smem, size = 0x4, offset = 0x4, fixed_abs, tag = 'smem constant byte address 0x4 - core index']
  #allocation1 [shape = 'u32[144,128]{1,0:T(1,128)}', space=vmem, size = 0x12000, scoped, tag = 'internal scratch']
  %s0 = inlined_call_operand.smem [shape: u32[33], index: -1, kind: input, shape index: {}]
  %s1 = sld [smem:[%s0]]
  %s2 = scalar_lea.smem %s0, 1
  %s3 = sld [smem:[%s2]]
  %s4 = scalar_lea.smem %s0, 2
  %s5 = sld [smem:[%s4]]
  %s6 = scalar_lea.smem %s0, 3
  %s7 = sld [smem:[%s6]]
  %s8 = scalar_lea.smem %s0, 4
  %s9 = sld [smem:[%s8]]
  %s10 = scalar_lea.smem %s0, 5
  %s11 = sld [smem:[%s10]]
  %s12 = scalar_lea.smem %s0, 6
  %s13 = sld [smem:[%s12]]
  %s14 = scalar_lea.smem %s0, 7
  %s15 = sld [smem:[%s14]]
  %s16 = scalar_lea.smem %s0, 8
  %s17 = sld [smem:[%s16]]
  %s18 = scalar_lea.smem %s0, 9
  %s19 = sld [smem:[%s18]]
  %s20 = scalar_lea.smem %s0, 10
  %s21 = sld [smem:[%s20]]
  %s22 = scalar_lea.smem %s0, 11
  %s23 = sld [smem:[%s22]]
  %s24 = scalar_lea.smem %s0, 12
  %s25 = sld [smem:[%s24]]
  %s26 = scalar_lea.smem %s0, 13
  %s27 = sld [smem:[%s26]]
  %s28 = scalar_lea.smem %s0, 14
  %s29 = sld [smem:[%s28]]
  %s30 = scalar_lea.smem %s0, 15
  %s31 = sld [smem:[%s30]]
  %s32 = scalar_lea.smem %s0, 16
  %s33 = sld [smem:[%s32]]
  %s34 = scalar_lea.smem %s0, 17
  %s35 = sld [smem:[%s34]]
  %s36 = scalar_lea.smem %s0, 18
  %s37 = sld [smem:[%s36]]
  %s38 = scalar_lea.smem %s0, 19
  %s39 = sld [smem:[%s38]]
  %s40 = scalar_lea.smem %s0, 20
  %s41 = sld [smem:[%s40]]
  %s42 = scalar_lea.smem %s0, 21
  %s43 = sld [smem:[%s42]]
  %s44 = scalar_lea.smem %s0, 22
  %s45 = sld [smem:[%s44]]
  %s46 = scalar_lea.smem %s0, 23
  %s47 = sld [smem:[%s46]]
  %s48 = scalar_lea.smem %s0, 24
  %s49 = sld [smem:[%s48]]
  %s50 = scalar_lea.smem %s0, 25
  %s51 = sld [smem:[%s50]]
  %s52 = scalar_lea.smem %s0, 26
  %s53 = sld [smem:[%s52]]
  %s54 = scalar_lea.smem %s0, 27
  %s55 = sld [smem:[%s54]]
  %s56 = scalar_lea.smem %s0, 28
  %s57 = sld [smem:[%s56]]
  %s58 = scalar_lea.smem %s0, 29
  %s59 = sld [smem:[%s58]]
  %s60 = scalar_lea.smem %s0, 30
  %s61 = sld [smem:[%s60]]
  %s62 = scalar_lea.smem %s0, 31
  %s63 = sld [smem:[%s62]]
  %s64 = scalar_lea.smem %s0, 32
  %s65 = sld [smem:[%s64]]
  %s66 = sld [smem:[#allocation0]]
  $region161: #{bert_classifier_forward.1} parent=0
    _
  %s68 = ssub.s32 1, %s66
  %s69 = scalar_select 0, %s68, %s66
  loop: start=0, step=1, limit=4
  $region2: #{bert_classifier_forward.1} parent=0 // loop_pre_header
    _
  $region3: #{bert_classifier_forward.1} parent=0 // loop_header
    %s71 = sphi 0, %s75
    %p72 = scmp.ge.s32.totalorder %s71, 4
    %s81 = sphi 0, %s83
    %s84 = sphi 0, %s81
    %s85 = sphi 0, %s84
    %s101 = sphi 0, %s85
    %s107 = sphi 0, %s109
    %s110 = sphi 0, %s107
    %s111 = sphi 0, %s110
    %s127 = sphi 0, %s111
    %s131 = sphi 0, %s131
    %s133 = sphi 0, %s131
    %s134 = sphi 0, %s133
    %s148 = sphi 0, %s134
    %s152 = sphi 0, %s152
    %s154 = sphi 0, %s152
    %s155 = sphi 0, %s154
    %s169 = sphi 0, %s155
    %s173 = sphi 0, %s173
    %s175 = sphi 0, %s173
    %s176 = sphi 0, %s175
    %s190 = sphi 0, %s176
    %s194 = sphi 0, %s194
    %s196 = sphi 0, %s194
    %s197 = sphi 0, %s196
    %s211 = sphi 0, %s197
    %s215 = sphi 0, %s215
    %s217 = sphi 0, %s215
    %s218 = sphi 0, %s217
    %s232 = sphi 0, %s218
    %s236 = sphi 0, %s236
    %s238 = sphi 0, %s236
    %s239 = sphi 0, %s238
    %s253 = sphi 0, %s239
    %s257 = sphi 0, %s257
    %s259 = sphi 0, %s257
    %s260 = sphi 0, %s259
    %s274 = sphi 0, %s260
    %s278 = sphi 0, %s278
    %s280 = sphi 0, %s278
    %s281 = sphi 0, %s280
    %s295 = sphi 0, %s281
    %s299 = sphi 0, %s299
    %s301 = sphi 0, %s299
    %s302 = sphi 0, %s301
    %s316 = sphi 0, %s302
    %s320 = sphi 0, %s320
    %s322 = sphi 0, %s320
    %s323 = sphi 0, %s322
    %s337 = sphi 0, %s323
    %s341 = sphi 0, %s341
    %s343 = sphi 0, %s341
    %s344 = sphi 0, %s343
    %s358 = sphi 0, %s344
    %s362 = sphi 0, %s362
    %s364 = sphi 0, %s362
    %s365 = sphi 0, %s364
    %s379 = sphi 0, %s365
    %s383 = sphi 0, %s383
    %s385 = sphi 0, %s383
    %s386 = sphi 0, %s385
    %s400 = sphi 0, %s386
    %s404 = sphi 0, %s404
    %s406 = sphi 0, %s404
    %s407 = sphi 0, %s406
    %s421 = sphi 0, %s407
    %s425 = sphi 0, %s425
    %s427 = sphi 0, %s425
    %s428 = sphi 0, %s427
    %s442 = sphi 0, %s428
    %s446 = sphi 0, %s446
    %s448 = sphi 0, %s446
    %s449 = sphi 0, %s448
    %s463 = sphi 0, %s449
    %s467 = sphi 0, %s467
    %s469 = sphi 0, %s467
    %s470 = sphi 0, %s469
    %s484 = sphi 0, %s470
    %s488 = sphi 0, %s488
    %s490 = sphi 0, %s488
    %s491 = sphi 0, %s490
    %s505 = sphi 0, %s491
    %s509 = sphi 0, %s509
    %s511 = sphi 0, %s509
    %s512 = sphi 0, %s511
    %s526 = sphi 0, %s512
    %s530 = sphi 0, %s530
    %s532 = sphi 0, %s530
    %s533 = sphi 0, %s532
    %s547 = sphi 0, %s533
    %s551 = sphi 0, %s551
    %s553 = sphi 0, %s551
    %s554 = sphi 0, %s553
    %s568 = sphi 0, %s554
    %s572 = sphi 0, %s572
    %s574 = sphi 0, %s572
    %s575 = sphi 0, %s574
    %s589 = sphi 0, %s575
    %s593 = sphi 0, %s593
    %s595 = sphi 0, %s593
    %s596 = sphi 0, %s595
    %s610 = sphi 0, %s596
    %s614 = sphi 0, %s614
    %s616 = sphi 0, %s614
    %s617 = sphi 0, %s616
    %s631 = sphi 0, %s617
    %s635 = sphi 0, %s635
    %s637 = sphi 0, %s635
    %s638 = sphi 0, %s637
    %s652 = sphi 0, %s638
    %s656 = sphi 0, %s656
    %s658 = sphi 0, %s656
    %s659 = sphi 0, %s658
    %s673 = sphi 0, %s659
    %s677 = sphi 0, %s677
    %s679 = sphi 0, %s677
    %s680 = sphi 0, %s679
    %s694 = sphi 0, %s680
    %s698 = sphi 0, %s698
    %s700 = sphi 0, %s698
    %s701 = sphi 0, %s700
    %s715 = sphi 0, %s701
    %s719 = sphi 0, %s719
    %s721 = sphi 0, %s719
    %s722 = sphi 0, %s721
    %s736 = sphi 0, %s722
    %s740 = sphi 0, %s740
    %s742 = sphi 0, %s740
    %s743 = sphi 0, %s742
    %s757 = sphi 0, %s743
    %s763 = sphi 0, %s765
    %s766 = sphi 0, %s763
    %s767 = sphi 0, %s766
    %s783 = sphi 0, %s767
  $region4: #{bert_classifier_forward.1} parent=0 // loop_header_branch
    %74 = sbr.rel (%p72) target = $region8
  $region5: #{bert_classifier_forward.1} parent=0 // loop_body
    %s76 = ssub.s32 %s71, 1
    %s77 = ssub.s32 %s71, 2
    %s78 = sadd.s32 %s71, 1
    %s79 = ssub.s32 %s71, %s78
    %p80 = scmp.eq.s32.totalorder %s79, 0
    %s82 = sadd.s32 %s81, 1
    %s83 = scalar_select %p80, %s81, %s82
    %p86 = pneg %p80
    %p87 = scmp.eq.s32.totalorder %s71, 1
    %p88 = por %p86, %p87
    %p89 = scmp.ne.s32.totalorder %s81, %s84
    %p90 = scmp.eq.s32.totalorder %s71, 0
    %p91 = por %p89, %p90
    %p92 = scmp.ne.s32.totalorder %s81, %s84
    %p93 = scmp.eq.s32.totalorder %s76, 1
    %p94 = por %p92, %p93
    %p95 = scmp.ne.s32.totalorder %s84, %s85
    %p96 = scmp.eq.s32.totalorder %s76, 0
    %p97 = por %p95, %p96
    %p98 = scmp.ne.s32.totalorder %s84, %s85
    %p99 = scmp.eq.s32.totalorder %s77, 1
    %p100 = por %p98, %p99
    %p102 = scmp.ne.s32.totalorder %s85, %s101
    %p103 = scmp.eq.s32.totalorder %s77, 0
    %p104 = por %p102, %p103
    %s105 = ssub.s32 %s71, %s78
    %p106 = scmp.eq.s32.totalorder %s105, 0
    %s108 = sadd.s32 %s107, 1
    %s109 = scalar_select %p106, %s107, %s108
    %p112 = pneg %p106
    %p113 = scmp.eq.s32.totalorder %s71, 1
    %p114 = por %p112, %p113
    %p115 = scmp.ne.s32.totalorder %s107, %s110
    %p116 = scmp.eq.s32.totalorder %s71, 0
    %p117 = por %p115, %p116
    %p118 = scmp.ne.s32.totalorder %s107, %s110
    %p119 = scmp.eq.s32.totalorder %s76, 1
    %p120 = por %p118, %p119
    %p121 = scmp.ne.s32.totalorder %s110, %s111
    %p122 = scmp.eq.s32.totalorder %s76, 0
    %p123 = por %p121, %p122
    %p124 = scmp.ne.s32.totalorder %s110, %s111
    %p125 = scmp.eq.s32.totalorder %s77, 1
    %p126 = por %p124, %p125
    %p128 = scmp.ne.s32.totalorder %s111, %s127
    %p129 = scmp.eq.s32.totalorder %s77, 0
    %p130 = por %p128, %p129
    %s132 = sadd.s32 %s131, 1
    %p135 = scmp.eq.s32.totalorder %s71, 1
    %p136 = scmp.ne.s32.totalorder %s131, %s133
    %p137 = scmp.eq.s32.totalorder %s71, 0
    %p138 = por %p136, %p137
    %p139 = scmp.ne.s32.totalorder %s131, %s133
    %p140 = scmp.eq.s32.totalorder %s76, 1
    %p141 = por %p139, %p140
    %p142 = scmp.ne.s32.totalorder %s133, %s134
    %p143 = scmp.eq.s32.totalorder %s76, 0
    %p144 = por %p142, %p143
    %p145 = scmp.ne.s32.totalorder %s133, %s134
    %p146 = scmp.eq.s32.totalorder %s77, 1
    %p147 = por %p145, %p146
    %p149 = scmp.ne.s32.totalorder %s134, %s148
    %p150 = scmp.eq.s32.totalorder %s77, 0
    %p151 = por %p149, %p150
    %s153 = sadd.s32 %s152, 1
    %p156 = scmp.eq.s32.totalorder %s71, 1
    %p157 = scmp.ne.s32.totalorder %s152, %s154
    %p158 = scmp.eq.s32.totalorder %s71, 0
    %p159 = por %p157, %p158
    %p160 = scmp.ne.s32.totalorder %s152, %s154
    %p161 = scmp.eq.s32.totalorder %s76, 1
    %p162 = por %p160, %p161
    %p163 = scmp.ne.s32.totalorder %s154, %s155
    %p164 = scmp.eq.s32.totalorder %s76, 0
    %p165 = por %p163, %p164
    %p166 = scmp.ne.s32.totalorder %s154, %s155
    %p167 = scmp.eq.s32.totalorder %s77, 1
    %p168 = por %p166, %p167
    %p170 = scmp.ne.s32.totalorder %s155, %s169
    %p171 = scmp.eq.s32.totalorder %s77, 0
    %p172 = por %p170, %p171
    %s174 = sadd.s32 %s173, 1
    %p177 = scmp.eq.s32.totalorder %s71, 1
    %p178 = scmp.ne.s32.totalorder %s173, %s175
    %p179 = scmp.eq.s32.totalorder %s71, 0
    %p180 = por %p178, %p179
    %p181 = scmp.ne.s32.totalorder %s173, %s175
    %p182 = scmp.eq.s32.totalorder %s76, 1
    %p183 = por %p181, %p182
    %p184 = scmp.ne.s32.totalorder %s175, %s176
    %p185 = scmp.eq.s32.totalorder %s76, 0
    %p186 = por %p184, %p185
    %p187 = scmp.ne.s32.totalorder %s175, %s176
    %p188 = scmp.eq.s32.totalorder %s77, 1
    %p189 = por %p187, %p188
    %p191 = scmp.ne.s32.totalorder %s176, %s190
    %p192 = scmp.eq.s32.totalorder %s77, 0
    %p193 = por %p191, %p192
    %s195 = sadd.s32 %s194, 1
    %p198 = scmp.eq.s32.totalorder %s71, 1
    %p199 = scmp.ne.s32.totalorder %s194, %s196
    %p200 = scmp.eq.s32.totalorder %s71, 0
    %p201 = por %p199, %p200
    %p202 = scmp.ne.s32.totalorder %s194, %s196
    %p203 = scmp.eq.s32.totalorder %s76, 1
    %p204 = por %p202, %p203
    %p205 = scmp.ne.s32.totalorder %s196, %s197
    %p206 = scmp.eq.s32.totalorder %s76, 0
    %p207 = por %p205, %p206
    %p208 = scmp.ne.s32.totalorder %s196, %s197
    %p209 = scmp.eq.s32.totalorder %s77, 1
    %p210 = por %p208, %p209
    %p212 = scmp.ne.s32.totalorder %s197, %s211
    %p213 = scmp.eq.s32.totalorder %s77, 0
    %p214 = por %p212, %p213
    %s216 = sadd.s32 %s215, 1
    %p219 = scmp.eq.s32.totalorder %s71, 1
    %p220 = scmp.ne.s32.totalorder %s215, %s217
    %p221 = scmp.eq.s32.totalorder %s71, 0
    %p222 = por %p220, %p221
    %p223 = scmp.ne.s32.totalorder %s215, %s217
    %p224 = scmp.eq.s32.totalorder %s76, 1
    %p225 = por %p223, %p224
    %p226 = scmp.ne.s32.totalorder %s217, %s218
    %p227 = scmp.eq.s32.totalorder %s76, 0
    %p228 = por %p226, %p227
    %p229 = scmp.ne.s32.totalorder %s217, %s218
    %p230 = scmp.eq.s32.totalorder %s77, 1
    %p231 = por %p229, %p230
    %p233 = scmp.ne.s32.totalorder %s218, %s232
    %p234 = scmp.eq.s32.totalorder %s77, 0
    %p235 = por %p233, %p234
    %s237 = sadd.s32 %s236, 1
    %p240 = scmp.eq.s32.totalorder %s71, 1
    %p241 = scmp.ne.s32.totalorder %s236, %s238
    %p242 = scmp.eq.s32.totalorder %s71, 0
    %p243 = por %p241, %p242
    %p244 = scmp.ne.s32.totalorder %s236, %s238
    %p245 = scmp.eq.s32.totalorder %s76, 1
    %p246 = por %p244, %p245
    %p247 = scmp.ne.s32.totalorder %s238, %s239
    %p248 = scmp.eq.s32.totalorder %s76, 0
    %p249 = por %p247, %p248
    %p250 = scmp.ne.s32.totalorder %s238, %s239
    %p251 = scmp.eq.s32.totalorder %s77, 1
    %p252 = por %p250, %p251
    %p254 = scmp.ne.s32.totalorder %s239, %s253
    %p255 = scmp.eq.s32.totalorder %s77, 0
    %p256 = por %p254, %p255
    %s258 = sadd.s32 %s257, 1
    %p261 = scmp.eq.s32.totalorder %s71, 1
    %p262 = scmp.ne.s32.totalorder %s257, %s259
    %p263 = scmp.eq.s32.totalorder %s71, 0
    %p264 = por %p262, %p263
    %p265 = scmp.ne.s32.totalorder %s257, %s259
    %p266 = scmp.eq.s32.totalorder %s76, 1
    %p267 = por %p265, %p266
    %p268 = scmp.ne.s32.totalorder %s259, %s260
    %p269 = scmp.eq.s32.totalorder %s76, 0
    %p270 = por %p268, %p269
    %p271 = scmp.ne.s32.totalorder %s259, %s260
    %p272 = scmp.eq.s32.totalorder %s77, 1
    %p273 = por %p271, %p272
    %p275 = scmp.ne.s32.totalorder %s260, %s274
    %p276 = scmp.eq.s32.totalorder %s77, 0
    %p277 = por %p275, %p276
    %s279 = sadd.s32 %s278, 1
    %p282 = scmp.eq.s32.totalorder %s71, 1
    %p283 = scmp.ne.s32.totalorder %s278, %s280
    %p284 = scmp.eq.s32.totalorder %s71, 0
    %p285 = por %p283, %p284
    %p286 = scmp.ne.s32.totalorder %s278, %s280
    %p287 = scmp.eq.s32.totalorder %s76, 1
    %p288 = por %p286, %p287
    %p289 = scmp.ne.s32.totalorder %s280, %s281
    %p290 = scmp.eq.s32.totalorder %s76, 0
    %p291 = por %p289, %p290
    %p292 = scmp.ne.s32.totalorder %s280, %s281
    %p293 = scmp.eq.s32.totalorder %s77, 1
    %p294 = por %p292, %p293
    %p296 = scmp.ne.s32.totalorder %s281, %s295
    %p297 = scmp.eq.s32.totalorder %s77, 0
    %p298 = por %p296, %p297
    %s300 = sadd.s32 %s299, 1
    %p303 = scmp.eq.s32.totalorder %s71, 1
    %p304 = scmp.ne.s32.totalorder %s299, %s301
    %p305 = scmp.eq.s32.totalorder %s71, 0
    %p306 = por %p304, %p305
    %p307 = scmp.ne.s32.totalorder %s299, %s301
    %p308 = scmp.eq.s32.totalorder %s76, 1
    %p309 = por %p307, %p308
    %p310 = scmp.ne.s32.totalorder %s301, %s302
    %p311 = scmp.eq.s32.totalorder %s76, 0
    %p312 = por %p310, %p311
    %p313 = scmp.ne.s32.totalorder %s301, %s302
    %p314 = scmp.eq.s32.totalorder %s77, 1
    %p315 = por %p313, %p314
    %p317 = scmp.ne.s32.totalorder %s302, %s316
    %p318 = scmp.eq.s32.totalorder %s77, 0
    %p319 = por %p317, %p318
    %s321 = sadd.s32 %s320, 1
    %p324 = scmp.eq.s32.totalorder %s71, 1
    %p325 = scmp.ne.s32.totalorder %s320, %s322
    %p326 = scmp.eq.s32.totalorder %s71, 0
    %p327 = por %p325, %p326
    %p328 = scmp.ne.s32.totalorder %s320, %s322
    %p329 = scmp.eq.s32.totalorder %s76, 1
    %p330 = por %p328, %p329
    %p331 = scmp.ne.s32.totalorder %s322, %s323
    %p332 = scmp.eq.s32.totalorder %s76, 0
    %p333 = por %p331, %p332
    %p334 = scmp.ne.s32.totalorder %s322, %s323
    %p335 = scmp.eq.s32.totalorder %s77, 1
    %p336 = por %p334, %p335
    %p338 = scmp.ne.s32.totalorder %s323, %s337
    %p339 = scmp.eq.s32.totalorder %s77, 0
    %p340 = por %p338, %p339
    %s342 = sadd.s32 %s341, 1
    %p345 = scmp.eq.s32.totalorder %s71, 1
    %p346 = scmp.ne.s32.totalorder %s341, %s343
    %p347 = scmp.eq.s32.totalorder %s71, 0
    %p348 = por %p346, %p347
    %p349 = scmp.ne.s32.totalorder %s341, %s343
    %p350 = scmp.eq.s32.totalorder %s76, 1
    %p351 = por %p349, %p350
    %p352 = scmp.ne.s32.totalorder %s343, %s344
    %p353 = scmp.eq.s32.totalorder %s76, 0
    %p354 = por %p352, %p353
    %p355 = scmp.ne.s32.totalorder %s343, %s344
    %p356 = scmp.eq.s32.totalorder %s77, 1
    %p357 = por %p355, %p356
    %p359 = scmp.ne.s32.totalorder %s344, %s358
    %p360 = scmp.eq.s32.totalorder %s77, 0
    %p361 = por %p359, %p360
    %s363 = sadd.s32 %s362, 1
    %p366 = scmp.eq.s32.totalorder %s71, 1
    %p367 = scmp.ne.s32.totalorder %s362, %s364
    %p368 = scmp.eq.s32.totalorder %s71, 0
    %p369 = por %p367, %p368
    %p370 = scmp.ne.s32.totalorder %s362, %s364
    %p371 = scmp.eq.s32.totalorder %s76, 1
    %p372 = por %p370, %p371
    %p373 = scmp.ne.s32.totalorder %s364, %s365
    %p374 = scmp.eq.s32.totalorder %s76, 0
    %p375 = por %p373, %p374
    %p376 = scmp.ne.s32.totalorder %s364, %s365
    %p377 = scmp.eq.s32.totalorder %s77, 1
    %p378 = por %p376, %p377
    %p380 = scmp.ne.s32.totalorder %s365, %s379
    %p381 = scmp.eq.s32.totalorder %s77, 0
    %p382 = por %p380, %p381
    %s384 = sadd.s32 %s383, 1
    %p387 = scmp.eq.s32.totalorder %s71, 1
    %p388 = scmp.ne.s32.totalorder %s383, %s385
    %p389 = scmp.eq.s32.totalorder %s71, 0
    %p390 = por %p388, %p389
    %p391 = scmp.ne.s32.totalorder %s383, %s385
    %p392 = scmp.eq.s32.totalorder %s76, 1
    %p393 = por %p391, %p392
    %p394 = scmp.ne.s32.totalorder %s385, %s386
    %p395 = scmp.eq.s32.totalorder %s76, 0
    %p396 = por %p394, %p395
    %p397 = scmp.ne.s32.totalorder %s385, %s386
    %p398 = scmp.eq.s32.totalorder %s77, 1
    %p399 = por %p397, %p398
    %p401 = scmp.ne.s32.totalorder %s386, %s400
    %p402 = scmp.eq.s32.totalorder %s77, 0
    %p403 = por %p401, %p402
    %s405 = sadd.s32 %s404, 1
    %p408 = scmp.eq.s32.totalorder %s71, 1
    %p409 = scmp.ne.s32.totalorder %s404, %s406
    %p410 = scmp.eq.s32.totalorder %s71, 0
    %p411 = por %p409, %p410
    %p412 = scmp.ne.s32.totalorder %s404, %s406
    %p413 = scmp.eq.s32.totalorder %s76, 1
    %p414 = por %p412, %p413
    %p415 = scmp.ne.s32.totalorder %s406, %s407
    %p416 = scmp.eq.s32.totalorder %s76, 0
    %p417 = por %p415, %p416
    %p418 = scmp.ne.s32.totalorder %s406, %s407
    %p419 = scmp.eq.s32.totalorder %s77, 1
    %p420 = por %p418, %p419
    %p422 = scmp.ne.s32.totalorder %s407, %s421
    %p423 = scmp.eq.s32.totalorder %s77, 0
    %p424 = por %p422, %p423
    %s426 = sadd.s32 %s425, 1
    %p429 = scmp.eq.s32.totalorder %s71, 1
    %p430 = scmp.ne.s32.totalorder %s425, %s427
    %p431 = scmp.eq.s32.totalorder %s71, 0
    %p432 = por %p430, %p431
    %p433 = scmp.ne.s32.totalorder %s425, %s427
    %p434 = scmp.eq.s32.totalorder %s76, 1
    %p435 = por %p433, %p434
    %p436 = scmp.ne.s32.totalorder %s427, %s428
    %p437 = scmp.eq.s32.totalorder %s76, 0
    %p438 = por %p436, %p437
    %p439 = scmp.ne.s32.totalorder %s427, %s428
    %p440 = scmp.eq.s32.totalorder %s77, 1
    %p441 = por %p439, %p440
    %p443 = scmp.ne.s32.totalorder %s428, %s442
    %p444 = scmp.eq.s32.totalorder %s77, 0
    %p445 = por %p443, %p444
    %s447 = sadd.s32 %s446, 1
    %p450 = scmp.eq.s32.totalorder %s71, 1
    %p451 = scmp.ne.s32.totalorder %s446, %s448
    %p452 = scmp.eq.s32.totalorder %s71, 0
    %p453 = por %p451, %p452
    %p454 = scmp.ne.s32.totalorder %s446, %s448
    %p455 = scmp.eq.s32.totalorder %s76, 1
    %p456 = por %p454, %p455
    %p457 = scmp.ne.s32.totalorder %s448, %s449
    %p458 = scmp.eq.s32.totalorder %s76, 0
    %p459 = por %p457, %p458
    %p460 = scmp.ne.s32.totalorder %s448, %s449
    %p461 = scmp.eq.s32.totalorder %s77, 1
    %p462 = por %p460, %p461
    %p464 = scmp.ne.s32.totalorder %s449, %s463
    %p465 = scmp.eq.s32.totalorder %s77, 0
    %p466 = por %p464, %p465
    %s468 = sadd.s32 %s467, 1
    %p471 = scmp.eq.s32.totalorder %s71, 1
    %p472 = scmp.ne.s32.totalorder %s467, %s469
    %p473 = scmp.eq.s32.totalorder %s71, 0
    %p474 = por %p472, %p473
    %p475 = scmp.ne.s32.totalorder %s467, %s469
    %p476 = scmp.eq.s32.totalorder %s76, 1
    %p477 = por %p475, %p476
    %p478 = scmp.ne.s32.totalorder %s469, %s470
    %p479 = scmp.eq.s32.totalorder %s76, 0
    %p480 = por %p478, %p479
    %p481 = scmp.ne.s32.totalorder %s469, %s470
    %p482 = scmp.eq.s32.totalorder %s77, 1
    %p483 = por %p481, %p482
    %p485 = scmp.ne.s32.totalorder %s470, %s484
    %p486 = scmp.eq.s32.totalorder %s77, 0
    %p487 = por %p485, %p486
    %s489 = sadd.s32 %s488, 1
    %p492 = scmp.eq.s32.totalorder %s71, 1
    %p493 = scmp.ne.s32.totalorder %s488, %s490
    %p494 = scmp.eq.s32.totalorder %s71, 0
    %p495 = por %p493, %p494
    %p496 = scmp.ne.s32.totalorder %s488, %s490
    %p497 = scmp.eq.s32.totalorder %s76, 1
    %p498 = por %p496, %p497
    %p499 = scmp.ne.s32.totalorder %s490, %s491
    %p500 = scmp.eq.s32.totalorder %s76, 0
    %p501 = por %p499, %p500
    %p502 = scmp.ne.s32.totalorder %s490, %s491
    %p503 = scmp.eq.s32.totalorder %s77, 1
    %p504 = por %p502, %p503
    %p506 = scmp.ne.s32.totalorder %s491, %s505
    %p507 = scmp.eq.s32.totalorder %s77, 0
    %p508 = por %p506, %p507
    %s510 = sadd.s32 %s509, 1
    %p513 = scmp.eq.s32.totalorder %s71, 1
    %p514 = scmp.ne.s32.totalorder %s509, %s511
    %p515 = scmp.eq.s32.totalorder %s71, 0
    %p516 = por %p514, %p515
    %p517 = scmp.ne.s32.totalorder %s509, %s511
    %p518 = scmp.eq.s32.totalorder %s76, 1
    %p519 = por %p517, %p518
    %p520 = scmp.ne.s32.totalorder %s511, %s512
    %p521 = scmp.eq.s32.totalorder %s76, 0
    %p522 = por %p520, %p521
    %p523 = scmp.ne.s32.totalorder %s511, %s512
    %p524 = scmp.eq.s32.totalorder %s77, 1
    %p525 = por %p523, %p524
    %p527 = scmp.ne.s32.totalorder %s512, %s526
    %p528 = scmp.eq.s32.totalorder %s77, 0
    %p529 = por %p527, %p528
    %s531 = sadd.s32 %s530, 1
    %p534 = scmp.eq.s32.totalorder %s71, 1
    %p535 = scmp.ne.s32.totalorder %s530, %s532
    %p536 = scmp.eq.s32.totalorder %s71, 0
    %p537 = por %p535, %p536
    %p538 = scmp.ne.s32.totalorder %s530, %s532
    %p539 = scmp.eq.s32.totalorder %s76, 1
    %p540 = por %p538, %p539
    %p541 = scmp.ne.s32.totalorder %s532, %s533
    %p542 = scmp.eq.s32.totalorder %s76, 0
    %p543 = por %p541, %p542
    %p544 = scmp.ne.s32.totalorder %s532, %s533
    %p545 = scmp.eq.s32.totalorder %s77, 1
    %p546 = por %p544, %p545
    %p548 = scmp.ne.s32.totalorder %s533, %s547
    %p549 = scmp.eq.s32.totalorder %s77, 0
    %p550 = por %p548, %p549
    %s552 = sadd.s32 %s551, 1
    %p555 = scmp.eq.s32.totalorder %s71, 1
    %p556 = scmp.ne.s32.totalorder %s551, %s553
    %p557 = scmp.eq.s32.totalorder %s71, 0
    %p558 = por %p556, %p557
    %p559 = scmp.ne.s32.totalorder %s551, %s553
    %p560 = scmp.eq.s32.totalorder %s76, 1
    %p561 = por %p559, %p560
    %p562 = scmp.ne.s32.totalorder %s553, %s554
    %p563 = scmp.eq.s32.totalorder %s76, 0
    %p564 = por %p562, %p563
    %p565 = scmp.ne.s32.totalorder %s553, %s554
    %p566 = scmp.eq.s32.totalorder %s77, 1
    %p567 = por %p565, %p566
    %p569 = scmp.ne.s32.totalorder %s554, %s568
    %p570 = scmp.eq.s32.totalorder %s77, 0
    %p571 = por %p569, %p570
    %s573 = sadd.s32 %s572, 1
    %p576 = scmp.eq.s32.totalorder %s71, 1
    %p577 = scmp.ne.s32.totalorder %s572, %s574
    %p578 = scmp.eq.s32.totalorder %s71, 0
    %p579 = por %p577, %p578
    %p580 = scmp.ne.s32.totalorder %s572, %s574
    %p581 = scmp.eq.s32.totalorder %s76, 1
    %p582 = por %p580, %p581
    %p583 = scmp.ne.s32.totalorder %s574, %s575
    %p584 = scmp.eq.s32.totalorder %s76, 0
    %p585 = por %p583, %p584
    %p586 = scmp.ne.s32.totalorder %s574, %s575
    %p587 = scmp.eq.s32.totalorder %s77, 1
    %p588 = por %p586, %p587
    %p590 = scmp.ne.s32.totalorder %s575, %s589
    %p591 = scmp.eq.s32.totalorder %s77, 0
    %p592 = por %p590, %p591
    %s594 = sadd.s32 %s593, 1
    %p597 = scmp.eq.s32.totalorder %s71, 1
    %p598 = scmp.ne.s32.totalorder %s593, %s595
    %p599 = scmp.eq.s32.totalorder %s71, 0
    %p600 = por %p598, %p599
    %p601 = scmp.ne.s32.totalorder %s593, %s595
    %p602 = scmp.eq.s32.totalorder %s76, 1
    %p603 = por %p601, %p602
    %p604 = scmp.ne.s32.totalorder %s595, %s596
    %p605 = scmp.eq.s32.totalorder %s76, 0
    %p606 = por %p604, %p605
    %p607 = scmp.ne.s32.totalorder %s595, %s596
    %p608 = scmp.eq.s32.totalorder %s77, 1
    %p609 = por %p607, %p608
    %p611 = scmp.ne.s32.totalorder %s596, %s610
    %p612 = scmp.eq.s32.totalorder %s77, 0
    %p613 = por %p611, %p612
    %s615 = sadd.s32 %s614, 1
    %p618 = scmp.eq.s32.totalorder %s71, 1
    %p619 = scmp.ne.s32.totalorder %s614, %s616
    %p620 = scmp.eq.s32.totalorder %s71, 0
    %p621 = por %p619, %p620
    %p622 = scmp.ne.s32.totalorder %s614, %s616
    %p623 = scmp.eq.s32.totalorder %s76, 1
    %p624 = por %p622, %p623
    %p625 = scmp.ne.s32.totalorder %s616, %s617
    %p626 = scmp.eq.s32.totalorder %s76, 0
    %p627 = por %p625, %p626
    %p628 = scmp.ne.s32.totalorder %s616, %s617
    %p629 = scmp.eq.s32.totalorder %s77, 1
    %p630 = por %p628, %p629
    %p632 = scmp.ne.s32.totalorder %s617, %s631
    %p633 = scmp.eq.s32.totalorder %s77, 0
    %p634 = por %p632, %p633
    %s636 = sadd.s32 %s635, 1
    %p639 = scmp.eq.s32.totalorder %s71, 1
    %p640 = scmp.ne.s32.totalorder %s635, %s637
    %p641 = scmp.eq.s32.totalorder %s71, 0
    %p642 = por %p640, %p641
    %p643 = scmp.ne.s32.totalorder %s635, %s637
    %p644 = scmp.eq.s32.totalorder %s76, 1
    %p645 = por %p643, %p644
    %p646 = scmp.ne.s32.totalorder %s637, %s638
    %p647 = scmp.eq.s32.totalorder %s76, 0
    %p648 = por %p646, %p647
    %p649 = scmp.ne.s32.totalorder %s637, %s638
    %p650 = scmp.eq.s32.totalorder %s77, 1
    %p651 = por %p649, %p650
    %p653 = scmp.ne.s32.totalorder %s638, %s652
    %p654 = scmp.eq.s32.totalorder %s77, 0
    %p655 = por %p653, %p654
    %s657 = sadd.s32 %s656, 1
    %p660 = scmp.eq.s32.totalorder %s71, 1
    %p661 = scmp.ne.s32.totalorder %s656, %s658
    %p662 = scmp.eq.s32.totalorder %s71, 0
    %p663 = por %p661, %p662
    %p664 = scmp.ne.s32.totalorder %s656, %s658
    %p665 = scmp.eq.s32.totalorder %s76, 1
    %p666 = por %p664, %p665
    %p667 = scmp.ne.s32.totalorder %s658, %s659
    %p668 = scmp.eq.s32.totalorder %s76, 0
    %p669 = por %p667, %p668
    %p670 = scmp.ne.s32.totalorder %s658, %s659
    %p671 = scmp.eq.s32.totalorder %s77, 1
    %p672 = por %p670, %p671
    %p674 = scmp.ne.s32.totalorder %s659, %s673
    %p675 = scmp.eq.s32.totalorder %s77, 0
    %p676 = por %p674, %p675
    %s678 = sadd.s32 %s677, 1
    %p681 = scmp.eq.s32.totalorder %s71, 1
    %p682 = scmp.ne.s32.totalorder %s677, %s679
    %p683 = scmp.eq.s32.totalorder %s71, 0
    %p684 = por %p682, %p683
    %p685 = scmp.ne.s32.totalorder %s677, %s679
    %p686 = scmp.eq.s32.totalorder %s76, 1
    %p687 = por %p685, %p686
    %p688 = scmp.ne.s32.totalorder %s679, %s680
    %p689 = scmp.eq.s32.totalorder %s76, 0
    %p690 = por %p688, %p689
    %p691 = scmp.ne.s32.totalorder %s679, %s680
    %p692 = scmp.eq.s32.totalorder %s77, 1
    %p693 = por %p691, %p692
    %p695 = scmp.ne.s32.totalorder %s680, %s694
    %p696 = scmp.eq.s32.totalorder %s77, 0
    %p697 = por %p695, %p696
    %s699 = sadd.s32 %s698, 1
    %p702 = scmp.eq.s32.totalorder %s71, 1
    %p703 = scmp.ne.s32.totalorder %s698, %s700
    %p704 = scmp.eq.s32.totalorder %s71, 0
    %p705 = por %p703, %p704
    %p706 = scmp.ne.s32.totalorder %s698, %s700
    %p707 = scmp.eq.s32.totalorder %s76, 1
    %p708 = por %p706, %p707
    %p709 = scmp.ne.s32.totalorder %s700, %s701
    %p710 = scmp.eq.s32.totalorder %s76, 0
    %p711 = por %p709, %p710
    %p712 = scmp.ne.s32.totalorder %s700, %s701
    %p713 = scmp.eq.s32.totalorder %s77, 1
    %p714 = por %p712, %p713
    %p716 = scmp.ne.s32.totalorder %s701, %s715
    %p717 = scmp.eq.s32.totalorder %s77, 0
    %p718 = por %p716, %p717
    %s720 = sadd.s32 %s719, 1
    %p723 = scmp.eq.s32.totalorder %s71, 1
    %p724 = scmp.ne.s32.totalorder %s719, %s721
    %p725 = scmp.eq.s32.totalorder %s71, 0
    %p726 = por %p724, %p725
    %p727 = scmp.ne.s32.totalorder %s719, %s721
    %p728 = scmp.eq.s32.totalorder %s76, 1
    %p729 = por %p727, %p728
    %p730 = scmp.ne.s32.totalorder %s721, %s722
    %p731 = scmp.eq.s32.totalorder %s76, 0
    %p732 = por %p730, %p731
    %p733 = scmp.ne.s32.totalorder %s721, %s722
    %p734 = scmp.eq.s32.totalorder %s77, 1
    %p735 = por %p733, %p734
    %p737 = scmp.ne.s32.totalorder %s722, %s736
    %p738 = scmp.eq.s32.totalorder %s77, 0
    %p739 = por %p737, %p738
    %s741 = sadd.s32 %s740, 1
    %p744 = scmp.eq.s32.totalorder %s71, 1
    %p745 = scmp.ne.s32.totalorder %s740, %s742
    %p746 = scmp.eq.s32.totalorder %s71, 0
    %p747 = por %p745, %p746
    %p748 = scmp.ne.s32.totalorder %s740, %s742
    %p749 = scmp.eq.s32.totalorder %s76, 1
    %p750 = por %p748, %p749
    %p751 = scmp.ne.s32.totalorder %s742, %s743
    %p752 = scmp.eq.s32.totalorder %s76, 0
    %p753 = por %p751, %p752
    %p754 = scmp.ne.s32.totalorder %s742, %s743
    %p755 = scmp.eq.s32.totalorder %s77, 1
    %p756 = por %p754, %p755
    %p758 = scmp.ne.s32.totalorder %s743, %s757
    %p759 = scmp.eq.s32.totalorder %s77, 0
    %p760 = por %p758, %p759
    %s761 = ssub.s32 %s71, %s78
    %p762 = scmp.eq.s32.totalorder %s761, 0
    %s764 = sadd.s32 %s763, 1
    %s765 = scalar_select %p762, %s763, %s764
    %p768 = pneg %p762
    %p769 = scmp.eq.s32.totalorder %s71, 1
    %p770 = por %p768, %p769
    %p771 = scmp.ne.s32.totalorder %s763, %s766
    %p772 = scmp.eq.s32.totalorder %s71, 0
    %p773 = por %p771, %p772
    %p774 = scmp.ne.s32.totalorder %s763, %s766
    %p775 = scmp.eq.s32.totalorder %s76, 1
    %p776 = por %p774, %p775
    %p777 = scmp.ne.s32.totalorder %s766, %s767
    %p778 = scmp.eq.s32.totalorder %s76, 0
    %p779 = por %p777, %p778
    %p780 = scmp.ne.s32.totalorder %s766, %s767
    %p781 = scmp.eq.s32.totalorder %s77, 1
    %p782 = por %p780, %p781
    %p784 = scmp.ne.s32.totalorder %s767, %s783
    %p785 = scmp.eq.s32.totalorder %s77, 0
    %p786 = por %p784, %p785
    %p787 = scmp.le.s32.totalorder 1, %s71
    %p788 = scmp.lt.s32.totalorder %s71, 3
    %p789 = pnand %p787, %p788
    %p790 = pneg %p789
    // Predicated region
    $region9: #{bert_classifier_forward.1} parent=5 // pred_check
      _
    $region10: #{bert_classifier_forward.1} parent=5 // pred_check_branch
      %792 = sbr.rel (%p789) target = $region12
    $region11: #{bert_classifier_forward.1} parent=5 // pred_region
      %s793 = ssub.s32 %s71, 1
      // Predicated region
      $region13: #{bert_classifier_forward.1} parent=11 // pred_check
        %p794 = pneg %p144
      $region14: #{bert_classifier_forward.1} parent=11 // pred_check_branch
        %796 = sbr.rel (%p794) target = $region16
      $region15: #{bert_classifier_forward.1} parent=11 // pred_region
        _
      $region16: #{bert_classifier_forward.1} parent=11 // pred_fallthru
        _
      // Predicated region
      $region17: #{bert_classifier_forward.1} parent=11 // pred_check
        %p797 = pneg %p165
      $region18: #{bert_classifier_forward.1} parent=11 // pred_check_branch
        %799 = sbr.rel (%p797) target = $region20
      $region19: #{bert_classifier_forward.1} parent=11 // pred_region
        _
      $region20: #{bert_classifier_forward.1} parent=11 // pred_fallthru
        _
      // Predicated region
      $region21: #{bert_classifier_forward.1} parent=11 // pred_check
        %p800 = pneg %p186
      $region22: #{bert_classifier_forward.1} parent=11 // pred_check_branch
        %802 = sbr.rel (%p800) target = $region24
      $region23: #{bert_classifier_forward.1} parent=11 // pred_region
        _
      $region24: #{bert_classifier_forward.1} parent=11 // pred_fallthru
        _
      // Predicated region
      $region25: #{bert_classifier_forward.1} parent=11 // pred_check
        %p803 = pneg %p207
      $region26: #{bert_classifier_forward.1} parent=11 // pred_check_branch
        %805 = sbr.rel (%p803) target = $region28
      $region27: #{bert_classifier_forward.1} parent=11 // pred_region
        _
      $region28: #{bert_classifier_forward.1} parent=11 // pred_fallthru
        _
      // Predicated region
      $region29: #{bert_classifier_forward.1} parent=11 // pred_check
        %p806 = pneg %p228
      $region30: #{bert_classifier_forward.1} parent=11 // pred_check_branch
        %808 = sbr.rel (%p806) target = $region32
      $region31: #{bert_classifier_forward.1} parent=11 // pred_region
        _
      $region32: #{bert_classifier_forward.1} parent=11 // pred_fallthru
        _
      // Predicated region
      $region33: #{bert_classifier_forward.1} parent=11 // pred_check
        %p809 = pneg %p249
      $region34: #{bert_classifier_forward.1} parent=11 // pred_check_branch
        %811 = sbr.rel (%p809) target = $region36
      $region35: #{bert_classifier_forward.1} parent=11 // pred_region
        _
      $region36: #{bert_classifier_forward.1} parent=11 // pred_fallthru
        _
      // Predicated region
      $region37: #{bert_classifier_forward.1} parent=11 // pred_check
        %p812 = pneg %p270
      $region38: #{bert_classifier_forward.1} parent=11 // pred_check_branch
        %814 = sbr.rel (%p812) target = $region40
      $region39: #{bert_classifier_forward.1} parent=11 // pred_region
        _
      $region40: #{bert_classifier_forward.1} parent=11 // pred_fallthru
        _
      // Predicated region
      $region41: #{bert_classifier_forward.1} parent=11 // pred_check
        %p815 = pneg %p291
      $region42: #{bert_classifier_forward.1} parent=11 // pred_check_branch
        %817 = sbr.rel (%p815) target = $region44
      $region43: #{bert_classifier_forward.1} parent=11 // pred_region
        _
      $region44: #{bert_classifier_forward.1} parent=11 // pred_fallthru
        _
      // Predicated region
      $region45: #{bert_classifier_forward.1} parent=11 // pred_check
        %p818 = pneg %p312
      $region46: #{bert_classifier_forward.1} parent=11 // pred_check_branch
        %820 = sbr.rel (%p818) target = $region48
      $region47: #{bert_classifier_forward.1} parent=11 // pred_region
        _
      $region48: #{bert_classifier_forward.1} parent=11 // pred_fallthru
        _
      // Predicated region
      $region49: #{bert_classifier_forward.1} parent=11 // pred_check
        %p821 = pneg %p333
      $region50: #{bert_classifier_forward.1} parent=11 // pred_check_branch
        %823 = sbr.rel (%p821) target = $region52
      $region51: #{bert_classifier_forward.1} parent=11 // pred_region
        _
      $region52: #{bert_classifier_forward.1} parent=11 // pred_fallthru
        _
      // Predicated region
      $region53: #{bert_classifier_forward.1} parent=11 // pred_check
        %p824 = pneg %p354
      $region54: #{bert_classifier_forward.1} parent=11 // pred_check_branch
        %826 = sbr.rel (%p824) target = $region56
      $region55: #{bert_classifier_forward.1} parent=11 // pred_region
        _
      $region56: #{bert_classifier_forward.1} parent=11 // pred_fallthru
        _
      // Predicated region
      $region57: #{bert_classifier_forward.1} parent=11 // pred_check
        %p827 = pneg %p375
      $region58: #{bert_classifier_forward.1} parent=11 // pred_check_branch
        %829 = sbr.rel (%p827) target = $region60
      $region59: #{bert_classifier_forward.1} parent=11 // pred_region
        _
      $region60: #{bert_classifier_forward.1} parent=11 // pred_fallthru
        _
      // Predicated region
      $region61: #{bert_classifier_forward.1} parent=11 // pred_check
        %p830 = pneg %p396
      $region62: #{bert_classifier_forward.1} parent=11 // pred_check_branch
        %832 = sbr.rel (%p830) target = $region64
      $region63: #{bert_classifier_forward.1} parent=11 // pred_region
        _
      $region64: #{bert_classifier_forward.1} parent=11 // pred_fallthru
        _
      // Predicated region
      $region65: #{bert_classifier_forward.1} parent=11 // pred_check
        %p833 = pneg %p417
      $region66: #{bert_classifier_forward.1} parent=11 // pred_check_branch
        %835 = sbr.rel (%p833) target = $region68
      $region67: #{bert_classifier_forward.1} parent=11 // pred_region
        _
      $region68: #{bert_classifier_forward.1} parent=11 // pred_fallthru
        _
      // Predicated region
      $region69: #{bert_classifier_forward.1} parent=11 // pred_check
        %p836 = pneg %p438
      $region70: #{bert_classifier_forward.1} parent=11 // pred_check_branch
        %838 = sbr.rel (%p836) target = $region72
      $region71: #{bert_classifier_forward.1} parent=11 // pred_region
        _
      $region72: #{bert_classifier_forward.1} parent=11 // pred_fallthru
        _
      // Predicated region
      $region73: #{bert_classifier_forward.1} parent=11 // pred_check
        %p839 = pneg %p459
      $region74: #{bert_classifier_forward.1} parent=11 // pred_check_branch
        %841 = sbr.rel (%p839) target = $region76
      $region75: #{bert_classifier_forward.1} parent=11 // pred_region
        _
      $region76: #{bert_classifier_forward.1} parent=11 // pred_fallthru
        _
      // Predicated region
      $region77: #{bert_classifier_forward.1} parent=11 // pred_check
        %p842 = pneg %p480
      $region78: #{bert_classifier_forward.1} parent=11 // pred_check_branch
        %844 = sbr.rel (%p842) target = $region80
      $region79: #{bert_classifier_forward.1} parent=11 // pred_region
        _
      $region80: #{bert_classifier_forward.1} parent=11 // pred_fallthru
        _
      // Predicated region
      $region81: #{bert_classifier_forward.1} parent=11 // pred_check
        %p845 = pneg %p501
      $region82: #{bert_classifier_forward.1} parent=11 // pred_check_branch
        %847 = sbr.rel (%p845) target = $region84
      $region83: #{bert_classifier_forward.1} parent=11 // pred_region
        _
      $region84: #{bert_classifier_forward.1} parent=11 // pred_fallthru
        _
      // Predicated region
      $region85: #{bert_classifier_forward.1} parent=11 // pred_check
        %p848 = pneg %p522
      $region86: #{bert_classifier_forward.1} parent=11 // pred_check_branch
        %850 = sbr.rel (%p848) target = $region88
      $region87: #{bert_classifier_forward.1} parent=11 // pred_region
        _
      $region88: #{bert_classifier_forward.1} parent=11 // pred_fallthru
        _
      // Predicated region
      $region89: #{bert_classifier_forward.1} parent=11 // pred_check
        %p851 = pneg %p543
      $region90: #{bert_classifier_forward.1} parent=11 // pred_check_branch
        %853 = sbr.rel (%p851) target = $region92
      $region91: #{bert_classifier_forward.1} parent=11 // pred_region
        _
      $region92: #{bert_classifier_forward.1} parent=11 // pred_fallthru
        _
      // Predicated region
      $region93: #{bert_classifier_forward.1} parent=11 // pred_check
        %p854 = pneg %p564
      $region94: #{bert_classifier_forward.1} parent=11 // pred_check_branch
        %856 = sbr.rel (%p854) target = $region96
      $region95: #{bert_classifier_forward.1} parent=11 // pred_region
        _
      $region96: #{bert_classifier_forward.1} parent=11 // pred_fallthru
        _
      // Predicated region
      $region97: #{bert_classifier_forward.1} parent=11 // pred_check
        %p857 = pneg %p585
      $region98: #{bert_classifier_forward.1} parent=11 // pred_check_branch
        %859 = sbr.rel (%p857) target = $region100
      $region99: #{bert_classifier_forward.1} parent=11 // pred_region
        _
      $region100: #{bert_classifier_forward.1} parent=11 // pred_fallthru
        _
      // Predicated region
      $region101: #{bert_classifier_forward.1} parent=11 // pred_check
        %p860 = pneg %p606
      $region102: #{bert_classifier_forward.1} parent=11 // pred_check_branch
        %862 = sbr.rel (%p860) target = $region104
      $region103: #{bert_classifier_forward.1} parent=11 // pred_region
        _
      $region104: #{bert_classifier_forward.1} parent=11 // pred_fallthru
        _
      // Predicated region
      $region105: #{bert_classifier_forward.1} parent=11 // pred_check
        %p863 = pneg %p627
      $region106: #{bert_classifier_forward.1} parent=11 // pred_check_branch
        %865 = sbr.rel (%p863) target = $region108
      $region107: #{bert_classifier_forward.1} parent=11 // pred_region
        _
      $region108: #{bert_classifier_forward.1} parent=11 // pred_fallthru
        _
      // Predicated region
      $region109: #{bert_classifier_forward.1} parent=11 // pred_check
        %p866 = pneg %p648
      $region110: #{bert_classifier_forward.1} parent=11 // pred_check_branch
        %868 = sbr.rel (%p866) target = $region112
      $region111: #{bert_classifier_forward.1} parent=11 // pred_region
        _
      $region112: #{bert_classifier_forward.1} parent=11 // pred_fallthru
        _
      // Predicated region
      $region113: #{bert_classifier_forward.1} parent=11 // pred_check
        %p869 = pneg %p669
      $region114: #{bert_classifier_forward.1} parent=11 // pred_check_branch
        %871 = sbr.rel (%p869) target = $region116
      $region115: #{bert_classifier_forward.1} parent=11 // pred_region
        _
      $region116: #{bert_classifier_forward.1} parent=11 // pred_fallthru
        _
      // Predicated region
      $region117: #{bert_classifier_forward.1} parent=11 // pred_check
        %p872 = pneg %p690
      $region118: #{bert_classifier_forward.1} parent=11 // pred_check_branch
        %874 = sbr.rel (%p872) target = $region120
      $region119: #{bert_classifier_forward.1} parent=11 // pred_region
        _
      $region120: #{bert_classifier_forward.1} parent=11 // pred_fallthru
        _
      // Predicated region
      $region121: #{bert_classifier_forward.1} parent=11 // pred_check
        %p875 = pneg %p711
      $region122: #{bert_classifier_forward.1} parent=11 // pred_check_branch
        %877 = sbr.rel (%p875) target = $region124
      $region123: #{bert_classifier_forward.1} parent=11 // pred_region
        _
      $region124: #{bert_classifier_forward.1} parent=11 // pred_fallthru
        _
      // Predicated region
      $region125: #{bert_classifier_forward.1} parent=11 // pred_check
        %p878 = pneg %p732
      $region126: #{bert_classifier_forward.1} parent=11 // pred_check_branch
        %880 = sbr.rel (%p878) target = $region128
      $region127: #{bert_classifier_forward.1} parent=11 // pred_region
        _
      $region128: #{bert_classifier_forward.1} parent=11 // pred_fallthru
        _
      // Predicated region
      $region129: #{bert_classifier_forward.1} parent=11 // pred_check
        %p881 = pneg %p753
      $region130: #{bert_classifier_forward.1} parent=11 // pred_check_branch
        %883 = sbr.rel (%p881) target = $region132
      $region131: #{bert_classifier_forward.1} parent=11 // pred_region
        _
      $region132: #{bert_classifier_forward.1} parent=11 // pred_fallthru
        _
    $region12: #{bert_classifier_forward.1} parent=5 // pred_fallthru
      _
    %p884 = scmp.lt.s32.totalorder %s71, 2
    // Predicated region
    $region133: #{bert_classifier_forward.1} parent=5 // pred_check
      %p885 = pneg %p884
    $region134: #{bert_classifier_forward.1} parent=5 // pred_check_branch
      %887 = sbr.rel (%p885) target = $region136
    $region135: #{bert_classifier_forward.1} parent=5 // pred_region
      // Predicated region
      $region137: #{bert_classifier_forward.1} parent=135 // pred_check
        %p888 = pneg %p91
      $region138: #{bert_classifier_forward.1} parent=135 // pred_check_branch
        %890 = sbr.rel (%p888) target = $region140
      $region139: #{bert_classifier_forward.1} parent=135 // pred_region
        %p891 = scmp.lt.s32.totalorder %s71, 1
        %s892 = scalar_select %p891, %s71, 1
        %s893 = smul.addr %s892, 8
        %s894 = scalar_lea.vmem %s1, %s893
      $region140: #{bert_classifier_forward.1} parent=135 // pred_fallthru
        _
      // Predicated region
      $region141: #{bert_classifier_forward.1} parent=135 // pred_check
        %p895 = pneg %p117
      $region142: #{bert_classifier_forward.1} parent=135 // pred_check_branch
        %897 = sbr.rel (%p895) target = $region144
      $region143: #{bert_classifier_forward.1} parent=135 // pred_region
        %p898 = scmp.lt.s32.totalorder %s71, 1
        %s899 = scalar_select %p898, %s71, 1
        %s900 = scalar_lea.vmem %s3, %s899
      $region144: #{bert_classifier_forward.1} parent=135 // pred_fallthru
        _
    $region136: #{bert_classifier_forward.1} parent=5 // pred_fallthru
      _
    %p901 = scmp.le.s32.totalorder 1, %s71
    %p902 = scmp.lt.s32.totalorder %s71, 3
    %p903 = pnand %p901, %p902
    %p904 = pneg %p903
    // Predicated region
    $region145: #{bert_classifier_forward.1} parent=5 // pred_check
      _
    $region146: #{bert_classifier_forward.1} parent=5 // pred_check_branch
      %906 = sbr.rel (%p903) target = $region148
    $region147: #{bert_classifier_forward.1} parent=5 // pred_region
      %s907 = ssub.s32 %s71, 1
      %p908 = scmp.lt.s32.totalorder %s76, 1
      %s909 = scalar_select %p908, %s76, 1
      %s910 = smul.addr %s909, 8
      %s911 = scalar_lea.vmem %s1, %s910
      %p912 = pneg %p97
      %p913 = pneg %p94
      %p914 = scmp.lt.s32.totalorder %s76, 1
      %s915 = scalar_select %p914, %s76, 1
      %s916 = scalar_lea.vmem %s3, %s915
      %p917 = pneg %p123
      %p918 = pneg %p120
      %p919 = pneg %p144
      %p920 = pneg %p141
      %p921 = pneg %p165
      %p922 = pneg %p162
      %p923 = pneg %p186
      %p924 = pneg %p183
      %p925 = pneg %p207
      %p926 = pneg %p204
      %p927 = pneg %p228
      %p928 = pneg %p225
      %p929 = pneg %p249
      %p930 = pneg %p246
      %p931 = pneg %p270
      %p932 = pneg %p267
      %p933 = pneg %p291
      %p934 = pneg %p288
      %p935 = pneg %p312
      %p936 = pneg %p309
      %p937 = pneg %p333
      %p938 = pneg %p330
      %p939 = pneg %p354
      %p940 = pneg %p351
      %p941 = pneg %p375
      %p942 = pneg %p372
      %p943 = pneg %p396
      %p944 = pneg %p393
      %p945 = pneg %p417
      %p946 = pneg %p414
      %p947 = pneg %p438
      %p948 = pneg %p435
      %p949 = pneg %p459
      %p950 = pneg %p456
      %p951 = pneg %p480
      %p952 = pneg %p477
      %p953 = pneg %p501
      %p954 = pneg %p498
      %p955 = pneg %p522
      %p956 = pneg %p519
      %p957 = pneg %p543
      %p958 = pneg %p540
      %p959 = pneg %p564
      %p960 = pneg %p561
      %p961 = pneg %p585
      %p962 = pneg %p582
      %p963 = pneg %p606
      %p964 = pneg %p603
      %p965 = pneg %p627
      %p966 = pneg %p624
      %p967 = pneg %p648
      %p968 = pneg %p645
      %p969 = pneg %p669
      %p970 = pneg %p666
      %p971 = pneg %p690
      %p972 = pneg %p687
      %p973 = pneg %p711
      %p974 = pneg %p708
      %p975 = pneg %p732
      %p976 = pneg %p729
      %p977 = pneg %p753
      %p978 = pneg %p750
      %p979 = pneg %p779
      %p980 = pneg %p776
      %p981 = scmp.lt.s32.totalorder %s76, 1
      %s982 = scalar_select %p981, %s76, 1
      %s983 = smul.addr %s982, 8
      %s984 = scalar_lea.vmem %s65, %s983
      %p985 = scmp.lt.s32.totalorder %s76, 1
      %s986 = scalar_select %p985, %s76, 1
      %s987 = smul.addr %s986, 8
      %s988 = scalar_lea.vmem %s1, %s987
      %p989 = scmp.lt.s32.totalorder %s76, 1
      %s990 = scalar_select %p989, %s76, 1
      %s991 = scalar_lea.vmem %s3, %s990
      %p992 = scmp.lt.s32.totalorder %s76, 1
      %s993 = scalar_select %p992, %s76, 1
      %s994 = smul.addr %s993, 8
      %s995 = scalar_lea.vmem %s65, %s994
      %v997 = vld [vmem:[%s991] sm:$0x1]
      %v998 = vld [vmem:[%s988] sm:$0xff]
      %v999 = vld [vmem:[%s5] sm:$0x1]
      %v1000 = vld [vmem:[%s7] sm:$0x1]
      %vm1001 = vcmask 261120
      %v1002 = vsel %vm1001, %v998, 0.0
      %1003 = vadd.xlane.f32.xlu0 %v1002
      %v1004 = vpop.xlane.xlu0 %1003
      %v1005 = vrcp.pop 32.0
      %v1006 = vmul.f32 %v1004, %v1005
      %v1007 = vsub.f32 %v998, %v1006
      %v1008 = vmul.f32 %v1007, %v1007
      %v1009 = vsel %vm1001, %v1008, 0.0
      %1010 = vadd.xlane.f32.xlu0 %v1009
      %v1011 = vpop.xlane.xlu0 %1010
      %v1012 = vmul.f32 %v1011, %v1005
      %v1013 = vadd.f32 %v1012, 1e-12
      %v1014 = vrsqrt.pop %v1013
      %v1015 = vmul.f32 %v1007, %v1014
      %v1017 = vlaneseq
      %v1018 = vshrl.u32 %v1017, 7
      %v1019 = vsub.s32 0, %v1018
      %v1020 = vrot.slane %v999, %v1019
      %v1022 = vmul.f32 %v1015, %v1020
      %v1024 = vlaneseq
      %v1025 = vshrl.u32 %v1024, 7
      %v1026 = vsub.s32 0, %v1025
      %v1027 = vrot.slane %v1000, %v1026
      %v1029 = vadd.f32 %v1022, %v1027
      %v1030 = vld [vmem:[%s9] sm:$0xf]
      %v1031 = vld [vmem:[%s9 + $0x4] sm:$0xf]
      %v1032 = vld [vmem:[%s9 + $0x8] sm:$0xf]
      %v1033 = vld [vmem:[%s9 + $0xc] sm:$0xf]
      %v1034 = vld [vmem:[%s11] sm:$0x1]
      %v1035 = vpack.c.bf16 %v1029, %v1029
      %v1037 = vlaneseq
      %v1038 = vshrl.u32 %v1037, 7
      %v1039 = vsub.s32 0, %v1038
      %v1040 = vrot.slane %v1034, %v1039
      %v1046 = vunpack.c.l.b16 %v1030
      %v1047 = vunpack.c.l.b16 %v1031
      %v1048 = vunpack.c.l.b16 %v1032
      %v1049 = vunpack.c.l.b16 %v1033
      %v1050 = vpack.c.b16 %v1047, %v1046
      %v1051 = vpack.c.b16 %v1049, %v1048
      %v1055 = vsel %vm1001, %v1035, 0
      %1057 = vmatprep.subr.bf16.mxu0 0
      %1058 = vmatpush1.bf16.msra.mxu0 %v1050
      %1059 = vmatprep.subr.bf16.mxu0 0
      %1060 = vmatpush1.bf16.msra.mxu0 %v1051
      %1061 = vmatprep.subr.bf16.mxu0 0
      %1062 = vmatpush1.bf16.msra.mxu0 0
      %1063 = vmatprep.subr.bf16.mxu0 0
      %1064 = vmatpush1.bf16.msra.mxu0 0
      %1065 = vmatprep.subr.bf16.mxu0 0
      %1066 = vmatpush1.bf16.msra.mxu0 0
      %1067 = vmatprep.subr.bf16.mxu0 0
      %1068 = vmatpush1.bf16.msra.mxu0 0
      %1069 = vmatprep.subr.bf16.mxu0 0
      %1070 = vmatpush1.bf16.msra.mxu0 0
      %1071 = vmatprep.subr.bf16.mxu0 0
      %1072 = vmatpush1.bf16.msra.mxu0 0
      %1073 = vmatprep.subr.bf16.mxu0 0
      %1074 = vmatpush1.bf16.msra.mxu0 0
      %1075 = vmatprep.subr.bf16.mxu0 0
      %1076 = vmatpush1.bf16.msra.mxu0 0
      %1077 = vmatprep.subr.bf16.mxu0 0
      %1078 = vmatpush1.bf16.msra.mxu0 0
      %1079 = vmatprep.subr.bf16.mxu0 0
      %1080 = vmatpush1.bf16.msra.mxu0 0
      %1081 = vmatprep.subr.bf16.mxu0 0
      %1082 = vmatpush1.bf16.msra.mxu0 0
      %1083 = vmatprep.subr.bf16.mxu0 0
      %1084 = vmatpush1.bf16.msra.mxu0 0
      %1085 = vmatprep.subr.bf16.mxu0 0
      %1086 = vmatpush1.bf16.msra.mxu0 0
      %1087 = vmatprep.subr.bf16.mxu0 0
      %1088 = vmatpush1.bf16.msra.mxu0 0
      %1089 = vmatprep.mubr.bf16.mxu0 0
      %1090 = vmatmul.mubr.bf16.gmra.mrb[0].mxu0 %v1055
      %v1091 = vpop.f32.mrb[0].mxu0
      %v1092 = vadd.f32 %v1040, %v1091
      %v1093 = vpop.f32.mrb[0].mxu0
      %v1094 = vpop.f32.mrb[0].mxu0
      %v1095 = vpop.f32.mrb[0].mxu0
      %1096 = vdwg.mxu0
      %v1097 = vpack.c.bf16 %v1092, %v1092
      %v1099 = vlaneseq
      %v1100 = vshrl.u32 %v1099, 7
      %v1101 = vsub.s32 0, %v1100
      %v1102 = vrot.slane %v997, %v1101
      %1105 = vrot.lane.b32.xlu0 %v1097, 120
      %v1106 = vpop.permute.xlu0 %1105
      %vm1107 = vcmask 64512
      %v1109 = vsel %vm1107, %v1097, 0
      %v1112 = vsel %vm1107, %v1106, 0
      %1114 = vmatprep.subr.bf16.mxu0 0
      %1115 = vmatpush1.bf16.xpose.msra.mxu0 %v1112
      %1116 = vmatprep.subr.bf16.mxu0 0
      %1117 = vmatpush1.bf16.xpose.msra.mxu0 0
      %1118 = vmatprep.subr.bf16.mxu0 0
      %1119 = vmatpush1.bf16.xpose.msra.mxu0 0
      %1120 = vmatprep.subr.bf16.mxu0 0
      %1121 = vmatpush1.bf16.xpose.msra.mxu0 0
      %1122 = vmatprep.subr.bf16.mxu0 0
      %1123 = vmatpush1.bf16.xpose.msra.mxu0 0
      %1124 = vmatprep.subr.bf16.mxu0 0
      %1125 = vmatpush1.bf16.xpose.msra.mxu0 0
      %1126 = vmatprep.subr.bf16.mxu0 0
      %1127 = vmatpush1.bf16.xpose.msra.mxu0 0
      %1128 = vmatprep.subr.bf16.mxu0 0
      %1129 = vmatpush1.bf16.xpose.msra.mxu0 0
      %1130 = vmatprep.subr.bf16.mxu0 0
      %1131 = vmatpush1.bf16.xpose.msra.mxu0 0
      %1132 = vmatprep.subr.bf16.mxu0 0
      %1133 = vmatpush1.bf16.xpose.msra.mxu0 0
      %1134 = vmatprep.subr.bf16.mxu0 0
      %1135 = vmatpush1.bf16.xpose.msra.mxu0 0
      %1136 = vmatprep.subr.bf16.mxu0 0
      %1137 = vmatpush1.bf16.xpose.msra.mxu0 0
      %1138 = vmatprep.subr.bf16.mxu0 0
      %1139 = vmatpush1.bf16.xpose.msra.mxu0 0
      %1140 = vmatprep.subr.bf16.mxu0 0
      %1141 = vmatpush1.bf16.xpose.msra.mxu0 0
      %1142 = vmatprep.subr.bf16.mxu0 0
      %1143 = vmatpush1.bf16.xpose.msra.mxu0 0
      %1144 = vmatprep.subr.bf16.mxu0 0
      %1145 = vmatpush1.bf16.xpose.msra.mxu0 0
      %1146 = vmatprep.mubr.bf16.mxu0 0
      %1147 = vmatmul.mubr.bf16.gmra.mrb[0].mxu0 %v1109
      %v1148 = vpop.f32.mrb[0].mxu0
      %v1149 = vadd.f32 %v1102, %v1148
      %v1150 = vpop.f32.mrb[0].mxu0
      %v1151 = vpop.f32.mrb[0].mxu0
      %v1152 = vpop.f32.mrb[0].mxu0
      %1153 = vdwg.mxu0
      %v1154 = vsel %vm1107, %v1149, -inf
      %1155 = vmax.xlane.f32.xlu0 %v1154
      %v1156 = vpop.xlane.xlu0 %1155
      %v1157 = vsub.f32 %v1149, %v1156
      %v1158 = vmul.f32 %v1157, 1.442695
      %v1159 = vpow.pop %v1158
      %v1160 = vsel %vm1107, %v1159, 0.0
      %1161 = vadd.xlane.f32.xlu0 %v1160
      %v1162 = vpop.xlane.xlu0 %1161
      %v1163 = vrcp.pop %v1162
      %v1164 = vmul.f32 %v1159, %v1163
      %v1165 = vpack.c.bf16 %v1164, %v1164
      %1166 = vrot.lane.b32.xlu0 %v1097, 112
      %v1167 = vpop.permute.xlu0 %1166
      %v1169 = vsel %vm1107, %v1165, 0
      %vm1171 = vcmask 1043456
      %v1173 = vsel %vm1171, %v1167, 0
      %1175 = vmatprep.subr.bf16.mxu0 0
      %1176 = vmatpush1.bf16.msra.mxu0 %v1173
      %1177 = vmatprep.subr.bf16.mxu0 0
      %1178 = vmatpush1.bf16.msra.mxu0 0
      %1179 = vmatprep.subr.bf16.mxu0 0
      %1180 = vmatpush1.bf16.msra.mxu0 0
      %1181 = vmatprep.subr.bf16.mxu0 0
      %1182 = vmatpush1.bf16.msra.mxu0 0
      %1183 = vmatprep.subr.bf16.mxu0 0
      %1184 = vmatpush1.bf16.msra.mxu0 0
      %1185 = vmatprep.subr.bf16.mxu0 0
      %1186 = vmatpush1.bf16.msra.mxu0 0
      %1187 = vmatprep.subr.bf16.mxu0 0
      %1188 = vmatpush1.bf16.msra.mxu0 0
      %1189 = vmatprep.subr.bf16.mxu0 0
      %1190 = vmatpush1.bf16.msra.mxu0 0
      %1191 = vmatprep.subr.bf16.mxu0 0
      %1192 = vmatpush1.bf16.msra.mxu0 0
      %1193 = vmatprep.subr.bf16.mxu0 0
      %1194 = vmatpush1.bf16.msra.mxu0 0
      %1195 = vmatprep.subr.bf16.mxu0 0
      %1196 = vmatpush1.bf16.msra.mxu0 0
      %1197 = vmatprep.subr.bf16.mxu0 0
      %1198 = vmatpush1.bf16.msra.mxu0 0
      %1199 = vmatprep.subr.bf16.mxu0 0
      %1200 = vmatpush1.bf16.msra.mxu0 0
      %1201 = vmatprep.subr.bf16.mxu0 0
      %1202 = vmatpush1.bf16.msra.mxu0 0
      %1203 = vmatprep.subr.bf16.mxu0 0
      %1204 = vmatpush1.bf16.msra.mxu0 0
      %1205 = vmatprep.subr.bf16.mxu0 0
      %1206 = vmatpush1.bf16.msra.mxu0 0
      %1207 = vmatprep.mubr.bf16.mxu0 0
      %1208 = vmatmul.mubr.bf16.gmra.mrb[0].mxu0 %v1169
      %v1209 = vpop.f32.mrb[0].mxu0
      %v1210 = vadd.f32 0.0, %v1209
      %v1211 = vpop.f32.mrb[0].mxu0
      %v1212 = vpop.f32.mrb[0].mxu0
      %v1213 = vpop.f32.mrb[0].mxu0
      %1214 = vdwg.mxu0
      %1215 = vrot.lane.b32.xlu0 %v1097, 104
      %v1216 = vpop.permute.xlu0 %1215
      %1217 = vrot.lane.b32.xlu0 %v1097, 96
      %v1218 = vpop.permute.xlu0 %1217
      %v1220 = vsel %vm1107, %v1216, 0
      %v1223 = vsel %vm1107, %v1218, 0
      %1225 = vmatprep.subr.bf16.mxu0 0
      %1226 = vmatpush1.bf16.xpose.msra.mxu0 %v1223
      %1227 = vmatprep.subr.bf16.mxu0 0
      %1228 = vmatpush1.bf16.xpose.msra.mxu0 0
      %1229 = vmatprep.subr.bf16.mxu0 0
      %1230 = vmatpush1.bf16.xpose.msra.mxu0 0
      %1231 = vmatprep.subr.bf16.mxu0 0
      %1232 = vmatpush1.bf16.xpose.msra.mxu0 0
      %1233 = vmatprep.subr.bf16.mxu0 0
      %1234 = vmatpush1.bf16.xpose.msra.mxu0 0
      %1235 = vmatprep.subr.bf16.mxu0 0
      %1236 = vmatpush1.bf16.xpose.msra.mxu0 0
      %1237 = vmatprep.subr.bf16.mxu0 0
      %1238 = vmatpush1.bf16.xpose.msra.mxu0 0
      %1239 = vmatprep.subr.bf16.mxu0 0
      %1240 = vmatpush1.bf16.xpose.msra.mxu0 0
      %1241 = vmatprep.subr.bf16.mxu0 0
      %1242 = vmatpush1.bf16.xpose.msra.mxu0 0
      %1243 = vmatprep.subr.bf16.mxu0 0
      %1244 = vmatpush1.bf16.xpose.msra.mxu0 0
      %1245 = vmatprep.subr.bf16.mxu0 0
      %1246 = vmatpush1.bf16.xpose.msra.mxu0 0
      %1247 = vmatprep.subr.bf16.mxu0 0
      %1248 = vmatpush1.bf16.xpose.msra.mxu0 0
      %1249 = vmatprep.subr.bf16.mxu0 0
      %1250 = vmatpush1.bf16.xpose.msra.mxu0 0
      %1251 = vmatprep.subr.bf16.mxu0 0
      %1252 = vmatpush1.bf16.xpose.msra.mxu0 0
      %1253 = vmatprep.subr.bf16.mxu0 0
      %1254 = vmatpush1.bf16.xpose.msra.mxu0 0
      %1255 = vmatprep.subr.bf16.mxu0 0
      %1256 = vmatpush1.bf16.xpose.msra.mxu0 0
      %1257 = vmatprep.mubr.bf16.mxu0 0
      %1258 = vmatmul.mubr.bf16.gmra.mrb[0].mxu0 %v1220
      %v1259 = vpop.f32.mrb[0].mxu0
      %v1260 = vadd.f32 %v1102, %v1259
      %v1261 = vpop.f32.mrb[0].mxu0
      %v1262 = vpop.f32.mrb[0].mxu0
      %v1263 = vpop.f32.mrb[0].mxu0
      %1264 = vdwg.mxu0
      %v1265 = vsel %vm1107, %v1260, -inf
      %1266 = vmax.xlane.f32.xlu0 %v1265
      %v1267 = vpop.xlane.xlu0 %1266
      %v1268 = vsub.f32 %v1260, %v1267
      %v1269 = vmul.f32 %v1268, 1.442695
      %v1270 = vpow.pop %v1269
      %v1271 = vsel %vm1107, %v1270, 0.0
      %1272 = vadd.xlane.f32.xlu0 %v1271
      %v1273 = vpop.xlane.xlu0 %1272
      %v1274 = vrcp.pop %v1273
      %v1275 = vmul.f32 %v1270, %v1274
      %v1276 = vpack.c.bf16 %v1275, %v1275
      %1277 = vrot.lane.b32.xlu0 %v1097, 88
      %v1278 = vpop.permute.xlu0 %1277
      %v1280 = vsel %vm1107, %v1276, 0
      %v1283 = vsel %vm1171, %v1278, 0
      %1285 = vmatprep.subr.bf16.mxu0 0
      %1286 = vmatpush1.bf16.msra.mxu0 %v1283
      %1287 = vmatprep.subr.bf16.mxu0 0
      %1288 = vmatpush1.bf16.msra.mxu0 0
      %1289 = vmatprep.subr.bf16.mxu0 0
      %1290 = vmatpush1.bf16.msra.mxu0 0
      %1291 = vmatprep.subr.bf16.mxu0 0
      %1292 = vmatpush1.bf16.msra.mxu0 0
      %1293 = vmatprep.subr.bf16.mxu0 0
      %1294 = vmatpush1.bf16.msra.mxu0 0
      %1295 = vmatprep.subr.bf16.mxu0 0
      %1296 = vmatpush1.bf16.msra.mxu0 0
      %1297 = vmatprep.subr.bf16.mxu0 0
      %1298 = vmatpush1.bf16.msra.mxu0 0
      %1299 = vmatprep.subr.bf16.mxu0 0
      %1300 = vmatpush1.bf16.msra.mxu0 0
      %1301 = vmatprep.subr.bf16.mxu0 0
      %1302 = vmatpush1.bf16.msra.mxu0 0
      %1303 = vmatprep.subr.bf16.mxu0 0
      %1304 = vmatpush1.bf16.msra.mxu0 0
      %1305 = vmatprep.subr.bf16.mxu0 0
      %1306 = vmatpush1.bf16.msra.mxu0 0
      %1307 = vmatprep.subr.bf16.mxu0 0
      %1308 = vmatpush1.bf16.msra.mxu0 0
      %1309 = vmatprep.subr.bf16.mxu0 0
      %1310 = vmatpush1.bf16.msra.mxu0 0
      %1311 = vmatprep.subr.bf16.mxu0 0
      %1312 = vmatpush1.bf16.msra.mxu0 0
      %1313 = vmatprep.subr.bf16.mxu0 0
      %1314 = vmatpush1.bf16.msra.mxu0 0
      %1315 = vmatprep.subr.bf16.mxu0 0
      %1316 = vmatpush1.bf16.msra.mxu0 0
      %1317 = vmatprep.mubr.bf16.mxu0 0
      %1318 = vmatmul.mubr.bf16.gmra.mrb[0].mxu0 %v1280
      %v1319 = vpop.f32.mrb[0].mxu0
      %v1320 = vadd.f32 0.0, %v1319
      %v1321 = vpop.f32.mrb[0].mxu0
      %v1322 = vpop.f32.mrb[0].mxu0
      %v1323 = vpop.f32.mrb[0].mxu0
      %1324 = vdwg.mxu0
      %1325 = vrot.lane.b32.xlu0 %v1097, 80
      %v1326 = vpop.permute.xlu0 %1325
      %1327 = vrot.lane.b32.xlu0 %v1097, 72
      %v1328 = vpop.permute.xlu0 %1327
      %v1330 = vsel %vm1107, %v1326, 0
      %v1333 = vsel %vm1107, %v1328, 0
      %1335 = vmatprep.subr.bf16.mxu0 0
      %1336 = vmatpush1.bf16.xpose.msra.mxu0 %v1333
      %1337 = vmatprep.subr.bf16.mxu0 0
      %1338 = vmatpush1.bf16.xpose.msra.mxu0 0
      %1339 = vmatprep.subr.bf16.mxu0 0
      %1340 = vmatpush1.bf16.xpose.msra.mxu0 0
      %1341 = vmatprep.subr.bf16.mxu0 0
      %1342 = vmatpush1.bf16.xpose.msra.mxu0 0
      %1343 = vmatprep.subr.bf16.mxu0 0
      %1344 = vmatpush1.bf16.xpose.msra.mxu0 0
      %1345 = vmatprep.subr.bf16.mxu0 0
      %1346 = vmatpush1.bf16.xpose.msra.mxu0 0
      %1347 = vmatprep.subr.bf16.mxu0 0
      %1348 = vmatpush1.bf16.xpose.msra.mxu0 0
      %1349 = vmatprep.subr.bf16.mxu0 0
      %1350 = vmatpush1.bf16.xpose.msra.mxu0 0
      %1351 = vmatprep.subr.bf16.mxu0 0
      %1352 = vmatpush1.bf16.xpose.msra.mxu0 0
      %1353 = vmatprep.subr.bf16.mxu0 0
      %1354 = vmatpush1.bf16.xpose.msra.mxu0 0
      %1355 = vmatprep.subr.bf16.mxu0 0
      %1356 = vmatpush1.bf16.xpose.msra.mxu0 0
      %1357 = vmatprep.subr.bf16.mxu0 0
      %1358 = vmatpush1.bf16.xpose.msra.mxu0 0
      %1359 = vmatprep.subr.bf16.mxu0 0
      %1360 = vmatpush1.bf16.xpose.msra.mxu0 0
      %1361 = vmatprep.subr.bf16.mxu0 0
      %1362 = vmatpush1.bf16.xpose.msra.mxu0 0
      %1363 = vmatprep.subr.bf16.mxu0 0
      %1364 = vmatpush1.bf16.xpose.msra.mxu0 0
      %1365 = vmatprep.subr.bf16.mxu0 0
      %1366 = vmatpush1.bf16.xpose.msra.mxu0 0
      %1367 = vmatprep.mubr.bf16.mxu0 0
      %1368 = vmatmul.mubr.bf16.gmra.mrb[0].mxu0 %v1330
      %v1369 = vpop.f32.mrb[0].mxu0
      %v1370 = vadd.f32 %v1102, %v1369
      %v1371 = vpop.f32.mrb[0].mxu0
      %v1372 = vpop.f32.mrb[0].mxu0
      %v1373 = vpop.f32.mrb[0].mxu0
      %1374 = vdwg.mxu0
      %v1375 = vsel %vm1107, %v1370, -inf
      %1376 = vmax.xlane.f32.xlu0 %v1375
      %v1377 = vpop.xlane.xlu0 %1376
      %v1378 = vsub.f32 %v1370, %v1377
      %v1379 = vmul.f32 %v1378, 1.442695
      %v1380 = vpow.pop %v1379
      %v1381 = vsel %vm1107, %v1380, 0.0
      %1382 = vadd.xlane.f32.xlu0 %v1381
      %v1383 = vpop.xlane.xlu0 %1382
      %v1384 = vrcp.pop %v1383
      %v1385 = vmul.f32 %v1380, %v1384
      %v1386 = vpack.c.bf16 %v1385, %v1385
      %1387 = vrot.lane.b32.xlu0 %v1097, 64
      %v1388 = vpop.permute.xlu0 %1387
      %v1390 = vsel %vm1107, %v1386, 0
      %v1393 = vsel %vm1171, %v1388, 0
      %1395 = vmatprep.subr.bf16.mxu0 0
      %1396 = vmatpush1.bf16.msra.mxu0 %v1393
      %1397 = vmatprep.subr.bf16.mxu0 0
      %1398 = vmatpush1.bf16.msra.mxu0 0
      %1399 = vmatprep.subr.bf16.mxu0 0
      %1400 = vmatpush1.bf16.msra.mxu0 0
      %1401 = vmatprep.subr.bf16.mxu0 0
      %1402 = vmatpush1.bf16.msra.mxu0 0
      %1403 = vmatprep.subr.bf16.mxu0 0
      %1404 = vmatpush1.bf16.msra.mxu0 0
      %1405 = vmatprep.subr.bf16.mxu0 0
      %1406 = vmatpush1.bf16.msra.mxu0 0
      %1407 = vmatprep.subr.bf16.mxu0 0
      %1408 = vmatpush1.bf16.msra.mxu0 0
      %1409 = vmatprep.subr.bf16.mxu0 0
      %1410 = vmatpush1.bf16.msra.mxu0 0
      %1411 = vmatprep.subr.bf16.mxu0 0
      %1412 = vmatpush1.bf16.msra.mxu0 0
      %1413 = vmatprep.subr.bf16.mxu0 0
      %1414 = vmatpush1.bf16.msra.mxu0 0
      %1415 = vmatprep.subr.bf16.mxu0 0
      %1416 = vmatpush1.bf16.msra.mxu0 0
      %1417 = vmatprep.subr.bf16.mxu0 0
      %1418 = vmatpush1.bf16.msra.mxu0 0
      %1419 = vmatprep.subr.bf16.mxu0 0
      %1420 = vmatpush1.bf16.msra.mxu0 0
      %1421 = vmatprep.subr.bf16.mxu0 0
      %1422 = vmatpush1.bf16.msra.mxu0 0
      %1423 = vmatprep.subr.bf16.mxu0 0
      %1424 = vmatpush1.bf16.msra.mxu0 0
      %1425 = vmatprep.subr.bf16.mxu0 0
      %1426 = vmatpush1.bf16.msra.mxu0 0
      %1427 = vmatprep.mubr.bf16.mxu0 0
      %1428 = vmatmul.mubr.bf16.gmra.mrb[0].mxu0 %v1390
      %v1429 = vpop.f32.mrb[0].mxu0
      %v1430 = vadd.f32 0.0, %v1429
      %v1431 = vpop.f32.mrb[0].mxu0
      %v1432 = vpop.f32.mrb[0].mxu0
      %v1433 = vpop.f32.mrb[0].mxu0
      %1434 = vdwg.mxu0
      %1435 = vrot.lane.b32.xlu0 %v1097, 56
      %v1436 = vpop.permute.xlu0 %1435
      %1437 = vrot.lane.b32.xlu0 %v1097, 48
      %v1438 = vpop.permute.xlu0 %1437
      %v1440 = vsel %vm1107, %v1436, 0
      %v1443 = vsel %vm1107, %v1438, 0
      %1445 = vmatprep.subr.bf16.mxu0 0
      %1446 = vmatpush1.bf16.xpose.msra.mxu0 %v1443
      %1447 = vmatprep.subr.bf16.mxu0 0
      %1448 = vmatpush1.bf16.xpose.msra.mxu0 0
      %1449 = vmatprep.subr.bf16.mxu0 0
      %1450 = vmatpush1.bf16.xpose.msra.mxu0 0
      %1451 = vmatprep.subr.bf16.mxu0 0
      %1452 = vmatpush1.bf16.xpose.msra.mxu0 0
      %1453 = vmatprep.subr.bf16.mxu0 0
      %1454 = vmatpush1.bf16.xpose.msra.mxu0 0
      %1455 = vmatprep.subr.bf16.mxu0 0
      %1456 = vmatpush1.bf16.xpose.msra.mxu0 0
      %1457 = vmatprep.subr.bf16.mxu0 0
      %1458 = vmatpush1.bf16.xpose.msra.mxu0 0
      %1459 = vmatprep.subr.bf16.mxu0 0
      %1460 = vmatpush1.bf16.xpose.msra.mxu0 0
      %1461 = vmatprep.subr.bf16.mxu0 0
      %1462 = vmatpush1.bf16.xpose.msra.mxu0 0
      %1463 = vmatprep.subr.bf16.mxu0 0
      %1464 = vmatpush1.bf16.xpose.msra.mxu0 0
      %1465 = vmatprep.subr.bf16.mxu0 0
      %1466 = vmatpush1.bf16.xpose.msra.mxu0 0
      %1467 = vmatprep.subr.bf16.mxu0 0
      %1468 = vmatpush1.bf16.xpose.msra.mxu0 0
      %1469 = vmatprep.subr.bf16.mxu0 0
      %1470 = vmatpush1.bf16.xpose.msra.mxu0 0
      %1471 = vmatprep.subr.bf16.mxu0 0
      %1472 = vmatpush1.bf16.xpose.msra.mxu0 0
      %1473 = vmatprep.subr.bf16.mxu0 0
      %1474 = vmatpush1.bf16.xpose.msra.mxu0 0
      %1475 = vmatprep.subr.bf16.mxu0 0
      %1476 = vmatpush1.bf16.xpose.msra.mxu0 0
      %1477 = vmatprep.mubr.bf16.mxu0 0
      %1478 = vmatmul.mubr.bf16.gmra.mrb[0].mxu0 %v1440
      %v1479 = vpop.f32.mrb[0].mxu0
      %v1480 = vadd.f32 %v1102, %v1479
      %v1481 = vpop.f32.mrb[0].mxu0
      %v1482 = vpop.f32.mrb[0].mxu0
      %v1483 = vpop.f32.mrb[0].mxu0
      %1484 = vdwg.mxu0
      %v1485 = vsel %vm1107, %v1480, -inf
      %1486 = vmax.xlane.f32.xlu0 %v1485
      %v1487 = vpop.xlane.xlu0 %1486
      %v1488 = vsub.f32 %v1480, %v1487
      %v1489 = vmul.f32 %v1488, 1.442695
      %v1490 = vpow.pop %v1489
      %v1491 = vsel %vm1107, %v1490, 0.0
      %1492 = vadd.xlane.f32.xlu0 %v1491
      %v1493 = vpop.xlane.xlu0 %1492
      %v1494 = vrcp.pop %v1493
      %v1495 = vmul.f32 %v1490, %v1494
      %v1496 = vpack.c.bf16 %v1495, %v1495
      %1497 = vrot.lane.b32.xlu0 %v1097, 40
      %v1498 = vpop.permute.xlu0 %1497
      %v1500 = vsel %vm1107, %v1496, 0
      %v1503 = vsel %vm1171, %v1498, 0
      %1505 = vmatprep.subr.bf16.mxu0 0
      %1506 = vmatpush1.bf16.msra.mxu0 %v1503
      %1507 = vmatprep.subr.bf16.mxu0 0
      %1508 = vmatpush1.bf16.msra.mxu0 0
      %1509 = vmatprep.subr.bf16.mxu0 0
      %1510 = vmatpush1.bf16.msra.mxu0 0
      %1511 = vmatprep.subr.bf16.mxu0 0
      %1512 = vmatpush1.bf16.msra.mxu0 0
      %1513 = vmatprep.subr.bf16.mxu0 0
      %1514 = vmatpush1.bf16.msra.mxu0 0
      %1515 = vmatprep.subr.bf16.mxu0 0
      %1516 = vmatpush1.bf16.msra.mxu0 0
      %1517 = vmatprep.subr.bf16.mxu0 0
      %1518 = vmatpush1.bf16.msra.mxu0 0
      %1519 = vmatprep.subr.bf16.mxu0 0
      %1520 = vmatpush1.bf16.msra.mxu0 0
      %1521 = vmatprep.subr.bf16.mxu0 0
      %1522 = vmatpush1.bf16.msra.mxu0 0
      %1523 = vmatprep.subr.bf16.mxu0 0
      %1524 = vmatpush1.bf16.msra.mxu0 0
      %1525 = vmatprep.subr.bf16.mxu0 0
      %1526 = vmatpush1.bf16.msra.mxu0 0
      %1527 = vmatprep.subr.bf16.mxu0 0
      %1528 = vmatpush1.bf16.msra.mxu0 0
      %1529 = vmatprep.subr.bf16.mxu0 0
      %1530 = vmatpush1.bf16.msra.mxu0 0
      %1531 = vmatprep.subr.bf16.mxu0 0
      %1532 = vmatpush1.bf16.msra.mxu0 0
      %1533 = vmatprep.subr.bf16.mxu0 0
      %1534 = vmatpush1.bf16.msra.mxu0 0
      %1535 = vmatprep.subr.bf16.mxu0 0
      %1536 = vmatpush1.bf16.msra.mxu0 0
      %1537 = vmatprep.mubr.bf16.mxu0 0
      %1538 = vmatmul.mubr.bf16.gmra.mrb[0].mxu0 %v1500
      %v1539 = vpop.f32.mrb[0].mxu0
      %v1540 = vadd.f32 0.0, %v1539
      %v1541 = vpop.f32.mrb[0].mxu0
      %v1542 = vpop.f32.mrb[0].mxu0
      %v1543 = vpop.f32.mrb[0].mxu0
      %1544 = vdwg.mxu0
      %1546 = vrot.lane.b32.xlu0 %v1320, 8
      %v1547 = vpop.permute.xlu0 %1546
      %1550 = vrot.lane.b32.xlu0 %v1430, 16
      %v1551 = vpop.permute.xlu0 %1550
      %1554 = vrot.lane.b32.xlu0 %v1540, 24
      %v1555 = vpop.permute.xlu0 %1554
      %v1557 = vsel %vm1107, %v1210, %v1547
      %vm1558 = vcmask 130048
      %v1559 = vsel %vm1558, %v1557, %v1551
      %vm1560 = vcmask 195584
      %v1561 = vsel %vm1560, %v1559, %v1555
      %v1562 = vpack.c.bf16 %v1561, %v1561
      %v1563 = vld [vmem:[%s13] sm:$0xf]
      %v1564 = vld [vmem:[%s13 + $0x4] sm:$0xf]
      %v1565 = vld [vmem:[%s13 + $0x8] sm:$0xf]
      %v1566 = vld [vmem:[%s13 + $0xc] sm:$0xf]
      %v1567 = vld [vmem:[%s15] sm:$0x1]
      %v1569 = vlaneseq
      %v1570 = vshrl.u32 %v1569, 7
      %v1571 = vsub.s32 0, %v1570
      %v1572 = vrot.slane %v1567, %v1571
      %v1578 = vunpack.c.l.b16 %v1563
      %v1579 = vunpack.c.l.b16 %v1564
      %v1580 = vunpack.c.l.b16 %v1565
      %v1581 = vunpack.c.l.b16 %v1566
      %v1582 = vpack.c.b16 %v1579, %v1578
      %v1583 = vpack.c.b16 %v1581, %v1580
      %v1587 = vsel %vm1001, %v1562, 0
      %1589 = vmatprep.subr.bf16.mxu0 0
      %1590 = vmatpush1.bf16.msra.mxu0 %v1582
      %1591 = vmatprep.subr.bf16.mxu0 0
      %1592 = vmatpush1.bf16.msra.mxu0 %v1583
      %1593 = vmatprep.subr.bf16.mxu0 0
      %1594 = vmatpush1.bf16.msra.mxu0 0
      %1595 = vmatprep.subr.bf16.mxu0 0
      %1596 = vmatpush1.bf16.msra.mxu0 0
      %1597 = vmatprep.subr.bf16.mxu0 0
      %1598 = vmatpush1.bf16.msra.mxu0 0
      %1599 = vmatprep.subr.bf16.mxu0 0
      %1600 = vmatpush1.bf16.msra.mxu0 0
      %1601 = vmatprep.subr.bf16.mxu0 0
      %1602 = vmatpush1.bf16.msra.mxu0 0
      %1603 = vmatprep.subr.bf16.mxu0 0
      %1604 = vmatpush1.bf16.msra.mxu0 0
      %1605 = vmatprep.subr.bf16.mxu0 0
      %1606 = vmatpush1.bf16.msra.mxu0 0
      %1607 = vmatprep.subr.bf16.mxu0 0
      %1608 = vmatpush1.bf16.msra.mxu0 0
      %1609 = vmatprep.subr.bf16.mxu0 0
      %1610 = vmatpush1.bf16.msra.mxu0 0
      %1611 = vmatprep.subr.bf16.mxu0 0
      %1612 = vmatpush1.bf16.msra.mxu0 0
      %1613 = vmatprep.subr.bf16.mxu0 0
      %1614 = vmatpush1.bf16.msra.mxu0 0
      %1615 = vmatprep.subr.bf16.mxu0 0
      %1616 = vmatpush1.bf16.msra.mxu0 0
      %1617 = vmatprep.subr.bf16.mxu0 0
      %1618 = vmatpush1.bf16.msra.mxu0 0
      %1619 = vmatprep.subr.bf16.mxu0 0
      %1620 = vmatpush1.bf16.msra.mxu0 0
      %1621 = vmatprep.mubr.bf16.mxu0 0
      %1622 = vmatmul.mubr.bf16.gmra.mrb[0].mxu0 %v1587
      %v1623 = vpop.f32.mrb[0].mxu0
      %v1624 = vadd.f32 %v1572, %v1623
      %v1625 = vpop.f32.mrb[0].mxu0
      %v1626 = vpop.f32.mrb[0].mxu0
      %v1627 = vpop.f32.mrb[0].mxu0
      %1628 = vdwg.mxu0
      %v1629 = vadd.f32 %v1624, %v1029
      %v1630 = vld [vmem:[%s17] sm:$0x1]
      %v1631 = vld [vmem:[%s19] sm:$0x1]
      %v1632 = vsel %vm1001, %v1629, 0.0
      %1633 = vadd.xlane.f32.xlu0 %v1632
      %v1634 = vpop.xlane.xlu0 %1633
      %v1635 = vmul.f32 %v1634, %v1005
      %v1636 = vsub.f32 %v1629, %v1635
      %v1637 = vmul.f32 %v1636, %v1636
      %v1638 = vsel %vm1001, %v1637, 0.0
      %1639 = vadd.xlane.f32.xlu0 %v1638
      %v1640 = vpop.xlane.xlu0 %1639
      %v1641 = vmul.f32 %v1640, %v1005
      %v1642 = vadd.f32 %v1641, 1e-12
      %v1643 = vrsqrt.pop %v1642
      %v1644 = vmul.f32 %v1636, %v1643
      %v1646 = vlaneseq
      %v1647 = vshrl.u32 %v1646, 7
      %v1648 = vsub.s32 0, %v1647
      %v1649 = vrot.slane %v1630, %v1648
      %v1651 = vmul.f32 %v1644, %v1649
      %v1653 = vlaneseq
      %v1654 = vshrl.u32 %v1653, 7
      %v1655 = vsub.s32 0, %v1654
      %v1656 = vrot.slane %v1631, %v1655
      %v1658 = vadd.f32 %v1651, %v1656
      %v1659 = vld [vmem:[%s21] sm:$0xf]
      %v1660 = vld [vmem:[%s21 + $0x4] sm:$0xf]
      %v1661 = vld [vmem:[%s21 + $0x8] sm:$0xf]
      %v1662 = vld [vmem:[%s21 + $0xc] sm:$0xf]
      %v1663 = vld [vmem:[%s23] sm:$0x1]
      %v1664 = vpack.c.bf16 %v1658, %v1658
      %v1666 = vlaneseq
      %v1667 = vshrl.u32 %v1666, 7
      %v1668 = vsub.s32 0, %v1667
      %v1669 = vrot.slane %v1663, %v1668
      %v1675 = vunpack.c.l.b16 %v1659
      %v1676 = vunpack.c.l.b16 %v1660
      %v1677 = vunpack.c.l.b16 %v1661
      %v1678 = vunpack.c.l.b16 %v1662
      %v1679 = vpack.c.b16 %v1676, %v1675
      %v1680 = vpack.c.b16 %v1678, %v1677
      %v1684 = vsel %vm1001, %v1664, 0
      %1686 = vmatprep.subr.bf16.mxu0 0
      %1687 = vmatpush1.bf16.msra.mxu0 %v1679
      %1688 = vmatprep.subr.bf16.mxu0 0
      %1689 = vmatpush1.bf16.msra.mxu0 %v1680
      %1690 = vmatprep.subr.bf16.mxu0 0
      %1691 = vmatpush1.bf16.msra.mxu0 0
      %1692 = vmatprep.subr.bf16.mxu0 0
      %1693 = vmatpush1.bf16.msra.mxu0 0
      %1694 = vmatprep.subr.bf16.mxu0 0
      %1695 = vmatpush1.bf16.msra.mxu0 0
      %1696 = vmatprep.subr.bf16.mxu0 0
      %1697 = vmatpush1.bf16.msra.mxu0 0
      %1698 = vmatprep.subr.bf16.mxu0 0
      %1699 = vmatpush1.bf16.msra.mxu0 0
      %1700 = vmatprep.subr.bf16.mxu0 0
      %1701 = vmatpush1.bf16.msra.mxu0 0
      %1702 = vmatprep.subr.bf16.mxu0 0
      %1703 = vmatpush1.bf16.msra.mxu0 0
      %1704 = vmatprep.subr.bf16.mxu0 0
      %1705 = vmatpush1.bf16.msra.mxu0 0
      %1706 = vmatprep.subr.bf16.mxu0 0
      %1707 = vmatpush1.bf16.msra.mxu0 0
      %1708 = vmatprep.subr.bf16.mxu0 0
      %1709 = vmatpush1.bf16.msra.mxu0 0
      %1710 = vmatprep.subr.bf16.mxu0 0
      %1711 = vmatpush1.bf16.msra.mxu0 0
      %1712 = vmatprep.subr.bf16.mxu0 0
      %1713 = vmatpush1.bf16.msra.mxu0 0
      %1714 = vmatprep.subr.bf16.mxu0 0
      %1715 = vmatpush1.bf16.msra.mxu0 0
      %1716 = vmatprep.subr.bf16.mxu0 0
      %1717 = vmatpush1.bf16.msra.mxu0 0
      %1718 = vmatprep.mubr.bf16.mxu0 0
      %1719 = vmatmul.mubr.bf16.gmra.mrb[0].mxu0 %v1684
      %v1720 = vpop.f32.mrb[0].mxu0
      %v1721 = vadd.f32 %v1669, %v1720
      %v1722 = vpop.f32.mrb[0].mxu0
      %v1723 = vpop.f32.mrb[0].mxu0
      %v1724 = vpop.f32.mrb[0].mxu0
      %1725 = vdwg.mxu0
      %v1726 = vmul.f32 %v1721, 0.5
      %v1727 = vmul.f32 %v1721, 0.044715
      %v1728 = vmul.f32 %v1727, %v1721
      %v1729 = vmul.f32 %v1728, %v1721
      %v1730 = vadd.f32 %v1721, %v1729
      %v1731 = vmul.f32 %v1730, 0.7978846
      %v1732 = vtanh.pop %v1731
      %v1733 = vadd.f32 %v1732, 1.0
      %v1734 = vmul.f32 %v1726, %v1733
      %v1735 = vld [vmem:[%s25] sm:$0xf]
      %v1736 = vld [vmem:[%s25 + $0x4] sm:$0xf]
      %v1737 = vld [vmem:[%s25 + $0x8] sm:$0xf]
      %v1738 = vld [vmem:[%s25 + $0xc] sm:$0xf]
      %v1739 = vld [vmem:[%s25 + $0x10] sm:$0xf]
      %v1740 = vld [vmem:[%s25 + $0x14] sm:$0xf]
      %v1741 = vld [vmem:[%s25 + $0x18] sm:$0xf]
      %v1742 = vld [vmem:[%s25 + $0x1c] sm:$0xf]
      %v1743 = vld [vmem:[%s25 + $0x20] sm:$0xf]
      %v1744 = vld [vmem:[%s25 + $0x24] sm:$0xf]
      %v1745 = vld [vmem:[%s25 + $0x28] sm:$0xf]
      %v1746 = vld [vmem:[%s25 + $0x2c] sm:$0xf]
      %v1747 = vld [vmem:[%s25 + $0x30] sm:$0xf]
      %v1748 = vld [vmem:[%s25 + $0x34] sm:$0xf]
      %v1749 = vld [vmem:[%s25 + $0x38] sm:$0xf]
      %v1750 = vld [vmem:[%s25 + $0x3c] sm:$0xf]
      %v1751 = vld [vmem:[%s27] sm:$0x1]
      %v1752 = vpack.c.bf16 %v1734, %v1734
      %v1754 = vlaneseq
      %v1755 = vshrl.u32 %v1754, 7
      %v1756 = vsub.s32 0, %v1755
      %v1757 = vrot.slane %v1751, %v1756
      %v1775 = vunpack.c.l.b16 %v1735
      %v1776 = vunpack.c.l.b16 %v1736
      %v1777 = vunpack.c.l.b16 %v1737
      %v1778 = vunpack.c.l.b16 %v1738
      %v1779 = vunpack.c.l.b16 %v1739
      %v1780 = vunpack.c.l.b16 %v1740
      %v1781 = vunpack.c.l.b16 %v1741
      %v1782 = vunpack.c.l.b16 %v1742
      %v1783 = vunpack.c.l.b16 %v1743
      %v1784 = vunpack.c.l.b16 %v1744
      %v1785 = vunpack.c.l.b16 %v1745
      %v1786 = vunpack.c.l.b16 %v1746
      %v1787 = vunpack.c.l.b16 %v1747
      %v1788 = vunpack.c.l.b16 %v1748
      %v1789 = vunpack.c.l.b16 %v1749
      %v1790 = vunpack.c.l.b16 %v1750
      %v1791 = vpack.c.b16 %v1776, %v1775
      %v1792 = vpack.c.b16 %v1778, %v1777
      %v1793 = vpack.c.b16 %v1780, %v1779
      %v1794 = vpack.c.b16 %v1782, %v1781
      %v1795 = vpack.c.b16 %v1784, %v1783
      %v1796 = vpack.c.b16 %v1786, %v1785
      %v1797 = vpack.c.b16 %v1788, %v1787
      %v1798 = vpack.c.b16 %v1790, %v1789
      %1807 = vmatprep.subr.bf16.mxu0 0
      %1808 = vmatpush1.bf16.msra.mxu0 %v1791
      %1809 = vmatprep.subr.bf16.mxu0 0
      %1810 = vmatpush1.bf16.msra.mxu0 %v1792
      %1811 = vmatprep.subr.bf16.mxu0 0
      %1812 = vmatpush1.bf16.msra.mxu0 %v1793
      %1813 = vmatprep.subr.bf16.mxu0 0
      %1814 = vmatpush1.bf16.msra.mxu0 %v1794
      %1815 = vmatprep.subr.bf16.mxu0 0
      %1816 = vmatpush1.bf16.msra.mxu0 %v1795
      %1817 = vmatprep.subr.bf16.mxu0 0
      %1818 = vmatpush1.bf16.msra.mxu0 %v1796
      %1819 = vmatprep.subr.bf16.mxu0 0
      %1820 = vmatpush1.bf16.msra.mxu0 %v1797
      %1821 = vmatprep.subr.bf16.mxu0 0
      %1822 = vmatpush1.bf16.msra.mxu0 %v1798
      %1823 = vmatprep.subr.bf16.mxu0 0
      %1824 = vmatpush1.bf16.msra.mxu0 0
      %1825 = vmatprep.subr.bf16.mxu0 0
      %1826 = vmatpush1.bf16.msra.mxu0 0
      %1827 = vmatprep.subr.bf16.mxu0 0
      %1828 = vmatpush1.bf16.msra.mxu0 0
      %1829 = vmatprep.subr.bf16.mxu0 0
      %1830 = vmatpush1.bf16.msra.mxu0 0
      %1831 = vmatprep.subr.bf16.mxu0 0
      %1832 = vmatpush1.bf16.msra.mxu0 0
      %1833 = vmatprep.subr.bf16.mxu0 0
      %1834 = vmatpush1.bf16.msra.mxu0 0
      %1835 = vmatprep.subr.bf16.mxu0 0
      %1836 = vmatpush1.bf16.msra.mxu0 0
      %1837 = vmatprep.subr.bf16.mxu0 0
      %1838 = vmatpush1.bf16.msra.mxu0 0
      %1839 = vmatprep.mubr.bf16.mxu0 0
      %1840 = vmatmul.mubr.bf16.gmra.mrb[0].mxu0 %v1752
      %v1841 = vpop.f32.mrb[0].mxu0
      %v1842 = vadd.f32 %v1757, %v1841
      %v1843 = vpop.f32.mrb[0].mxu0
      %v1844 = vpop.f32.mrb[0].mxu0
      %v1845 = vpop.f32.mrb[0].mxu0
      %1846 = vdwg.mxu0
      %v1847 = vadd.f32 %v1842, %v1658
      %v1848 = vld [vmem:[%s29] sm:$0x1]
      %v1849 = vld [vmem:[%s31] sm:$0x1]
      %v1850 = vsel %vm1001, %v1847, 0.0
      %1851 = vadd.xlane.f32.xlu0 %v1850
      %v1852 = vpop.xlane.xlu0 %1851
      %v1853 = vmul.f32 %v1852, %v1005
      %v1854 = vsub.f32 %v1847, %v1853
      %v1855 = vmul.f32 %v1854, %v1854
      %v1856 = vsel %vm1001, %v1855, 0.0
      %1857 = vadd.xlane.f32.xlu0 %v1856
      %v1858 = vpop.xlane.xlu0 %1857
      %v1859 = vmul.f32 %v1858, %v1005
      %v1860 = vadd.f32 %v1859, 1e-12
      %v1861 = vrsqrt.pop %v1860
      %v1862 = vmul.f32 %v1854, %v1861
      %v1864 = vlaneseq
      %v1865 = vshrl.u32 %v1864, 7
      %v1866 = vsub.s32 0, %v1865
      %v1867 = vrot.slane %v1848, %v1866
      %v1869 = vmul.f32 %v1862, %v1867
      %v1871 = vlaneseq
      %v1872 = vshrl.u32 %v1871, 7
      %v1873 = vsub.s32 0, %v1872
      %v1874 = vrot.slane %v1849, %v1873
      %v1876 = vadd.f32 %v1869, %v1874
      %v1877 = vld [vmem:[%s33] sm:$0xf]
      %v1878 = vld [vmem:[%s33 + $0x4] sm:$0xf]
      %v1879 = vld [vmem:[%s33 + $0x8] sm:$0xf]
      %v1880 = vld [vmem:[%s33 + $0xc] sm:$0xf]
      %v1881 = vld [vmem:[%s35] sm:$0x1]
      %v1882 = vpack.c.bf16 %v1876, %v1876
      %v1884 = vlaneseq
      %v1885 = vshrl.u32 %v1884, 7
      %v1886 = vsub.s32 0, %v1885
      %v1887 = vrot.slane %v1881, %v1886
      %v1893 = vunpack.c.l.b16 %v1877
      %v1894 = vunpack.c.l.b16 %v1878
      %v1895 = vunpack.c.l.b16 %v1879
      %v1896 = vunpack.c.l.b16 %v1880
      %v1897 = vpack.c.b16 %v1894, %v1893
      %v1898 = vpack.c.b16 %v1896, %v1895
      %v1902 = vsel %vm1001, %v1882, 0
      %1904 = vmatprep.subr.bf16.mxu0 0
      %1905 = vmatpush1.bf16.msra.mxu0 %v1897
      %1906 = vmatprep.subr.bf16.mxu0 0
      %1907 = vmatpush1.bf16.msra.mxu0 %v1898
      %1908 = vmatprep.subr.bf16.mxu0 0
      %1909 = vmatpush1.bf16.msra.mxu0 0
      %1910 = vmatprep.subr.bf16.mxu0 0
      %1911 = vmatpush1.bf16.msra.mxu0 0
      %1912 = vmatprep.subr.bf16.mxu0 0
      %1913 = vmatpush1.bf16.msra.mxu0 0
      %1914 = vmatprep.subr.bf16.mxu0 0
      %1915 = vmatpush1.bf16.msra.mxu0 0
      %1916 = vmatprep.subr.bf16.mxu0 0
      %1917 = vmatpush1.bf16.msra.mxu0 0
      %1918 = vmatprep.subr.bf16.mxu0 0
      %1919 = vmatpush1.bf16.msra.mxu0 0
      %1920 = vmatprep.subr.bf16.mxu0 0
      %1921 = vmatpush1.bf16.msra.mxu0 0
      %1922 = vmatprep.subr.bf16.mxu0 0
      %1923 = vmatpush1.bf16.msra.mxu0 0
      %1924 = vmatprep.subr.bf16.mxu0 0
      %1925 = vmatpush1.bf16.msra.mxu0 0
      %1926 = vmatprep.subr.bf16.mxu0 0
      %1927 = vmatpush1.bf16.msra.mxu0 0
      %1928 = vmatprep.subr.bf16.mxu0 0
      %1929 = vmatpush1.bf16.msra.mxu0 0
      %1930 = vmatprep.subr.bf16.mxu0 0
      %1931 = vmatpush1.bf16.msra.mxu0 0
      %1932 = vmatprep.subr.bf16.mxu0 0
      %1933 = vmatpush1.bf16.msra.mxu0 0
      %1934 = vmatprep.subr.bf16.mxu0 0
      %1935 = vmatpush1.bf16.msra.mxu0 0
      %1936 = vmatprep.mubr.bf16.mxu0 0
      %1937 = vmatmul.mubr.bf16.gmra.mrb[0].mxu0 %v1902
      %v1938 = vpop.f32.mrb[0].mxu0
      %v1939 = vadd.f32 %v1887, %v1938
      %v1940 = vpop.f32.mrb[0].mxu0
      %v1941 = vpop.f32.mrb[0].mxu0
      %v1942 = vpop.f32.mrb[0].mxu0
      %1943 = vdwg.mxu0
      %v1944 = vpack.c.bf16 %v1939, %v1939
      %1946 = vrot.lane.b32.xlu0 %v1944, 120
      %v1947 = vpop.permute.xlu0 %1946
      %v1949 = vsel %vm1107, %v1944, 0
      %v1952 = vsel %vm1107, %v1947, 0
      %1954 = vmatprep.subr.bf16.mxu0 0
      %1955 = vmatpush1.bf16.xpose.msra.mxu0 %v1952
      %1956 = vmatprep.subr.bf16.mxu0 0
      %1957 = vmatpush1.bf16.xpose.msra.mxu0 0
      %1958 = vmatprep.subr.bf16.mxu0 0
      %1959 = vmatpush1.bf16.xpose.msra.mxu0 0
      %1960 = vmatprep.subr.bf16.mxu0 0
      %1961 = vmatpush1.bf16.xpose.msra.mxu0 0
      %1962 = vmatprep.subr.bf16.mxu0 0
      %1963 = vmatpush1.bf16.xpose.msra.mxu0 0
      %1964 = vmatprep.subr.bf16.mxu0 0
      %1965 = vmatpush1.bf16.xpose.msra.mxu0 0
      %1966 = vmatprep.subr.bf16.mxu0 0
      %1967 = vmatpush1.bf16.xpose.msra.mxu0 0
      %1968 = vmatprep.subr.bf16.mxu0 0
      %1969 = vmatpush1.bf16.xpose.msra.mxu0 0
      %1970 = vmatprep.subr.bf16.mxu0 0
      %1971 = vmatpush1.bf16.xpose.msra.mxu0 0
      %1972 = vmatprep.subr.bf16.mxu0 0
      %1973 = vmatpush1.bf16.xpose.msra.mxu0 0
      %1974 = vmatprep.subr.bf16.mxu0 0
      %1975 = vmatpush1.bf16.xpose.msra.mxu0 0
      %1976 = vmatprep.subr.bf16.mxu0 0
      %1977 = vmatpush1.bf16.xpose.msra.mxu0 0
      %1978 = vmatprep.subr.bf16.mxu0 0
      %1979 = vmatpush1.bf16.xpose.msra.mxu0 0
      %1980 = vmatprep.subr.bf16.mxu0 0
      %1981 = vmatpush1.bf16.xpose.msra.mxu0 0
      %1982 = vmatprep.subr.bf16.mxu0 0
      %1983 = vmatpush1.bf16.xpose.msra.mxu0 0
      %1984 = vmatprep.subr.bf16.mxu0 0
      %1985 = vmatpush1.bf16.xpose.msra.mxu0 0
      %1986 = vmatprep.mubr.bf16.mxu0 0
      %1987 = vmatmul.mubr.bf16.gmra.mrb[0].mxu0 %v1949
      %v1988 = vpop.f32.mrb[0].mxu0
      %v1989 = vadd.f32 %v1102, %v1988
      %v1990 = vpop.f32.mrb[0].mxu0
      %v1991 = vpop.f32.mrb[0].mxu0
      %v1992 = vpop.f32.mrb[0].mxu0
      %1993 = vdwg.mxu0
      %v1994 = vsel %vm1107, %v1989, -inf
      %1995 = vmax.xlane.f32.xlu0 %v1994
      %v1996 = vpop.xlane.xlu0 %1995
      %v1997 = vsub.f32 %v1989, %v1996
      %v1998 = vmul.f32 %v1997, 1.442695
      %v1999 = vpow.pop %v1998
      %v2000 = vsel %vm1107, %v1999, 0.0
      %2001 = vadd.xlane.f32.xlu0 %v2000
      %v2002 = vpop.xlane.xlu0 %2001
      %v2003 = vrcp.pop %v2002
      %v2004 = vmul.f32 %v1999, %v2003
      %v2005 = vpack.c.bf16 %v2004, %v2004
      %2006 = vrot.lane.b32.xlu0 %v1944, 112
      %v2007 = vpop.permute.xlu0 %2006
      %v2009 = vsel %vm1107, %v2005, 0
      %v2012 = vsel %vm1171, %v2007, 0
      %2014 = vmatprep.subr.bf16.mxu0 0
      %2015 = vmatpush1.bf16.msra.mxu0 %v2012
      %2016 = vmatprep.subr.bf16.mxu0 0
      %2017 = vmatpush1.bf16.msra.mxu0 0
      %2018 = vmatprep.subr.bf16.mxu0 0
      %2019 = vmatpush1.bf16.msra.mxu0 0
      %2020 = vmatprep.subr.bf16.mxu0 0
      %2021 = vmatpush1.bf16.msra.mxu0 0
      %2022 = vmatprep.subr.bf16.mxu0 0
      %2023 = vmatpush1.bf16.msra.mxu0 0
      %2024 = vmatprep.subr.bf16.mxu0 0
      %2025 = vmatpush1.bf16.msra.mxu0 0
      %2026 = vmatprep.subr.bf16.mxu0 0
      %2027 = vmatpush1.bf16.msra.mxu0 0
      %2028 = vmatprep.subr.bf16.mxu0 0
      %2029 = vmatpush1.bf16.msra.mxu0 0
      %2030 = vmatprep.subr.bf16.mxu0 0
      %2031 = vmatpush1.bf16.msra.mxu0 0
      %2032 = vmatprep.subr.bf16.mxu0 0
      %2033 = vmatpush1.bf16.msra.mxu0 0
      %2034 = vmatprep.subr.bf16.mxu0 0
      %2035 = vmatpush1.bf16.msra.mxu0 0
      %2036 = vmatprep.subr.bf16.mxu0 0
      %2037 = vmatpush1.bf16.msra.mxu0 0
      %2038 = vmatprep.subr.bf16.mxu0 0
      %2039 = vmatpush1.bf16.msra.mxu0 0
      %2040 = vmatprep.subr.bf16.mxu0 0
      %2041 = vmatpush1.bf16.msra.mxu0 0
      %2042 = vmatprep.subr.bf16.mxu0 0
      %2043 = vmatpush1.bf16.msra.mxu0 0
      %2044 = vmatprep.subr.bf16.mxu0 0
      %2045 = vmatpush1.bf16.msra.mxu0 0
      %2046 = vmatprep.mubr.bf16.mxu0 0
      %2047 = vmatmul.mubr.bf16.gmra.mrb[0].mxu0 %v2009
      %v2048 = vpop.f32.mrb[0].mxu0
      %v2049 = vadd.f32 0.0, %v2048
      %v2050 = vpop.f32.mrb[0].mxu0
      %v2051 = vpop.f32.mrb[0].mxu0
      %v2052 = vpop.f32.mrb[0].mxu0
      %2053 = vdwg.mxu0
      %2054 = vrot.lane.b32.xlu0 %v1944, 104
      %v2055 = vpop.permute.xlu0 %2054
      %2056 = vrot.lane.b32.xlu0 %v1944, 96
      %v2057 = vpop.permute.xlu0 %2056
      %v2059 = vsel %vm1107, %v2055, 0
      %v2062 = vsel %vm1107, %v2057, 0
      %2064 = vmatprep.subr.bf16.mxu0 0
      %2065 = vmatpush1.bf16.xpose.msra.mxu0 %v2062
      %2066 = vmatprep.subr.bf16.mxu0 0
      %2067 = vmatpush1.bf16.xpose.msra.mxu0 0
      %2068 = vmatprep.subr.bf16.mxu0 0
      %2069 = vmatpush1.bf16.xpose.msra.mxu0 0
      %2070 = vmatprep.subr.bf16.mxu0 0
      %2071 = vmatpush1.bf16.xpose.msra.mxu0 0
      %2072 = vmatprep.subr.bf16.mxu0 0
      %2073 = vmatpush1.bf16.xpose.msra.mxu0 0
      %2074 = vmatprep.subr.bf16.mxu0 0
      %2075 = vmatpush1.bf16.xpose.msra.mxu0 0
      %2076 = vmatprep.subr.bf16.mxu0 0
      %2077 = vmatpush1.bf16.xpose.msra.mxu0 0
      %2078 = vmatprep.subr.bf16.mxu0 0
      %2079 = vmatpush1.bf16.xpose.msra.mxu0 0
      %2080 = vmatprep.subr.bf16.mxu0 0
      %2081 = vmatpush1.bf16.xpose.msra.mxu0 0
      %2082 = vmatprep.subr.bf16.mxu0 0
      %2083 = vmatpush1.bf16.xpose.msra.mxu0 0
      %2084 = vmatprep.subr.bf16.mxu0 0
      %2085 = vmatpush1.bf16.xpose.msra.mxu0 0
      %2086 = vmatprep.subr.bf16.mxu0 0
      %2087 = vmatpush1.bf16.xpose.msra.mxu0 0
      %2088 = vmatprep.subr.bf16.mxu0 0
      %2089 = vmatpush1.bf16.xpose.msra.mxu0 0
      %2090 = vmatprep.subr.bf16.mxu0 0
      %2091 = vmatpush1.bf16.xpose.msra.mxu0 0
      %2092 = vmatprep.subr.bf16.mxu0 0
      %2093 = vmatpush1.bf16.xpose.msra.mxu0 0
      %2094 = vmatprep.subr.bf16.mxu0 0
      %2095 = vmatpush1.bf16.xpose.msra.mxu0 0
      %2096 = vmatprep.mubr.bf16.mxu0 0
      %2097 = vmatmul.mubr.bf16.gmra.mrb[0].mxu0 %v2059
      %v2098 = vpop.f32.mrb[0].mxu0
      %v2099 = vadd.f32 %v1102, %v2098
      %v2100 = vpop.f32.mrb[0].mxu0
      %v2101 = vpop.f32.mrb[0].mxu0
      %v2102 = vpop.f32.mrb[0].mxu0
      %2103 = vdwg.mxu0
      %v2104 = vsel %vm1107, %v2099, -inf
      %2105 = vmax.xlane.f32.xlu0 %v2104
      %v2106 = vpop.xlane.xlu0 %2105
      %v2107 = vsub.f32 %v2099, %v2106
      %v2108 = vmul.f32 %v2107, 1.442695
      %v2109 = vpow.pop %v2108
      %v2110 = vsel %vm1107, %v2109, 0.0
      %2111 = vadd.xlane.f32.xlu0 %v2110
      %v2112 = vpop.xlane.xlu0 %2111
      %v2113 = vrcp.pop %v2112
      %v2114 = vmul.f32 %v2109, %v2113
      %v2115 = vpack.c.bf16 %v2114, %v2114
      %2116 = vrot.lane.b32.xlu0 %v1944, 88
      %v2117 = vpop.permute.xlu0 %2116
      %v2119 = vsel %vm1107, %v2115, 0
      %v2122 = vsel %vm1171, %v2117, 0
      %2124 = vmatprep.subr.bf16.mxu0 0
      %2125 = vmatpush1.bf16.msra.mxu0 %v2122
      %2126 = vmatprep.subr.bf16.mxu0 0
      %2127 = vmatpush1.bf16.msra.mxu0 0
      %2128 = vmatprep.subr.bf16.mxu0 0
      %2129 = vmatpush1.bf16.msra.mxu0 0
      %2130 = vmatprep.subr.bf16.mxu0 0
      %2131 = vmatpush1.bf16.msra.mxu0 0
      %2132 = vmatprep.subr.bf16.mxu0 0
      %2133 = vmatpush1.bf16.msra.mxu0 0
      %2134 = vmatprep.subr.bf16.mxu0 0
      %2135 = vmatpush1.bf16.msra.mxu0 0
      %2136 = vmatprep.subr.bf16.mxu0 0
      %2137 = vmatpush1.bf16.msra.mxu0 0
      %2138 = vmatprep.subr.bf16.mxu0 0
      %2139 = vmatpush1.bf16.msra.mxu0 0
      %2140 = vmatprep.subr.bf16.mxu0 0
      %2141 = vmatpush1.bf16.msra.mxu0 0
      %2142 = vmatprep.subr.bf16.mxu0 0
      %2143 = vmatpush1.bf16.msra.mxu0 0
      %2144 = vmatprep.subr.bf16.mxu0 0
      %2145 = vmatpush1.bf16.msra.mxu0 0
      %2146 = vmatprep.subr.bf16.mxu0 0
      %2147 = vmatpush1.bf16.msra.mxu0 0
      %2148 = vmatprep.subr.bf16.mxu0 0
      %2149 = vmatpush1.bf16.msra.mxu0 0
      %2150 = vmatprep.subr.bf16.mxu0 0
      %2151 = vmatpush1.bf16.msra.mxu0 0
      %2152 = vmatprep.subr.bf16.mxu0 0
      %2153 = vmatpush1.bf16.msra.mxu0 0
      %2154 = vmatprep.subr.bf16.mxu0 0
      %2155 = vmatpush1.bf16.msra.mxu0 0
      %2156 = vmatprep.mubr.bf16.mxu0 0
      %2157 = vmatmul.mubr.bf16.gmra.mrb[0].mxu0 %v2119
      %v2158 = vpop.f32.mrb[0].mxu0
      %v2159 = vadd.f32 0.0, %v2158
      %v2160 = vpop.f32.mrb[0].mxu0
      %v2161 = vpop.f32.mrb[0].mxu0
      %v2162 = vpop.f32.mrb[0].mxu0
      %2163 = vdwg.mxu0
      %2164 = vrot.lane.b32.xlu0 %v1944, 80
      %v2165 = vpop.permute.xlu0 %2164
      %2166 = vrot.lane.b32.xlu0 %v1944, 72
      %v2167 = vpop.permute.xlu0 %2166
      %v2169 = vsel %vm1107, %v2165, 0
      %v2172 = vsel %vm1107, %v2167, 0
      %2174 = vmatprep.subr.bf16.mxu0 0
      %2175 = vmatpush1.bf16.xpose.msra.mxu0 %v2172
      %2176 = vmatprep.subr.bf16.mxu0 0
      %2177 = vmatpush1.bf16.xpose.msra.mxu0 0
      %2178 = vmatprep.subr.bf16.mxu0 0
      %2179 = vmatpush1.bf16.xpose.msra.mxu0 0
      %2180 = vmatprep.subr.bf16.mxu0 0
      %2181 = vmatpush1.bf16.xpose.msra.mxu0 0
      %2182 = vmatprep.subr.bf16.mxu0 0
      %2183 = vmatpush1.bf16.xpose.msra.mxu0 0
      %2184 = vmatprep.subr.bf16.mxu0 0
      %2185 = vmatpush1.bf16.xpose.msra.mxu0 0
      %2186 = vmatprep.subr.bf16.mxu0 0
      %2187 = vmatpush1.bf16.xpose.msra.mxu0 0
      %2188 = vmatprep.subr.bf16.mxu0 0
      %2189 = vmatpush1.bf16.xpose.msra.mxu0 0
      %2190 = vmatprep.subr.bf16.mxu0 0
      %2191 = vmatpush1.bf16.xpose.msra.mxu0 0
      %2192 = vmatprep.subr.bf16.mxu0 0
      %2193 = vmatpush1.bf16.xpose.msra.mxu0 0
      %2194 = vmatprep.subr.bf16.mxu0 0
      %2195 = vmatpush1.bf16.xpose.msra.mxu0 0
      %2196 = vmatprep.subr.bf16.mxu0 0
      %2197 = vmatpush1.bf16.xpose.msra.mxu0 0
      %2198 = vmatprep.subr.bf16.mxu0 0
      %2199 = vmatpush1.bf16.xpose.msra.mxu0 0
      %2200 = vmatprep.subr.bf16.mxu0 0
      %2201 = vmatpush1.bf16.xpose.msra.mxu0 0
      %2202 = vmatprep.subr.bf16.mxu0 0
      %2203 = vmatpush1.bf16.xpose.msra.mxu0 0
      %2204 = vmatprep.subr.bf16.mxu0 0
      %2205 = vmatpush1.bf16.xpose.msra.mxu0 0
      %2206 = vmatprep.mubr.bf16.mxu0 0
      %2207 = vmatmul.mubr.bf16.gmra.mrb[0].mxu0 %v2169
      %v2208 = vpop.f32.mrb[0].mxu0
      %v2209 = vadd.f32 %v1102, %v2208
      %v2210 = vpop.f32.mrb[0].mxu0
      %v2211 = vpop.f32.mrb[0].mxu0
      %v2212 = vpop.f32.mrb[0].mxu0
      %2213 = vdwg.mxu0
      %v2214 = vsel %vm1107, %v2209, -inf
      %2215 = vmax.xlane.f32.xlu0 %v2214
      %v2216 = vpop.xlane.xlu0 %2215
      %v2217 = vsub.f32 %v2209, %v2216
      %v2218 = vmul.f32 %v2217, 1.442695
      %v2219 = vpow.pop %v2218
      %v2220 = vsel %vm1107, %v2219, 0.0
      %2221 = vadd.xlane.f32.xlu0 %v2220
      %v2222 = vpop.xlane.xlu0 %2221
      %v2223 = vrcp.pop %v2222
      %v2224 = vmul.f32 %v2219, %v2223
      %v2225 = vpack.c.bf16 %v2224, %v2224
      %2226 = vrot.lane.b32.xlu0 %v1944, 64
      %v2227 = vpop.permute.xlu0 %2226
      %v2229 = vsel %vm1107, %v2225, 0
      %v2232 = vsel %vm1171, %v2227, 0
      %2234 = vmatprep.subr.bf16.mxu0 0
      %2235 = vmatpush1.bf16.msra.mxu0 %v2232
      %2236 = vmatprep.subr.bf16.mxu0 0
      %2237 = vmatpush1.bf16.msra.mxu0 0
      %2238 = vmatprep.subr.bf16.mxu0 0
      %2239 = vmatpush1.bf16.msra.mxu0 0
      %2240 = vmatprep.subr.bf16.mxu0 0
      %2241 = vmatpush1.bf16.msra.mxu0 0
      %2242 = vmatprep.subr.bf16.mxu0 0
      %2243 = vmatpush1.bf16.msra.mxu0 0
      %2244 = vmatprep.subr.bf16.mxu0 0
      %2245 = vmatpush1.bf16.msra.mxu0 0
      %2246 = vmatprep.subr.bf16.mxu0 0
      %2247 = vmatpush1.bf16.msra.mxu0 0
      %2248 = vmatprep.subr.bf16.mxu0 0
      %2249 = vmatpush1.bf16.msra.mxu0 0
      %2250 = vmatprep.subr.bf16.mxu0 0
      %2251 = vmatpush1.bf16.msra.mxu0 0
      %2252 = vmatprep.subr.bf16.mxu0 0
      %2253 = vmatpush1.bf16.msra.mxu0 0
      %2254 = vmatprep.subr.bf16.mxu0 0
      %2255 = vmatpush1.bf16.msra.mxu0 0
      %2256 = vmatprep.subr.bf16.mxu0 0
      %2257 = vmatpush1.bf16.msra.mxu0 0
      %2258 = vmatprep.subr.bf16.mxu0 0
      %2259 = vmatpush1.bf16.msra.mxu0 0
      %2260 = vmatprep.subr.bf16.mxu0 0
      %2261 = vmatpush1.bf16.msra.mxu0 0
      %2262 = vmatprep.subr.bf16.mxu0 0
      %2263 = vmatpush1.bf16.msra.mxu0 0
      %2264 = vmatprep.subr.bf16.mxu0 0
      %2265 = vmatpush1.bf16.msra.mxu0 0
      %2266 = vmatprep.mubr.bf16.mxu0 0
      %2267 = vmatmul.mubr.bf16.gmra.mrb[0].mxu0 %v2229
      %v2268 = vpop.f32.mrb[0].mxu0
      %v2269 = vadd.f32 0.0, %v2268
      %v2270 = vpop.f32.mrb[0].mxu0
      %v2271 = vpop.f32.mrb[0].mxu0
      %v2272 = vpop.f32.mrb[0].mxu0
      %2273 = vdwg.mxu0
      %2274 = vrot.lane.b32.xlu0 %v1944, 56
      %v2275 = vpop.permute.xlu0 %2274
      %2276 = vrot.lane.b32.xlu0 %v1944, 48
      %v2277 = vpop.permute.xlu0 %2276
      %v2279 = vsel %vm1107, %v2275, 0
      %v2282 = vsel %vm1107, %v2277, 0
      %2284 = vmatprep.subr.bf16.mxu0 0
      %2285 = vmatpush1.bf16.xpose.msra.mxu0 %v2282
      %2286 = vmatprep.subr.bf16.mxu0 0
      %2287 = vmatpush1.bf16.xpose.msra.mxu0 0
      %2288 = vmatprep.subr.bf16.mxu0 0
      %2289 = vmatpush1.bf16.xpose.msra.mxu0 0
      %2290 = vmatprep.subr.bf16.mxu0 0
      %2291 = vmatpush1.bf16.xpose.msra.mxu0 0
      %2292 = vmatprep.subr.bf16.mxu0 0
      %2293 = vmatpush1.bf16.xpose.msra.mxu0 0
      %2294 = vmatprep.subr.bf16.mxu0 0
      %2295 = vmatpush1.bf16.xpose.msra.mxu0 0
      %2296 = vmatprep.subr.bf16.mxu0 0
      %2297 = vmatpush1.bf16.xpose.msra.mxu0 0
      %2298 = vmatprep.subr.bf16.mxu0 0
      %2299 = vmatpush1.bf16.xpose.msra.mxu0 0
      %2300 = vmatprep.subr.bf16.mxu0 0
      %2301 = vmatpush1.bf16.xpose.msra.mxu0 0
      %2302 = vmatprep.subr.bf16.mxu0 0
      %2303 = vmatpush1.bf16.xpose.msra.mxu0 0
      %2304 = vmatprep.subr.bf16.mxu0 0
      %2305 = vmatpush1.bf16.xpose.msra.mxu0 0
      %2306 = vmatprep.subr.bf16.mxu0 0
      %2307 = vmatpush1.bf16.xpose.msra.mxu0 0
      %2308 = vmatprep.subr.bf16.mxu0 0
      %2309 = vmatpush1.bf16.xpose.msra.mxu0 0
      %2310 = vmatprep.subr.bf16.mxu0 0
      %2311 = vmatpush1.bf16.xpose.msra.mxu0 0
      %2312 = vmatprep.subr.bf16.mxu0 0
      %2313 = vmatpush1.bf16.xpose.msra.mxu0 0
      %2314 = vmatprep.subr.bf16.mxu0 0
      %2315 = vmatpush1.bf16.xpose.msra.mxu0 0
      %2316 = vmatprep.mubr.bf16.mxu0 0
      %2317 = vmatmul.mubr.bf16.gmra.mrb[0].mxu0 %v2279
      %v2318 = vpop.f32.mrb[0].mxu0
      %v2319 = vadd.f32 %v1102, %v2318
      %v2320 = vpop.f32.mrb[0].mxu0
      %v2321 = vpop.f32.mrb[0].mxu0
      %v2322 = vpop.f32.mrb[0].mxu0
      %2323 = vdwg.mxu0
      %v2324 = vsel %vm1107, %v2319, -inf
      %2325 = vmax.xlane.f32.xlu0 %v2324
      %v2326 = vpop.xlane.xlu0 %2325
      %v2327 = vsub.f32 %v2319, %v2326
      %v2328 = vmul.f32 %v2327, 1.442695
      %v2329 = vpow.pop %v2328
      %v2330 = vsel %vm1107, %v2329, 0.0
      %2331 = vadd.xlane.f32.xlu0 %v2330
      %v2332 = vpop.xlane.xlu0 %2331
      %v2333 = vrcp.pop %v2332
      %v2334 = vmul.f32 %v2329, %v2333
      %v2335 = vpack.c.bf16 %v2334, %v2334
      %2336 = vrot.lane.b32.xlu0 %v1944, 40
      %v2337 = vpop.permute.xlu0 %2336
      %v2339 = vsel %vm1107, %v2335, 0
      %v2342 = vsel %vm1171, %v2337, 0
      %2344 = vmatprep.subr.bf16.mxu0 0
      %2345 = vmatpush1.bf16.msra.mxu0 %v2342
      %2346 = vmatprep.subr.bf16.mxu0 0
      %2347 = vmatpush1.bf16.msra.mxu0 0
      %2348 = vmatprep.subr.bf16.mxu0 0
      %2349 = vmatpush1.bf16.msra.mxu0 0
      %2350 = vmatprep.subr.bf16.mxu0 0
      %2351 = vmatpush1.bf16.msra.mxu0 0
      %2352 = vmatprep.subr.bf16.mxu0 0
      %2353 = vmatpush1.bf16.msra.mxu0 0
      %2354 = vmatprep.subr.bf16.mxu0 0
      %2355 = vmatpush1.bf16.msra.mxu0 0
      %2356 = vmatprep.subr.bf16.mxu0 0
      %2357 = vmatpush1.bf16.msra.mxu0 0
      %2358 = vmatprep.subr.bf16.mxu0 0
      %2359 = vmatpush1.bf16.msra.mxu0 0
      %2360 = vmatprep.subr.bf16.mxu0 0
      %2361 = vmatpush1.bf16.msra.mxu0 0
      %2362 = vmatprep.subr.bf16.mxu0 0
      %2363 = vmatpush1.bf16.msra.mxu0 0
      %2364 = vmatprep.subr.bf16.mxu0 0
      %2365 = vmatpush1.bf16.msra.mxu0 0
      %2366 = vmatprep.subr.bf16.mxu0 0
      %2367 = vmatpush1.bf16.msra.mxu0 0
      %2368 = vmatprep.subr.bf16.mxu0 0
      %2369 = vmatpush1.bf16.msra.mxu0 0
      %2370 = vmatprep.subr.bf16.mxu0 0
      %2371 = vmatpush1.bf16.msra.mxu0 0
      %2372 = vmatprep.subr.bf16.mxu0 0
      %2373 = vmatpush1.bf16.msra.mxu0 0
      %2374 = vmatprep.subr.bf16.mxu0 0
      %2375 = vmatpush1.bf16.msra.mxu0 0
      %2376 = vmatprep.mubr.bf16.mxu0 0
      %2377 = vmatmul.mubr.bf16.gmra.mrb[0].mxu0 %v2339
      %v2378 = vpop.f32.mrb[0].mxu0
      %v2379 = vadd.f32 0.0, %v2378
      %v2380 = vpop.f32.mrb[0].mxu0
      %v2381 = vpop.f32.mrb[0].mxu0
      %v2382 = vpop.f32.mrb[0].mxu0
      %2383 = vdwg.mxu0
      %2385 = vrot.lane.b32.xlu0 %v2159, 8
      %v2386 = vpop.permute.xlu0 %2385
      %2389 = vrot.lane.b32.xlu0 %v2269, 16
      %v2390 = vpop.permute.xlu0 %2389
      %2393 = vrot.lane.b32.xlu0 %v2379, 24
      %v2394 = vpop.permute.xlu0 %2393
      %v2396 = vsel %vm1107, %v2049, %v2386
      %v2397 = vsel %vm1558, %v2396, %v2390
      %v2398 = vsel %vm1560, %v2397, %v2394
      %v2399 = vpack.c.bf16 %v2398, %v2398
      %v2400 = vld [vmem:[%s37] sm:$0xf]
      %v2401 = vld [vmem:[%s37 + $0x4] sm:$0xf]
      %v2402 = vld [vmem:[%s37 + $0x8] sm:$0xf]
      %v2403 = vld [vmem:[%s37 + $0xc] sm:$0xf]
      %v2404 = vld [vmem:[%s39] sm:$0x1]
      %v2406 = vlaneseq
      %v2407 = vshrl.u32 %v2406, 7
      %v2408 = vsub.s32 0, %v2407
      %v2409 = vrot.slane %v2404, %v2408
      %v2415 = vunpack.c.l.b16 %v2400
      %v2416 = vunpack.c.l.b16 %v2401
      %v2417 = vunpack.c.l.b16 %v2402
      %v2418 = vunpack.c.l.b16 %v2403
      %v2419 = vpack.c.b16 %v2416, %v2415
      %v2420 = vpack.c.b16 %v2418, %v2417
      %v2424 = vsel %vm1001, %v2399, 0
      %2426 = vmatprep.subr.bf16.mxu0 0
      %2427 = vmatpush1.bf16.msra.mxu0 %v2419
      %2428 = vmatprep.subr.bf16.mxu0 0
      %2429 = vmatpush1.bf16.msra.mxu0 %v2420
      %2430 = vmatprep.subr.bf16.mxu0 0
      %2431 = vmatpush1.bf16.msra.mxu0 0
      %2432 = vmatprep.subr.bf16.mxu0 0
      %2433 = vmatpush1.bf16.msra.mxu0 0
      %2434 = vmatprep.subr.bf16.mxu0 0
      %2435 = vmatpush1.bf16.msra.mxu0 0
      %2436 = vmatprep.subr.bf16.mxu0 0
      %2437 = vmatpush1.bf16.msra.mxu0 0
      %2438 = vmatprep.subr.bf16.mxu0 0
      %2439 = vmatpush1.bf16.msra.mxu0 0
      %2440 = vmatprep.subr.bf16.mxu0 0
      %2441 = vmatpush1.bf16.msra.mxu0 0
      %2442 = vmatprep.subr.bf16.mxu0 0
      %2443 = vmatpush1.bf16.msra.mxu0 0
      %2444 = vmatprep.subr.bf16.mxu0 0
      %2445 = vmatpush1.bf16.msra.mxu0 0
      %2446 = vmatprep.subr.bf16.mxu0 0
      %2447 = vmatpush1.bf16.msra.mxu0 0
      %2448 = vmatprep.subr.bf16.mxu0 0
      %2449 = vmatpush1.bf16.msra.mxu0 0
      %2450 = vmatprep.subr.bf16.mxu0 0
      %2451 = vmatpush1.bf16.msra.mxu0 0
      %2452 = vmatprep.subr.bf16.mxu0 0
      %2453 = vmatpush1.bf16.msra.mxu0 0
      %2454 = vmatprep.subr.bf16.mxu0 0
      %2455 = vmatpush1.bf16.msra.mxu0 0
      %2456 = vmatprep.subr.bf16.mxu0 0
      %2457 = vmatpush1.bf16.msra.mxu0 0
      %2458 = vmatprep.mubr.bf16.mxu0 0
      %2459 = vmatmul.mubr.bf16.gmra.mrb[0].mxu0 %v2424
      %v2460 = vpop.f32.mrb[0].mxu0
      %v2461 = vadd.f32 %v2409, %v2460
      %v2462 = vpop.f32.mrb[0].mxu0
      %v2463 = vpop.f32.mrb[0].mxu0
      %v2464 = vpop.f32.mrb[0].mxu0
      %2465 = vdwg.mxu0
      %v2466 = vadd.f32 %v2461, %v1876
      %v2467 = vld [vmem:[%s41] sm:$0x1]
      %v2468 = vld [vmem:[%s43] sm:$0x1]
      %v2469 = vsel %vm1001, %v2466, 0.0
      %2470 = vadd.xlane.f32.xlu0 %v2469
      %v2471 = vpop.xlane.xlu0 %2470
      %v2472 = vmul.f32 %v2471, %v1005
      %v2473 = vsub.f32 %v2466, %v2472
      %v2474 = vmul.f32 %v2473, %v2473
      %v2475 = vsel %vm1001, %v2474, 0.0
      %2476 = vadd.xlane.f32.xlu0 %v2475
      %v2477 = vpop.xlane.xlu0 %2476
      %v2478 = vmul.f32 %v2477, %v1005
      %v2479 = vadd.f32 %v2478, 1e-12
      %v2480 = vrsqrt.pop %v2479
      %v2481 = vmul.f32 %v2473, %v2480
      %v2483 = vlaneseq
      %v2484 = vshrl.u32 %v2483, 7
      %v2485 = vsub.s32 0, %v2484
      %v2486 = vrot.slane %v2467, %v2485
      %v2488 = vmul.f32 %v2481, %v2486
      %v2490 = vlaneseq
      %v2491 = vshrl.u32 %v2490, 7
      %v2492 = vsub.s32 0, %v2491
      %v2493 = vrot.slane %v2468, %v2492
      %v2495 = vadd.f32 %v2488, %v2493
      %v2496 = vld [vmem:[%s45] sm:$0xf]
      %v2497 = vld [vmem:[%s45 + $0x4] sm:$0xf]
      %v2498 = vld [vmem:[%s45 + $0x8] sm:$0xf]
      %v2499 = vld [vmem:[%s45 + $0xc] sm:$0xf]
      %v2500 = vld [vmem:[%s47] sm:$0x1]
      %v2501 = vpack.c.bf16 %v2495, %v2495
      %v2503 = vlaneseq
      %v2504 = vshrl.u32 %v2503, 7
      %v2505 = vsub.s32 0, %v2504
      %v2506 = vrot.slane %v2500, %v2505
      %v2512 = vunpack.c.l.b16 %v2496
      %v2513 = vunpack.c.l.b16 %v2497
      %v2514 = vunpack.c.l.b16 %v2498
      %v2515 = vunpack.c.l.b16 %v2499
      %v2516 = vpack.c.b16 %v2513, %v2512
      %v2517 = vpack.c.b16 %v2515, %v2514
      %v2521 = vsel %vm1001, %v2501, 0
      %2523 = vmatprep.subr.bf16.mxu0 0
      %2524 = vmatpush1.bf16.msra.mxu0 %v2516
      %2525 = vmatprep.subr.bf16.mxu0 0
      %2526 = vmatpush1.bf16.msra.mxu0 %v2517
      %2527 = vmatprep.subr.bf16.mxu0 0
      %2528 = vmatpush1.bf16.msra.mxu0 0
      %2529 = vmatprep.subr.bf16.mxu0 0
      %2530 = vmatpush1.bf16.msra.mxu0 0
      %2531 = vmatprep.subr.bf16.mxu0 0
      %2532 = vmatpush1.bf16.msra.mxu0 0
      %2533 = vmatprep.subr.bf16.mxu0 0
      %2534 = vmatpush1.bf16.msra.mxu0 0
      %2535 = vmatprep.subr.bf16.mxu0 0
      %2536 = vmatpush1.bf16.msra.mxu0 0
      %2537 = vmatprep.subr.bf16.mxu0 0
      %2538 = vmatpush1.bf16.msra.mxu0 0
      %2539 = vmatprep.subr.bf16.mxu0 0
      %2540 = vmatpush1.bf16.msra.mxu0 0
      %2541 = vmatprep.subr.bf16.mxu0 0
      %2542 = vmatpush1.bf16.msra.mxu0 0
      %2543 = vmatprep.subr.bf16.mxu0 0
      %2544 = vmatpush1.bf16.msra.mxu0 0
      %2545 = vmatprep.subr.bf16.mxu0 0
      %2546 = vmatpush1.bf16.msra.mxu0 0
      %2547 = vmatprep.subr.bf16.mxu0 0
      %2548 = vmatpush1.bf16.msra.mxu0 0
      %2549 = vmatprep.subr.bf16.mxu0 0
      %2550 = vmatpush1.bf16.msra.mxu0 0
      %2551 = vmatprep.subr.bf16.mxu0 0
      %2552 = vmatpush1.bf16.msra.mxu0 0
      %2553 = vmatprep.subr.bf16.mxu0 0
      %2554 = vmatpush1.bf16.msra.mxu0 0
      %2555 = vmatprep.mubr.bf16.mxu0 0
      %2556 = vmatmul.mubr.bf16.gmra.mrb[0].mxu0 %v2521
      %v2557 = vpop.f32.mrb[0].mxu0
      %v2558 = vadd.f32 %v2506, %v2557
      %v2559 = vpop.f32.mrb[0].mxu0
      %v2560 = vpop.f32.mrb[0].mxu0
      %v2561 = vpop.f32.mrb[0].mxu0
      %2562 = vdwg.mxu0
      %v2563 = vmul.f32 %v2558, 0.5
      %v2564 = vmul.f32 %v2558, 0.044715
      %v2565 = vmul.f32 %v2564, %v2558
      %v2566 = vmul.f32 %v2565, %v2558
      %v2567 = vadd.f32 %v2558, %v2566
      %v2568 = vmul.f32 %v2567, 0.7978846
      %v2569 = vtanh.pop %v2568
      %v2570 = vadd.f32 %v2569, 1.0
      %v2571 = vmul.f32 %v2563, %v2570
      %v2572 = vld [vmem:[%s49] sm:$0xf]
      %v2573 = vld [vmem:[%s49 + $0x4] sm:$0xf]
      %v2574 = vld [vmem:[%s49 + $0x8] sm:$0xf]
      %v2575 = vld [vmem:[%s49 + $0xc] sm:$0xf]
      %v2576 = vld [vmem:[%s49 + $0x10] sm:$0xf]
      %v2577 = vld [vmem:[%s49 + $0x14] sm:$0xf]
      %v2578 = vld [vmem:[%s49 + $0x18] sm:$0xf]
      %v2579 = vld [vmem:[%s49 + $0x1c] sm:$0xf]
      %v2580 = vld [vmem:[%s49 + $0x20] sm:$0xf]
      %v2581 = vld [vmem:[%s49 + $0x24] sm:$0xf]
      %v2582 = vld [vmem:[%s49 + $0x28] sm:$0xf]
      %v2583 = vld [vmem:[%s49 + $0x2c] sm:$0xf]
      %v2584 = vld [vmem:[%s49 + $0x30] sm:$0xf]
      %v2585 = vld [vmem:[%s49 + $0x34] sm:$0xf]
      %v2586 = vld [vmem:[%s49 + $0x38] sm:$0xf]
      %v2587 = vld [vmem:[%s49 + $0x3c] sm:$0xf]
      %v2588 = vld [vmem:[%s51] sm:$0x1]
      %v2589 = vpack.c.bf16 %v2571, %v2571
      %v2591 = vlaneseq
      %v2592 = vshrl.u32 %v2591, 7
      %v2593 = vsub.s32 0, %v2592
      %v2594 = vrot.slane %v2588, %v2593
      %v2612 = vunpack.c.l.b16 %v2572
      %v2613 = vunpack.c.l.b16 %v2573
      %v2614 = vunpack.c.l.b16 %v2574
      %v2615 = vunpack.c.l.b16 %v2575
      %v2616 = vunpack.c.l.b16 %v2576
      %v2617 = vunpack.c.l.b16 %v2577
      %v2618 = vunpack.c.l.b16 %v2578
      %v2619 = vunpack.c.l.b16 %v2579
      %v2620 = vunpack.c.l.b16 %v2580
      %v2621 = vunpack.c.l.b16 %v2581
      %v2622 = vunpack.c.l.b16 %v2582
      %v2623 = vunpack.c.l.b16 %v2583
      %v2624 = vunpack.c.l.b16 %v2584
      %v2625 = vunpack.c.l.b16 %v2585
      %v2626 = vunpack.c.l.b16 %v2586
      %v2627 = vunpack.c.l.b16 %v2587
      %v2628 = vpack.c.b16 %v2613, %v2612
      %v2629 = vpack.c.b16 %v2615, %v2614
      %v2630 = vpack.c.b16 %v2617, %v2616
      %v2631 = vpack.c.b16 %v2619, %v2618
      %v2632 = vpack.c.b16 %v2621, %v2620
      %v2633 = vpack.c.b16 %v2623, %v2622
      %v2634 = vpack.c.b16 %v2625, %v2624
      %v2635 = vpack.c.b16 %v2627, %v2626
      %2644 = vmatprep.subr.bf16.mxu0 0
      %2645 = vmatpush1.bf16.msra.mxu0 %v2628
      %2646 = vmatprep.subr.bf16.mxu0 0
      %2647 = vmatpush1.bf16.msra.mxu0 %v2629
      %2648 = vmatprep.subr.bf16.mxu0 0
      %2649 = vmatpush1.bf16.msra.mxu0 %v2630
      %2650 = vmatprep.subr.bf16.mxu0 0
      %2651 = vmatpush1.bf16.msra.mxu0 %v2631
      %2652 = vmatprep.subr.bf16.mxu0 0
      %2653 = vmatpush1.bf16.msra.mxu0 %v2632
      %2654 = vmatprep.subr.bf16.mxu0 0
      %2655 = vmatpush1.bf16.msra.mxu0 %v2633
      %2656 = vmatprep.subr.bf16.mxu0 0
      %2657 = vmatpush1.bf16.msra.mxu0 %v2634
      %2658 = vmatprep.subr.bf16.mxu0 0
      %2659 = vmatpush1.bf16.msra.mxu0 %v2635
      %2660 = vmatprep.subr.bf16.mxu0 0
      %2661 = vmatpush1.bf16.msra.mxu0 0
      %2662 = vmatprep.subr.bf16.mxu0 0
      %2663 = vmatpush1.bf16.msra.mxu0 0
      %2664 = vmatprep.subr.bf16.mxu0 0
      %2665 = vmatpush1.bf16.msra.mxu0 0
      %2666 = vmatprep.subr.bf16.mxu0 0
      %2667 = vmatpush1.bf16.msra.mxu0 0
      %2668 = vmatprep.subr.bf16.mxu0 0
      %2669 = vmatpush1.bf16.msra.mxu0 0
      %2670 = vmatprep.subr.bf16.mxu0 0
      %2671 = vmatpush1.bf16.msra.mxu0 0
      %2672 = vmatprep.subr.bf16.mxu0 0
      %2673 = vmatpush1.bf16.msra.mxu0 0
      %2674 = vmatprep.subr.bf16.mxu0 0
      %2675 = vmatpush1.bf16.msra.mxu0 0
      %2676 = vmatprep.mubr.bf16.mxu0 0
      %2677 = vmatmul.mubr.bf16.gmra.mrb[0].mxu0 %v2589
      %v2678 = vpop.f32.mrb[0].mxu0
      %v2679 = vadd.f32 %v2594, %v2678
      %v2680 = vpop.f32.mrb[0].mxu0
      %v2681 = vpop.f32.mrb[0].mxu0
      %v2682 = vpop.f32.mrb[0].mxu0
      %2683 = vdwg.mxu0
      %v2684 = vadd.f32 %v2679, %v2495
      %v2685 = vld [vmem:[%s53] sm:$0x1]
      %v2686 = vld [vmem:[%s55] sm:$0x1]
      %v2687 = vsel %vm1001, %v2684, 0.0
      %2688 = vadd.xlane.f32.xlu0 %v2687
      %v2689 = vpop.xlane.xlu0 %2688
      %v2690 = vmul.f32 %v2689, %v1005
      %v2691 = vsub.f32 %v2684, %v2690
      %v2692 = vmul.f32 %v2691, %v2691
      %v2693 = vsel %vm1001, %v2692, 0.0
      %2694 = vadd.xlane.f32.xlu0 %v2693
      %v2695 = vpop.xlane.xlu0 %2694
      %v2696 = vmul.f32 %v2695, %v1005
      %v2697 = vadd.f32 %v2696, 1e-12
      %v2698 = vrsqrt.pop %v2697
      %v2699 = vmul.f32 %v2691, %v2698
      %v2701 = vlaneseq
      %v2702 = vshrl.u32 %v2701, 7
      %v2703 = vsub.s32 0, %v2702
      %v2704 = vrot.slane %v2685, %v2703
      %v2706 = vmul.f32 %v2699, %v2704
      %v2708 = vlaneseq
      %v2709 = vshrl.u32 %v2708, 7
      %v2710 = vsub.s32 0, %v2709
      %v2711 = vrot.slane %v2686, %v2710
      %v2713 = vadd.f32 %v2706, %v2711
      %v2714 = vld [vmem:[%s57] sm:$0xf]
      %v2715 = vld [vmem:[%s57 + $0x4] sm:$0xf]
      %v2716 = vld [vmem:[%s57 + $0x8] sm:$0xf]
      %v2717 = vld [vmem:[%s57 + $0xc] sm:$0xf]
      %v2718 = vld [vmem:[%s59] sm:$0x1]
      %v2719 = vpack.c.bf16 %v2713, %v2713
      %v2724 = vunpack.c.l.b16 %v2714
      %v2725 = vunpack.c.l.b16 %v2715
      %v2726 = vunpack.c.l.b16 %v2716
      %v2727 = vunpack.c.l.b16 %v2717
      %v2728 = vpack.c.b16 %v2725, %v2724
      %v2729 = vpack.c.b16 %v2727, %v2726
      %v2733 = vsel %vm1001, %v2719, 0
      %2735 = vmatprep.subr.bf16.mxu0 0
      %2736 = vmatpush1.bf16.msra.mxu0 %v2728
      %2737 = vmatprep.subr.bf16.mxu0 0
      %2738 = vmatpush1.bf16.msra.mxu0 %v2729
      %2739 = vmatprep.subr.bf16.mxu0 0
      %2740 = vmatpush1.bf16.msra.mxu0 0
      %2741 = vmatprep.subr.bf16.mxu0 0
      %2742 = vmatpush1.bf16.msra.mxu0 0
      %2743 = vmatprep.subr.bf16.mxu0 0
      %2744 = vmatpush1.bf16.msra.mxu0 0
      %2745 = vmatprep.subr.bf16.mxu0 0
      %2746 = vmatpush1.bf16.msra.mxu0 0
      %2747 = vmatprep.subr.bf16.mxu0 0
      %2748 = vmatpush1.bf16.msra.mxu0 0
      %2749 = vmatprep.subr.bf16.mxu0 0
      %2750 = vmatpush1.bf16.msra.mxu0 0
      %2751 = vmatprep.subr.bf16.mxu0 0
      %2752 = vmatpush1.bf16.msra.mxu0 0
      %2753 = vmatprep.subr.bf16.mxu0 0
      %2754 = vmatpush1.bf16.msra.mxu0 0
      %2755 = vmatprep.subr.bf16.mxu0 0
      %2756 = vmatpush1.bf16.msra.mxu0 0
      %2757 = vmatprep.subr.bf16.mxu0 0
      %2758 = vmatpush1.bf16.msra.mxu0 0
      %2759 = vmatprep.subr.bf16.mxu0 0
      %2760 = vmatpush1.bf16.msra.mxu0 0
      %2761 = vmatprep.subr.bf16.mxu0 0
      %2762 = vmatpush1.bf16.msra.mxu0 0
      %2763 = vmatprep.subr.bf16.mxu0 0
      %2764 = vmatpush1.bf16.msra.mxu0 0
      %2765 = vmatprep.subr.bf16.mxu0 0
      %2766 = vmatpush1.bf16.msra.mxu0 0
      %2767 = vmatprep.mubr.bf16.mxu0 0
      %2768 = vmatmul.mubr.bf16.gmra.mrb[0].mxu0 %v2733
      %v2769 = vpop.f32.mrb[0].mxu0
      %v2770 = vadd.f32 %v2718, %v2769
      %v2771 = vpop.f32.mrb[0].mxu0
      %v2772 = vpop.f32.mrb[0].mxu0
      %v2773 = vpop.f32.mrb[0].mxu0
      %2774 = vdwg.mxu0
      %v2775 = vtanh.pop %v2770
      %v2776 = vld [vmem:[%s61] sm:$0xf]
      %v2777 = vld [vmem:[%s61 + $0x4] sm:$0xf]
      %v2778 = vld [vmem:[%s61 + $0x8] sm:$0xf]
      %v2779 = vld [vmem:[%s61 + $0xc] sm:$0xf]
      %v2780 = vld [vmem:[%s63] sm:$0x1]
      %v2781 = vpack.c.bf16 %v2775, %v2775
      %v2786 = vunpack.c.l.b16 %v2776
      %v2787 = vunpack.c.l.b16 %v2777
      %v2788 = vunpack.c.l.b16 %v2778
      %v2789 = vunpack.c.l.b16 %v2779
      %v2790 = vpack.c.b16 %v2787, %v2786
      %v2791 = vpack.c.b16 %v2789, %v2788
      %v2795 = vsel %vm1001, %v2781, 0
      %2797 = vmatprep.subr.bf16.mxu0 0
      %2798 = vmatpush1.bf16.msra.mxu0 %v2790
      %2799 = vmatprep.subr.bf16.mxu0 0
      %2800 = vmatpush1.bf16.msra.mxu0 %v2791
      %2801 = vmatprep.subr.bf16.mxu0 0
      %2802 = vmatpush1.bf16.msra.mxu0 0
      %2803 = vmatprep.subr.bf16.mxu0 0
      %2804 = vmatpush1.bf16.msra.mxu0 0
      %2805 = vmatprep.subr.bf16.mxu0 0
      %2806 = vmatpush1.bf16.msra.mxu0 0
      %2807 = vmatprep.subr.bf16.mxu0 0
      %2808 = vmatpush1.bf16.msra.mxu0 0
      %2809 = vmatprep.subr.bf16.mxu0 0
      %2810 = vmatpush1.bf16.msra.mxu0 0
      %2811 = vmatprep.subr.bf16.mxu0 0
      %2812 = vmatpush1.bf16.msra.mxu0 0
      %2813 = vmatprep.subr.bf16.mxu0 0
      %2814 = vmatpush1.bf16.msra.mxu0 0
      %2815 = vmatprep.subr.bf16.mxu0 0
      %2816 = vmatpush1.bf16.msra.mxu0 0
      %2817 = vmatprep.subr.bf16.mxu0 0
      %2818 = vmatpush1.bf16.msra.mxu0 0
      %2819 = vmatprep.subr.bf16.mxu0 0
      %2820 = vmatpush1.bf16.msra.mxu0 0
      %2821 = vmatprep.subr.bf16.mxu0 0
      %2822 = vmatpush1.bf16.msra.mxu0 0
      %2823 = vmatprep.subr.bf16.mxu0 0
      %2824 = vmatpush1.bf16.msra.mxu0 0
      %2825 = vmatprep.subr.bf16.mxu0 0
      %2826 = vmatpush1.bf16.msra.mxu0 0
      %2827 = vmatprep.subr.bf16.mxu0 0
      %2828 = vmatpush1.bf16.msra.mxu0 0
      %2829 = vmatprep.mubr.bf16.mxu0 0
      %2830 = vmatmul.mubr.bf16.gmra.mrb[0].mxu0 %v2795
      %v2831 = vpop.f32.mrb[0].mxu0
      %v2832 = vadd.f32 %v2780, %v2831
      %v2833 = vpop.f32.mrb[0].mxu0
      %v2834 = vpop.f32.mrb[0].mxu0
      %v2835 = vpop.f32.mrb[0].mxu0
      %2836 = vdwg.mxu0
      %v2837 = vlaneseq
      %v2838 = vshrl.u32 %v2837, 7
      %v2839 = vsub.s32 0, %v2838
      %v2840 = vrot.slane %v2832, %v2839
      %2841 = vst [vmem:[%s995] sm:$0xff] %v2840
      %p2842 = scmp.lt.s32.totalorder %s76, 1
      %s2843 = scalar_select %p2842, %s76, 1
      %s2844 = smul.addr %s2843, 8
      %s2845 = scalar_lea.vmem %s65, %s2844
      // Predicated region
      $region149: #{bert_classifier_forward.1} parent=147 // pred_check
        %p2846 = pneg %p776
      $region150: #{bert_classifier_forward.1} parent=147 // pred_check_branch
        %2848 = sbr.rel (%p2846) target = $region152
      $region151: #{bert_classifier_forward.1} parent=147 // pred_region
        _
      $region152: #{bert_classifier_forward.1} parent=147 // pred_fallthru
        _
    $region148: #{bert_classifier_forward.1} parent=5 // pred_fallthru
      _
    %p2849 = scmp.le.s32.totalorder 2, %s71
    // Predicated region
    $region153: #{bert_classifier_forward.1} parent=5 // pred_check
      %p2850 = pneg %p2849
    $region154: #{bert_classifier_forward.1} parent=5 // pred_check_branch
      %2852 = sbr.rel (%p2850) target = $region156
    $region155: #{bert_classifier_forward.1} parent=5 // pred_region
      %s2853 = ssub.s32 %s71, 2
      // Predicated region
      $region157: #{bert_classifier_forward.1} parent=155 // pred_check
        %p2854 = pneg %p782
      $region158: #{bert_classifier_forward.1} parent=155 // pred_check_branch
        %2856 = sbr.rel (%p2854) target = $region160
      $region159: #{bert_classifier_forward.1} parent=155 // pred_region
        %p2857 = scmp.lt.s32.totalorder %s77, 1
        %s2858 = scalar_select %p2857, %s77, 1
        %s2859 = smul.addr %s2858, 8
        %s2860 = scalar_lea.vmem %s65, %s2859
      $region160: #{bert_classifier_forward.1} parent=155 // pred_fallthru
        _
    $region156: #{bert_classifier_forward.1} parent=5 // pred_fallthru
      _
  $region6: #{bert_classifier_forward.1} parent=0 // loop_footer
    %s75 = sadd.s32 1, %s71
  $region7: #{bert_classifier_forward.1} parent=0 // loop_footer_branch
    %70 = sbr.rel target = $region3
  $region8: #{bert_classifier_forward.1} parent=0 // loop_exit
    _

</llo_original>
